<compile_context>
chip_gen: v7x
topology: tpu7x:2x2x1
jax: 0.10.0
libtpu: 0.0.40
codegen_flags: <defaults>
</compile_context>

<pallas_src>
import jax
import jax.numpy as jnp
from jax.experimental import pallas as pl
from jax.experimental.pallas import tpu as pltpu

HP = 128          # per-gate padded lane width == padded hidden width
NG = 4            # LSTM gates
GP = NG * HP      # padded gate dimension

# PyTorch gate order along the 4H axis is [i, f, g, o]; padded block order is
# [i, f, o, g] so one sigmoid covers lanes [0, 3*HP) and one tanh covers g.
_GATE_PERM = (0, 1, 3, 2)   # padded block index -> source gate index


def _sigmoid(x):
    # sigmoid(x) = 0.5*tanh(0.5*x) + 0.5 : one EUP push instead of exp + recip.
    return 0.5 * jnp.tanh(0.5 * x) + 0.5


def lstm_kernel(x_ref, w_ih_ref, w_hh_ref, b_ref, w_fc_ref, b_fc_ref,
                out_ref, xw_scratch, h_scratch):
    # x_ref:      (S*B, D)    float32, time-major rows (row = t*B + b)
    # w_ih_ref:   (D, GP)     bfloat16, gate-padded, order [i,f,o,g]
    # w_hh_ref:   (HP, GP)    bfloat16, gate-padded (rows >= H are zero)
    # b_ref:      (1, GP)     float32  (b_ih + b_hh, gate-padded)
    # w_fc_ref:   (S*HP, S)   float32  block-diagonal fc weight (fc + transpose)
    # b_fc_ref:   (1, 1)      float32
    # out_ref:    (B, S)      float32
    # xw_scratch: (S*B, GP)   float32  VMEM staging for the hoisted projection
    # h_scratch:  (B, S*HP)   float32  VMEM staging for the deferred fc
    B, S = out_ref.shape

    # ---- Prologue: single batched input projection, staged to VMEM ---------
    xw_scratch[...] = (
        jnp.dot(x_ref[...].astype(jnp.bfloat16), w_ih_ref[...],
                preferred_element_type=jnp.float32)
        + b_ref[...])                                          # (S*B, GP) f32

    # ---- Recurrence: only h @ W_hh + gate math on the serial chain ---------
    h = jnp.zeros((B, HP), jnp.float32)
    c = jnp.zeros((B, HP), jnp.float32)
    for t in range(S):                                         # fully unrolled
        xw_t = xw_scratch[t * B:(t + 1) * B, :]                # static-offset load
        gates = xw_t + jnp.dot(h.astype(jnp.bfloat16), w_hh_ref[...],
                               preferred_element_type=jnp.float32)  # (B, GP)
        sig = _sigmoid(gates[:, :3 * HP])                      # i | f | o
        i_g = sig[:, 0 * HP:1 * HP]
        f_g = sig[:, 1 * HP:2 * HP]
        o_g = sig[:, 2 * HP:3 * HP]
        g_g = jnp.tanh(gates[:, 3 * HP:])                      # g
        c = f_g * c + i_g * g_g
        h = o_g * jnp.tanh(c)
        h_scratch[:, t * HP:(t + 1) * HP] = h                  # lane-tile-aligned

    # ---- Epilogue: fc + transpose fused into one MXU matmul ----------------
    y = jnp.dot(h_scratch[...], w_fc_ref[...],
                preferred_element_type=jnp.float32)            # (B, S)
    out_ref[...] = _sigmoid(y + b_fc_ref[...])


def _pad_gate_cols(w, H):
    """(rows, 4H) PyTorch-ordered -> (rows, GP) padded, block order [i,f,o,g]."""
    rows = w.shape[0]
    out = jnp.zeros((rows, GP), w.dtype)
    for blk, src in enumerate(_GATE_PERM):
        out = out.at[:, blk * HP:blk * HP + H].set(w[:, src * H:(src + 1) * H])
    return out


@jax.jit
def lstm_forward(x, w_ih, w_hh, b_ih, b_hh, w_fc, b_fc):
    """x: (B, S, D) f32.  Weights in PyTorch shapes:
       w_ih (4H, D), w_hh (4H, H), b_ih/b_hh (4H,), w_fc (1, H), b_fc (1,).
       Returns (B, S) f32 == torch.sigmoid(fc(lstm(x))[:, :, 0])."""
    B, S, D = x.shape
    H = w_hh.shape[1]

    # Layout plumbing (wrapper-side, off the kernel's hot path).
    w_ih_p = _pad_gate_cols(w_ih.T, H).astype(jnp.bfloat16)                 # (D, GP)
    w_hh_p = (jnp.zeros((HP, GP), jnp.float32)
              .at[:H].set(_pad_gate_cols(w_hh.T, H))).astype(jnp.bfloat16)  # (HP, GP)
    b_p = _pad_gate_cols((b_ih + b_hh).reshape(1, NG * H), H)               # (1, GP)
    # Block-diagonal fc weight: fuses the deferred fc with the (S,B)->(B,S)
    # "transpose" into a single epilogue matmul, so the kernel writes (B, S).
    w_fc_big = jnp.zeros((S * HP, S), jnp.float32)
    for t in range(S):
        w_fc_big = w_fc_big.at[t * HP:t * HP + H, t].set(w_fc[0])           # (S*HP, S)
    b_fc_p = b_fc.reshape(1, 1)                                             # (1, 1)

    # time-major then flattened so the kernel does ONE input-projection matmul.
    x_flat = jnp.transpose(x, (1, 0, 2)).reshape(S * B, D)                  # (S*B, D)

    vmem = pl.BlockSpec(memory_space=pltpu.MemorySpace.VMEM)
    out = pl.pallas_call(
        lstm_kernel,
        out_shape=jax.ShapeDtypeStruct((B, S), jnp.float32),
        in_specs=[vmem] * 6,
        out_specs=vmem,
        scratch_shapes=[pltpu.VMEM((S * B, GP), jnp.float32),
                        pltpu.VMEM((B, S * HP), jnp.float32)],
    )(x_flat, w_ih_p, w_hh_p, b_p, w_fc_big, b_fc_p)

    return out                                                              # (B, S)


def lstm_reference(x, w_ih, w_hh, b_ih, b_hh, w_fc, b_fc):
    """Pure-JAX float32 reference with PyTorch semantics, for verification."""
    B, S, D = x.shape
    H = w_hh.shape[1]
    h = jnp.zeros((B, H), jnp.float32)
    c = jnp.zeros((B, H), jnp.float32)
    outs = []
    for t in range(S):
        gates = x[:, t, :] @ w_ih.T + h @ w_hh.T + b_ih + b_hh
        i_g = jax.nn.sigmoid(gates[:, 0 * H:1 * H])
        f_g = jax.nn.sigmoid(gates[:, 1 * H:2 * H])
        g_g = jnp.tanh(gates[:, 2 * H:3 * H])
        o_g = jax.nn.sigmoid(gates[:, 3 * H:4 * H])
        c = f_g * c + i_g * g_g
        h = o_g * jnp.tanh(c)
        outs.append(jax.nn.sigmoid(h @ w_fc.T + b_fc)[:, 0])
    return jnp.stack(outs, axis=1)


if __name__ == "__main__":
    B, S, D, H = 4, 8, 8, 16  # batch, seq, input_dim, hidden_dim (module fixes H=16)

    key = jax.random.PRNGKey(0)
    k = jax.random.split(key, 7)
    bound = 1.0 / jnp.sqrt(H)

    # PyTorch-shaped parameters (uniform init like nn.LSTM / nn.Linear).
    w_ih = jax.random.uniform(k[0], (4 * H, D), jnp.float32, -bound, bound)
    w_hh = jax.random.uniform(k[1], (4 * H, H), jnp.float32, -bound, bound)
    b_ih = jax.random.uniform(k[2], (4 * H,), jnp.float32, -bound, bound)
    b_hh = jax.random.uniform(k[3], (4 * H,), jnp.float32, -bound, bound)
    w_fc = jax.random.uniform(k[4], (1, H), jnp.float32, -bound, bound)
    b_fc = jax.random.uniform(k[5], (1,), jnp.float32, -bound, bound)

    x = jax.random.normal(k[6], (B, S, D), jnp.float32)

    out = lstm_forward(x, w_ih, w_hh, b_ih, b_hh, w_fc, b_fc)
    out = jax.block_until_ready(out)

    ref = lstm_reference(x, w_ih, w_hh, b_ih, b_hh, w_fc, b_fc)
    assert out.shape == (B, S)
    # Tolerance loosened because MXU operands are bf16 (f32 accumulate).
    assert jnp.allclose(out, ref, atol=2e-2, rtol=2e-2), "mismatch vs reference"

    print("KERNEL_OK")
</pallas_src>

<mosaic_0001>
module attributes {stable_mosaic.version = 11 : i64} {
  func.func @lstm_kernel(%arg0: memref<32x8xf32, #tpu.memory_space<vmem>>, %arg1: memref<8x512xbf16, #tpu.memory_space<vmem>>, %arg2: memref<128x512xbf16, #tpu.memory_space<vmem>>, %arg3: memref<1x512xf32, #tpu.memory_space<vmem>>, %arg4: memref<1024x8xf32, #tpu.memory_space<vmem>>, %arg5: memref<1x1xf32, #tpu.memory_space<vmem>>, %arg6: memref<4x8xf32, #tpu.memory_space<vmem>>, %arg7: memref<32x512xf32, #tpu.memory_space<vmem>>, %arg8: memref<4x1024xf32, #tpu.memory_space<vmem>>) attributes {dimension_semantics = [], scalar_prefetch = 0 : i64, scratch_operands = 2 : i64, tpu.core_type = #tpu.core_type<tc>} {
    %c0 = arith.constant 0 : index
    %c0_0 = arith.constant 0 : index
    %0 = vector.load %arg0[%c0, %c0_0] : memref<32x8xf32, #tpu.memory_space<vmem>>, vector<32x8xf32>
    %1 = arith.truncf %0 : vector<32x8xf32> to vector<32x8xbf16>
    %c0_1 = arith.constant 0 : index
    %c0_2 = arith.constant 0 : index
    %2 = vector.load %arg1[%c0_1, %c0_2] : memref<8x512xbf16, #tpu.memory_space<vmem>>, vector<8x512xbf16>
    %cst = arith.constant dense<0.000000e+00> : vector<32x512xf32>
    %3 = tpu.matmul %1, %2, %cst {dimension_numbers = #tpu.dot_dimension_numbers<[1], [0], [0], [1], [0, 0, 1, 1], [], []>} : vector<32x8xbf16>, vector<8x512xbf16>, vector<32x512xf32> -> vector<32x512xf32>
    %c0_3 = arith.constant 0 : index
    %c0_4 = arith.constant 0 : index
    %4 = vector.load %arg3[%c0_3, %c0_4] : memref<1x512xf32, #tpu.memory_space<vmem>>, vector<1x512xf32>
    %5 = vector.broadcast %4 : vector<1x512xf32> to vector<32x512xf32>
    %6 = arith.addf %3, %5 : vector<32x512xf32>
    %c0_5 = arith.constant 0 : index
    %c0_6 = arith.constant 0 : index
    %7 = vector.load %arg7[%c0_5, %c0_6] : memref<32x512xf32, #tpu.memory_space<vmem>>, vector<32x512xf32>
    tpu.vector_store %arg7[%c0_5, %c0_6], %6 {strides = array<i32>} : memref<32x512xf32, #tpu.memory_space<vmem>>, vector<32x512xf32>,
    %cst_7 = arith.constant 0.000000e+00 : f32
    %8 = vector.broadcast %cst_7 : f32 to vector<4x128xf32>
    %cst_8 = arith.constant 0.000000e+00 : f32
    %9 = vector.broadcast %cst_8 : f32 to vector<4x128xf32>
    %c0_9 = arith.constant 0 : index
    %c0_10 = arith.constant 0 : index
    %10 = vector.load %arg7[%c0_9, %c0_10] : memref<32x512xf32, #tpu.memory_space<vmem>>, vector<4x512xf32>
    %11 = arith.truncf %8 : vector<4x128xf32> to vector<4x128xbf16>
    %c0_11 = arith.constant 0 : index
    %c0_12 = arith.constant 0 : index
    %12 = vector.load %arg2[%c0_11, %c0_12] : memref<128x512xbf16, #tpu.memory_space<vmem>>, vector<128x512xbf16>
    %cst_13 = arith.constant dense<0.000000e+00> : vector<4x512xf32>
    %13 = tpu.matmul %11, %12, %cst_13 {dimension_numbers = #tpu.dot_dimension_numbers<[1], [0], [0], [1], [0, 0, 1, 1], [], []>} : vector<4x128xbf16>, vector<128x512xbf16>, vector<4x512xf32> -> vector<4x512xf32>
    %14 = arith.addf %10, %13 : vector<4x512xf32>
    %15 = vector.extract_strided_slice %14 {offsets = [0, 0], sizes = [4, 384], strides = [1, 1]} : vector<4x512xf32> to vector<4x384xf32>
    %cst_14 = arith.constant 5.000000e-01 : f32
    %16 = vector.broadcast %cst_14 : f32 to vector<4x384xf32>
    %17 = arith.mulf %16, %15 : vector<4x384xf32>
    %18 = math.tanh %17 : vector<4x384xf32>
    %cst_15 = arith.constant 5.000000e-01 : f32
    %19 = vector.broadcast %cst_15 : f32 to vector<4x384xf32>
    %20 = arith.mulf %19, %18 : vector<4x384xf32>
    %cst_16 = arith.constant 5.000000e-01 : f32
    %21 = vector.broadcast %cst_16 : f32 to vector<4x384xf32>
    %22 = arith.addf %20, %21 : vector<4x384xf32>
    %23 = vector.extract_strided_slice %22 {offsets = [0, 0], sizes = [4, 128], strides = [1, 1]} : vector<4x384xf32> to vector<4x128xf32>
    %24 = vector.extract_strided_slice %22 {offsets = [0, 128], sizes = [4, 128], strides = [1, 1]} : vector<4x384xf32> to vector<4x128xf32>
    %25 = vector.extract_strided_slice %22 {offsets = [0, 256], sizes = [4, 128], strides = [1, 1]} : vector<4x384xf32> to vector<4x128xf32>
    %26 = vector.extract_strided_slice %14 {offsets = [0, 384], sizes = [4, 128], strides = [1, 1]} : vector<4x512xf32> to vector<4x128xf32>
    %27 = math.tanh %26 : vector<4x128xf32>
    %28 = arith.mulf %24, %9 : vector<4x128xf32>
    %29 = arith.mulf %23, %27 : vector<4x128xf32>
    %30 = arith.addf %28, %29 : vector<4x128xf32>
    %31 = math.tanh %30 : vector<4x128xf32>
    %32 = arith.mulf %25, %31 : vector<4x128xf32>
    %c0_17 = arith.constant 0 : index
    %c0_18 = arith.constant 0 : index
    %33 = vector.load %arg8[%c0_17, %c0_18] : memref<4x1024xf32, #tpu.memory_space<vmem>>, vector<4x128xf32>
    tpu.vector_store %arg8[%c0_17, %c0_18], %32 {strides = array<i32>} : memref<4x1024xf32, #tpu.memory_space<vmem>>, vector<4x128xf32>,
    %c4 = arith.constant 4 : index
    %c0_19 = arith.constant 0 : index
    %34 = vector.load %arg7[%c4, %c0_19] : memref<32x512xf32, #tpu.memory_space<vmem>>, vector<4x512xf32>
    %35 = arith.truncf %32 : vector<4x128xf32> to vector<4x128xbf16>
    %c0_20 = arith.constant 0 : index
    %c0_21 = arith.constant 0 : index
    %36 = vector.load %arg2[%c0_20, %c0_21] : memref<128x512xbf16, #tpu.memory_space<vmem>>, vector<128x512xbf16>
    %cst_22 = arith.constant dense<0.000000e+00> : vector<4x512xf32>
    %37 = tpu.matmul %35, %36, %cst_22 {dimension_numbers = #tpu.dot_dimension_numbers<[1], [0], [0], [1], [0, 0, 1, 1], [], []>} : vector<4x128xbf16>, vector<128x512xbf16>, vector<4x512xf32> -> vector<4x512xf32>
    %38 = arith.addf %34, %37 : vector<4x512xf32>
    %39 = vector.extract_strided_slice %38 {offsets = [0, 0], sizes = [4, 384], strides = [1, 1]} : vector<4x512xf32> to vector<4x384xf32>
    %cst_23 = arith.constant 5.000000e-01 : f32
    %40 = vector.broadcast %cst_23 : f32 to vector<4x384xf32>
    %41 = arith.mulf %40, %39 : vector<4x384xf32>
    %42 = math.tanh %41 : vector<4x384xf32>
    %cst_24 = arith.constant 5.000000e-01 : f32
    %43 = vector.broadcast %cst_24 : f32 to vector<4x384xf32>
    %44 = arith.mulf %43, %42 : vector<4x384xf32>
    %cst_25 = arith.constant 5.000000e-01 : f32
    %45 = vector.broadcast %cst_25 : f32 to vector<4x384xf32>
    %46 = arith.addf %44, %45 : vector<4x384xf32>
    %47 = vector.extract_strided_slice %46 {offsets = [0, 0], sizes = [4, 128], strides = [1, 1]} : vector<4x384xf32> to vector<4x128xf32>
    %48 = vector.extract_strided_slice %46 {offsets = [0, 128], sizes = [4, 128], strides = [1, 1]} : vector<4x384xf32> to vector<4x128xf32>
    %49 = vector.extract_strided_slice %46 {offsets = [0, 256], sizes = [4, 128], strides = [1, 1]} : vector<4x384xf32> to vector<4x128xf32>
    %50 = vector.extract_strided_slice %38 {offsets = [0, 384], sizes = [4, 128], strides = [1, 1]} : vector<4x512xf32> to vector<4x128xf32>
    %51 = math.tanh %50 : vector<4x128xf32>
    %52 = arith.mulf %48, %30 : vector<4x128xf32>
    %53 = arith.mulf %47, %51 : vector<4x128xf32>
    %54 = arith.addf %52, %53 : vector<4x128xf32>
    %55 = math.tanh %54 : vector<4x128xf32>
    %56 = arith.mulf %49, %55 : vector<4x128xf32>
    %c0_26 = arith.constant 0 : index
    %c128 = arith.constant 128 : index
    %57 = vector.load %arg8[%c0_26, %c128] : memref<4x1024xf32, #tpu.memory_space<vmem>>, vector<4x128xf32>
    tpu.vector_store %arg8[%c0_26, %c128], %56 {strides = array<i32>} : memref<4x1024xf32, #tpu.memory_space<vmem>>, vector<4x128xf32>,
    %c8 = arith.constant 8 : index
    %c0_27 = arith.constant 0 : index
    %58 = vector.load %arg7[%c8, %c0_27] : memref<32x512xf32, #tpu.memory_space<vmem>>, vector<4x512xf32>
    %59 = arith.truncf %56 : vector<4x128xf32> to vector<4x128xbf16>
    %c0_28 = arith.constant 0 : index
    %c0_29 = arith.constant 0 : index
    %60 = vector.load %arg2[%c0_28, %c0_29] : memref<128x512xbf16, #tpu.memory_space<vmem>>, vector<128x512xbf16>
    %cst_30 = arith.constant dense<0.000000e+00> : vector<4x512xf32>
    %61 = tpu.matmul %59, %60, %cst_30 {dimension_numbers = #tpu.dot_dimension_numbers<[1], [0], [0], [1], [0, 0, 1, 1], [], []>} : vector<4x128xbf16>, vector<128x512xbf16>, vector<4x512xf32> -> vector<4x512xf32>
    %62 = arith.addf %58, %61 : vector<4x512xf32>
    %63 = vector.extract_strided_slice %62 {offsets = [0, 0], sizes = [4, 384], strides = [1, 1]} : vector<4x512xf32> to vector<4x384xf32>
    %cst_31 = arith.constant 5.000000e-01 : f32
    %64 = vector.broadcast %cst_31 : f32 to vector<4x384xf32>
    %65 = arith.mulf %64, %63 : vector<4x384xf32>
    %66 = math.tanh %65 : vector<4x384xf32>
    %cst_32 = arith.constant 5.000000e-01 : f32
    %67 = vector.broadcast %cst_32 : f32 to vector<4x384xf32>
    %68 = arith.mulf %67, %66 : vector<4x384xf32>
    %cst_33 = arith.constant 5.000000e-01 : f32
    %69 = vector.broadcast %cst_33 : f32 to vector<4x384xf32>
    %70 = arith.addf %68, %69 : vector<4x384xf32>
    %71 = vector.extract_strided_slice %70 {offsets = [0, 0], sizes = [4, 128], strides = [1, 1]} : vector<4x384xf32> to vector<4x128xf32>
    %72 = vector.extract_strided_slice %70 {offsets = [0, 128], sizes = [4, 128], strides = [1, 1]} : vector<4x384xf32> to vector<4x128xf32>
    %73 = vector.extract_strided_slice %70 {offsets = [0, 256], sizes = [4, 128], strides = [1, 1]} : vector<4x384xf32> to vector<4x128xf32>
    %74 = vector.extract_strided_slice %62 {offsets = [0, 384], sizes = [4, 128], strides = [1, 1]} : vector<4x512xf32> to vector<4x128xf32>
    %75 = math.tanh %74 : vector<4x128xf32>
    %76 = arith.mulf %72, %54 : vector<4x128xf32>
    %77 = arith.mulf %71, %75 : vector<4x128xf32>
    %78 = arith.addf %76, %77 : vector<4x128xf32>
    %79 = math.tanh %78 : vector<4x128xf32>
    %80 = arith.mulf %73, %79 : vector<4x128xf32>
    %c0_34 = arith.constant 0 : index
    %c256 = arith.constant 256 : index
    %81 = vector.load %arg8[%c0_34, %c256] : memref<4x1024xf32, #tpu.memory_space<vmem>>, vector<4x128xf32>
    tpu.vector_store %arg8[%c0_34, %c256], %80 {strides = array<i32>} : memref<4x1024xf32, #tpu.memory_space<vmem>>, vector<4x128xf32>,
    %c12 = arith.constant 12 : index
    %c0_35 = arith.constant 0 : index
    %82 = vector.load %arg7[%c12, %c0_35] : memref<32x512xf32, #tpu.memory_space<vmem>>, vector<4x512xf32>
    %83 = arith.truncf %80 : vector<4x128xf32> to vector<4x128xbf16>
    %c0_36 = arith.constant 0 : index
    %c0_37 = arith.constant 0 : index
    %84 = vector.load %arg2[%c0_36, %c0_37] : memref<128x512xbf16, #tpu.memory_space<vmem>>, vector<128x512xbf16>
    %cst_38 = arith.constant dense<0.000000e+00> : vector<4x512xf32>
    %85 = tpu.matmul %83, %84, %cst_38 {dimension_numbers = #tpu.dot_dimension_numbers<[1], [0], [0], [1], [0, 0, 1, 1], [], []>} : vector<4x128xbf16>, vector<128x512xbf16>, vector<4x512xf32> -> vector<4x512xf32>
    %86 = arith.addf %82, %85 : vector<4x512xf32>
    %87 = vector.extract_strided_slice %86 {offsets = [0, 0], sizes = [4, 384], strides = [1, 1]} : vector<4x512xf32> to vector<4x384xf32>
    %cst_39 = arith.constant 5.000000e-01 : f32
    %88 = vector.broadcast %cst_39 : f32 to vector<4x384xf32>
    %89 = arith.mulf %88, %87 : vector<4x384xf32>
    %90 = math.tanh %89 : vector<4x384xf32>
    %cst_40 = arith.constant 5.000000e-01 : f32
    %91 = vector.broadcast %cst_40 : f32 to vector<4x384xf32>
    %92 = arith.mulf %91, %90 : vector<4x384xf32>
    %cst_41 = arith.constant 5.000000e-01 : f32
    %93 = vector.broadcast %cst_41 : f32 to vector<4x384xf32>
    %94 = arith.addf %92, %93 : vector<4x384xf32>
    %95 = vector.extract_strided_slice %94 {offsets = [0, 0], sizes = [4, 128], strides = [1, 1]} : vector<4x384xf32> to vector<4x128xf32>
    %96 = vector.extract_strided_slice %94 {offsets = [0, 128], sizes = [4, 128], strides = [1, 1]} : vector<4x384xf32> to vector<4x128xf32>
    %97 = vector.extract_strided_slice %94 {offsets = [0, 256], sizes = [4, 128], strides = [1, 1]} : vector<4x384xf32> to vector<4x128xf32>
    %98 = vector.extract_strided_slice %86 {offsets = [0, 384], sizes = [4, 128], strides = [1, 1]} : vector<4x512xf32> to vector<4x128xf32>
    %99 = math.tanh %98 : vector<4x128xf32>
    %100 = arith.mulf %96, %78 : vector<4x128xf32>
    %101 = arith.mulf %95, %99 : vector<4x128xf32>
    %102 = arith.addf %100, %101 : vector<4x128xf32>
    %103 = math.tanh %102 : vector<4x128xf32>
    %104 = arith.mulf %97, %103 : vector<4x128xf32>
    %c0_42 = arith.constant 0 : index
    %c384 = arith.constant 384 : index
    %105 = vector.load %arg8[%c0_42, %c384] : memref<4x1024xf32, #tpu.memory_space<vmem>>, vector<4x128xf32>
    tpu.vector_store %arg8[%c0_42, %c384], %104 {strides = array<i32>} : memref<4x1024xf32, #tpu.memory_space<vmem>>, vector<4x128xf32>,
    %c16 = arith.constant 16 : index
    %c0_43 = arith.constant 0 : index
    %106 = vector.load %arg7[%c16, %c0_43] : memref<32x512xf32, #tpu.memory_space<vmem>>, vector<4x512xf32>
    %107 = arith.truncf %104 : vector<4x128xf32> to vector<4x128xbf16>
    %c0_44 = arith.constant 0 : index
    %c0_45 = arith.constant 0 : index
    %108 = vector.load %arg2[%c0_44, %c0_45] : memref<128x512xbf16, #tpu.memory_space<vmem>>, vector<128x512xbf16>
    %cst_46 = arith.constant dense<0.000000e+00> : vector<4x512xf32>
    %109 = tpu.matmul %107, %108, %cst_46 {dimension_numbers = #tpu.dot_dimension_numbers<[1], [0], [0], [1], [0, 0, 1, 1], [], []>} : vector<4x128xbf16>, vector<128x512xbf16>, vector<4x512xf32> -> vector<4x512xf32>
    %110 = arith.addf %106, %109 : vector<4x512xf32>
    %111 = vector.extract_strided_slice %110 {offsets = [0, 0], sizes = [4, 384], strides = [1, 1]} : vector<4x512xf32> to vector<4x384xf32>
    %cst_47 = arith.constant 5.000000e-01 : f32
    %112 = vector.broadcast %cst_47 : f32 to vector<4x384xf32>
    %113 = arith.mulf %112, %111 : vector<4x384xf32>
    %114 = math.tanh %113 : vector<4x384xf32>
    %cst_48 = arith.constant 5.000000e-01 : f32
    %115 = vector.broadcast %cst_48 : f32 to vector<4x384xf32>
    %116 = arith.mulf %115, %114 : vector<4x384xf32>
    %cst_49 = arith.constant 5.000000e-01 : f32
    %117 = vector.broadcast %cst_49 : f32 to vector<4x384xf32>
    %118 = arith.addf %116, %117 : vector<4x384xf32>
    %119 = vector.extract_strided_slice %118 {offsets = [0, 0], sizes = [4, 128], strides = [1, 1]} : vector<4x384xf32> to vector<4x128xf32>
    %120 = vector.extract_strided_slice %118 {offsets = [0, 128], sizes = [4, 128], strides = [1, 1]} : vector<4x384xf32> to vector<4x128xf32>
    %121 = vector.extract_strided_slice %118 {offsets = [0, 256], sizes = [4, 128], strides = [1, 1]} : vector<4x384xf32> to vector<4x128xf32>
    %122 = vector.extract_strided_slice %110 {offsets = [0, 384], sizes = [4, 128], strides = [1, 1]} : vector<4x512xf32> to vector<4x128xf32>
    %123 = math.tanh %122 : vector<4x128xf32>
    %124 = arith.mulf %120, %102 : vector<4x128xf32>
    %125 = arith.mulf %119, %123 : vector<4x128xf32>
    %126 = arith.addf %124, %125 : vector<4x128xf32>
    %127 = math.tanh %126 : vector<4x128xf32>
    %128 = arith.mulf %121, %127 : vector<4x128xf32>
    %c0_50 = arith.constant 0 : index
    %c512 = arith.constant 512 : index
    %129 = vector.load %arg8[%c0_50, %c512] : memref<4x1024xf32, #tpu.memory_space<vmem>>, vector<4x128xf32>
    tpu.vector_store %arg8[%c0_50, %c512], %128 {strides = array<i32>} : memref<4x1024xf32, #tpu.memory_space<vmem>>, vector<4x128xf32>,
    %c20 = arith.constant 20 : index
    %c0_51 = arith.constant 0 : index
    %130 = vector.load %arg7[%c20, %c0_51] : memref<32x512xf32, #tpu.memory_space<vmem>>, vector<4x512xf32>
    %131 = arith.truncf %128 : vector<4x128xf32> to vector<4x128xbf16>
    %c0_52 = arith.constant 0 : index
    %c0_53 = arith.constant 0 : index
    %132 = vector.load %arg2[%c0_52, %c0_53] : memref<128x512xbf16, #tpu.memory_space<vmem>>, vector<128x512xbf16>
    %cst_54 = arith.constant dense<0.000000e+00> : vector<4x512xf32>
    %133 = tpu.matmul %131, %132, %cst_54 {dimension_numbers = #tpu.dot_dimension_numbers<[1], [0], [0], [1], [0, 0, 1, 1], [], []>} : vector<4x128xbf16>, vector<128x512xbf16>, vector<4x512xf32> -> vector<4x512xf32>
    %134 = arith.addf %130, %133 : vector<4x512xf32>
    %135 = vector.extract_strided_slice %134 {offsets = [0, 0], sizes = [4, 384], strides = [1, 1]} : vector<4x512xf32> to vector<4x384xf32>
    %cst_55 = arith.constant 5.000000e-01 : f32
    %136 = vector.broadcast %cst_55 : f32 to vector<4x384xf32>
    %137 = arith.mulf %136, %135 : vector<4x384xf32>
    %138 = math.tanh %137 : vector<4x384xf32>
    %cst_56 = arith.constant 5.000000e-01 : f32
    %139 = vector.broadcast %cst_56 : f32 to vector<4x384xf32>
    %140 = arith.mulf %139, %138 : vector<4x384xf32>
    %cst_57 = arith.constant 5.000000e-01 : f32
    %141 = vector.broadcast %cst_57 : f32 to vector<4x384xf32>
    %142 = arith.addf %140, %141 : vector<4x384xf32>
    %143 = vector.extract_strided_slice %142 {offsets = [0, 0], sizes = [4, 128], strides = [1, 1]} : vector<4x384xf32> to vector<4x128xf32>
    %144 = vector.extract_strided_slice %142 {offsets = [0, 128], sizes = [4, 128], strides = [1, 1]} : vector<4x384xf32> to vector<4x128xf32>
    %145 = vector.extract_strided_slice %142 {offsets = [0, 256], sizes = [4, 128], strides = [1, 1]} : vector<4x384xf32> to vector<4x128xf32>
    %146 = vector.extract_strided_slice %134 {offsets = [0, 384], sizes = [4, 128], strides = [1, 1]} : vector<4x512xf32> to vector<4x128xf32>
    %147 = math.tanh %146 : vector<4x128xf32>
    %148 = arith.mulf %144, %126 : vector<4x128xf32>
    %149 = arith.mulf %143, %147 : vector<4x128xf32>
    %150 = arith.addf %148, %149 : vector<4x128xf32>
    %151 = math.tanh %150 : vector<4x128xf32>
    %152 = arith.mulf %145, %151 : vector<4x128xf32>
    %c0_58 = arith.constant 0 : index
    %c640 = arith.constant 640 : index
    %153 = vector.load %arg8[%c0_58, %c640] : memref<4x1024xf32, #tpu.memory_space<vmem>>, vector<4x128xf32>
    tpu.vector_store %arg8[%c0_58, %c640], %152 {strides = array<i32>} : memref<4x1024xf32, #tpu.memory_space<vmem>>, vector<4x128xf32>,
    %c24 = arith.constant 24 : index
    %c0_59 = arith.constant 0 : index
    %154 = vector.load %arg7[%c24, %c0_59] : memref<32x512xf32, #tpu.memory_space<vmem>>, vector<4x512xf32>
    %155 = arith.truncf %152 : vector<4x128xf32> to vector<4x128xbf16>
    %c0_60 = arith.constant 0 : index
    %c0_61 = arith.constant 0 : index
    %156 = vector.load %arg2[%c0_60, %c0_61] : memref<128x512xbf16, #tpu.memory_space<vmem>>, vector<128x512xbf16>
    %cst_62 = arith.constant dense<0.000000e+00> : vector<4x512xf32>
    %157 = tpu.matmul %155, %156, %cst_62 {dimension_numbers = #tpu.dot_dimension_numbers<[1], [0], [0], [1], [0, 0, 1, 1], [], []>} : vector<4x128xbf16>, vector<128x512xbf16>, vector<4x512xf32> -> vector<4x512xf32>
    %158 = arith.addf %154, %157 : vector<4x512xf32>
    %159 = vector.extract_strided_slice %158 {offsets = [0, 0], sizes = [4, 384], strides = [1, 1]} : vector<4x512xf32> to vector<4x384xf32>
    %cst_63 = arith.constant 5.000000e-01 : f32
    %160 = vector.broadcast %cst_63 : f32 to vector<4x384xf32>
    %161 = arith.mulf %160, %159 : vector<4x384xf32>
    %162 = math.tanh %161 : vector<4x384xf32>
    %cst_64 = arith.constant 5.000000e-01 : f32
    %163 = vector.broadcast %cst_64 : f32 to vector<4x384xf32>
    %164 = arith.mulf %163, %162 : vector<4x384xf32>
    %cst_65 = arith.constant 5.000000e-01 : f32
    %165 = vector.broadcast %cst_65 : f32 to vector<4x384xf32>
    %166 = arith.addf %164, %165 : vector<4x384xf32>
    %167 = vector.extract_strided_slice %166 {offsets = [0, 0], sizes = [4, 128], strides = [1, 1]} : vector<4x384xf32> to vector<4x128xf32>
    %168 = vector.extract_strided_slice %166 {offsets = [0, 128], sizes = [4, 128], strides = [1, 1]} : vector<4x384xf32> to vector<4x128xf32>
    %169 = vector.extract_strided_slice %166 {offsets = [0, 256], sizes = [4, 128], strides = [1, 1]} : vector<4x384xf32> to vector<4x128xf32>
    %170 = vector.extract_strided_slice %158 {offsets = [0, 384], sizes = [4, 128], strides = [1, 1]} : vector<4x512xf32> to vector<4x128xf32>
    %171 = math.tanh %170 : vector<4x128xf32>
    %172 = arith.mulf %168, %150 : vector<4x128xf32>
    %173 = arith.mulf %167, %171 : vector<4x128xf32>
    %174 = arith.addf %172, %173 : vector<4x128xf32>
    %175 = math.tanh %174 : vector<4x128xf32>
    %176 = arith.mulf %169, %175 : vector<4x128xf32>
    %c0_66 = arith.constant 0 : index
    %c768 = arith.constant 768 : index
    %177 = vector.load %arg8[%c0_66, %c768] : memref<4x1024xf32, #tpu.memory_space<vmem>>, vector<4x128xf32>
    tpu.vector_store %arg8[%c0_66, %c768], %176 {strides = array<i32>} : memref<4x1024xf32, #tpu.memory_space<vmem>>, vector<4x128xf32>,
    %c28 = arith.constant 28 : index
    %c0_67 = arith.constant 0 : index
    %178 = vector.load %arg7[%c28, %c0_67] : memref<32x512xf32, #tpu.memory_space<vmem>>, vector<4x512xf32>
    %179 = arith.truncf %176 : vector<4x128xf32> to vector<4x128xbf16>
    %c0_68 = arith.constant 0 : index
    %c0_69 = arith.constant 0 : index
    %180 = vector.load %arg2[%c0_68, %c0_69] : memref<128x512xbf16, #tpu.memory_space<vmem>>, vector<128x512xbf16>
    %cst_70 = arith.constant dense<0.000000e+00> : vector<4x512xf32>
    %181 = tpu.matmul %179, %180, %cst_70 {dimension_numbers = #tpu.dot_dimension_numbers<[1], [0], [0], [1], [0, 0, 1, 1], [], []>} : vector<4x128xbf16>, vector<128x512xbf16>, vector<4x512xf32> -> vector<4x512xf32>
    %182 = arith.addf %178, %181 : vector<4x512xf32>
    %183 = vector.extract_strided_slice %182 {offsets = [0, 0], sizes = [4, 384], strides = [1, 1]} : vector<4x512xf32> to vector<4x384xf32>
    %cst_71 = arith.constant 5.000000e-01 : f32
    %184 = vector.broadcast %cst_71 : f32 to vector<4x384xf32>
    %185 = arith.mulf %184, %183 : vector<4x384xf32>
    %186 = math.tanh %185 : vector<4x384xf32>
    %cst_72 = arith.constant 5.000000e-01 : f32
    %187 = vector.broadcast %cst_72 : f32 to vector<4x384xf32>
    %188 = arith.mulf %187, %186 : vector<4x384xf32>
    %cst_73 = arith.constant 5.000000e-01 : f32
    %189 = vector.broadcast %cst_73 : f32 to vector<4x384xf32>
    %190 = arith.addf %188, %189 : vector<4x384xf32>
    %191 = vector.extract_strided_slice %190 {offsets = [0, 0], sizes = [4, 128], strides = [1, 1]} : vector<4x384xf32> to vector<4x128xf32>
    %192 = vector.extract_strided_slice %190 {offsets = [0, 128], sizes = [4, 128], strides = [1, 1]} : vector<4x384xf32> to vector<4x128xf32>
    %193 = vector.extract_strided_slice %190 {offsets = [0, 256], sizes = [4, 128], strides = [1, 1]} : vector<4x384xf32> to vector<4x128xf32>
    %194 = vector.extract_strided_slice %182 {offsets = [0, 384], sizes = [4, 128], strides = [1, 1]} : vector<4x512xf32> to vector<4x128xf32>
    %195 = math.tanh %194 : vector<4x128xf32>
    %196 = arith.mulf %192, %174 : vector<4x128xf32>
    %197 = arith.mulf %191, %195 : vector<4x128xf32>
    %198 = arith.addf %196, %197 : vector<4x128xf32>
    %199 = math.tanh %198 : vector<4x128xf32>
    %200 = arith.mulf %193, %199 : vector<4x128xf32>
    %c0_74 = arith.constant 0 : index
    %c896 = arith.constant 896 : index
    %201 = vector.load %arg8[%c0_74, %c896] : memref<4x1024xf32, #tpu.memory_space<vmem>>, vector<4x128xf32>
    tpu.vector_store %arg8[%c0_74, %c896], %200 {strides = array<i32>} : memref<4x1024xf32, #tpu.memory_space<vmem>>, vector<4x128xf32>,
    %c0_75 = arith.constant 0 : index
    %c0_76 = arith.constant 0 : index
    %202 = vector.load %arg8[%c0_75, %c0_76] : memref<4x1024xf32, #tpu.memory_space<vmem>>, vector<4x1024xf32>
    %c0_77 = arith.constant 0 : index
    %c0_78 = arith.constant 0 : index
    %203 = vector.load %arg4[%c0_77, %c0_78] : memref<1024x8xf32, #tpu.memory_space<vmem>>, vector<1024x8xf32>
    %cst_79 = arith.constant dense<0.000000e+00> : vector<4x8xf32>
    %204 = tpu.matmul %202, %203, %cst_79 {dimension_numbers = #tpu.dot_dimension_numbers<[1], [0], [0], [1], [0, 0, 1, 1], [], []>} : vector<4x1024xf32>, vector<1024x8xf32>, vector<4x8xf32> -> vector<4x8xf32>
    %c0_80 = arith.constant 0 : index
    %c0_81 = arith.constant 0 : index
    %205 = vector.load %arg5[%c0_80, %c0_81] : memref<1x1xf32, #tpu.memory_space<vmem>>, vector<1x1xf32>
    %206 = vector.broadcast %205 : vector<1x1xf32> to vector<4x8xf32>
    %207 = arith.addf %204, %206 : vector<4x8xf32>
    %cst_82 = arith.constant 5.000000e-01 : f32
    %208 = vector.broadcast %cst_82 : f32 to vector<4x8xf32>
    %209 = arith.mulf %208, %207 : vector<4x8xf32>
    %210 = math.tanh %209 : vector<4x8xf32>
    %cst_83 = arith.constant 5.000000e-01 : f32
    %211 = vector.broadcast %cst_83 : f32 to vector<4x8xf32>
    %212 = arith.mulf %211, %210 : vector<4x8xf32>
    %cst_84 = arith.constant 5.000000e-01 : f32
    %213 = vector.broadcast %cst_84 : f32 to vector<4x8xf32>
    %214 = arith.addf %212, %213 : vector<4x8xf32>
    %c0_85 = arith.constant 0 : index
    %c0_86 = arith.constant 0 : index
    %215 = vector.load %arg6[%c0_85, %c0_86] : memref<4x8xf32, #tpu.memory_space<vmem>>, vector<4x8xf32>
    tpu.vector_store %arg6[%c0_85, %c0_86], %214 {strides = array<i32>} : memref<4x8xf32, #tpu.memory_space<vmem>>, vector<4x8xf32>,
    return
  }
}

</mosaic_0001>

<llo_original>
// kernel: lstm_forward.1
$region0: #{lstm_forward.1}
  #allocation0 [shape = 'u32[]', space=smem, size = 0x4, offset = 0x4, fixed_abs, tag = 'smem constant byte address 0x4 - core index']
  #allocation1 [shape = 'u32[144,128]{1,0:T(1,128)}', space=vmem, size = 0x12000, scoped, tag = 'internal scratch']
  #allocation2 [shape = 'f32[32,512]{1,0:T(8,128)}', space=vmem, size = 0x10000, scoped, tag = 'scratch operand']
  #allocation3 [shape = 'f32[4,1024]{1,0:T(4,128)}', space=vmem, size = 0x4000, scoped, tag = 'scratch operand']
  #allocation4 [shape = 'f32[1,1]{1,0:T(1,128)S(1)}', space=vmem, size = 0x200, scoped, tag = 'scoped memory for lstm_forward.1']
  %s0 = inlined_call_operand.vmem [shape: f32[32,8], index: 0, kind: input, shape index: {}]
  %s1 = inlined_call_operand.vmem [shape: bf16[8,512], index: 1, kind: input, shape index: {}]
  %s2 = inlined_call_operand.vmem [shape: bf16[128,512], index: 2, kind: input, shape index: {}]
  %s3 = inlined_call_operand.vmem [shape: f32[1,512], index: 3, kind: input, shape index: {}]
  %s4 = inlined_call_operand.vmem [shape: f32[1024,8], index: 4, kind: input, shape index: {}]
  %s5 = inlined_call_operand.<no memory space> [shape: f32[1,1], index: 5, kind: input, shape index: {}]
  %s6 = inlined_call_operand.hbm [shape: f32[4,8], index: 6, kind: output, shape index: {}]
  %s7 = sld [smem:[#allocation0]]
  $region34: #{lstm_forward.1} parent=0
    _
  %s9 = ssub.s32 1, %s7
  %s10 = scalar_select 0, %s9, %s7
  %v11 = vstv %s5
  %12 = vst [vmem:[#allocation4] sm:$0x1] %v11
  $region1: #{lstm_forward.1} parent=0
    #allocation5 [shape = 'u8[2048]{0}', space=vmem, size = 0x800, scoped, tag = 'output window, operand 0, single buffered']
    #allocation6 [shape = 's32[1]{0}', space=sflag, size = 0x4, scoped, tag = 'scoped memory for lstm_forward.1']
    %13 = vsyncpa [#allocation6], 0
    // Predicated region
    $region2: #{lstm_forward.1} parent=1 // pred_check
      _
    $region3: #{lstm_forward.1} parent=1 // pred_check_branch
      %15 = sbr.rel (0) target = $region5
    $region4: #{lstm_forward.1} parent=1 // pred_region
      _
    $region5: #{lstm_forward.1} parent=1 // pred_fallthru
      _
    // Predicated region
    $region6: #{lstm_forward.1} parent=1 // pred_check
      _
    $region7: #{lstm_forward.1} parent=1 // pred_check_branch
      %17 = sbr.rel (0) target = $region9
    $region8: #{lstm_forward.1} parent=1 // pred_region
      _
    $region9: #{lstm_forward.1} parent=1 // pred_fallthru
      _
    // Predicated region
    $region10: #{lstm_forward.1} parent=1 // pred_check
      _
    $region11: #{lstm_forward.1} parent=1 // pred_check_branch
      %19 = sbr.rel (0) target = $region13
    $region12: #{lstm_forward.1} parent=1 // pred_region
      _
    $region13: #{lstm_forward.1} parent=1 // pred_fallthru
      _
    // Predicated region
    $region14: #{lstm_forward.1} parent=1 // pred_check
      _
    $region15: #{lstm_forward.1} parent=1 // pred_check_branch
      %21 = sbr.rel (0) target = $region17
    $region16: #{lstm_forward.1} parent=1 // pred_region
      _
    $region17: #{lstm_forward.1} parent=1 // pred_fallthru
      _
    // Predicated region
    $region18: #{lstm_forward.1} parent=1 // pred_check
      _
    $region19: #{lstm_forward.1} parent=1 // pred_check_branch
      %23 = sbr.rel (0) target = $region21
    $region20: #{lstm_forward.1} parent=1 // pred_region
      _
    $region21: #{lstm_forward.1} parent=1 // pred_fallthru
      _
    // Predicated region
    $region22: #{lstm_forward.1} parent=1 // pred_check
      _
    $region23: #{lstm_forward.1} parent=1 // pred_check_branch
      %25 = sbr.rel (0) target = $region25
    $region24: #{lstm_forward.1} parent=1 // pred_region
      _
    $region25: #{lstm_forward.1} parent=1 // pred_fallthru
      _
    %v27 = vld [vmem:[%s0] sm:$0xff]
    %v28 = vld [vmem:[%s0 + $0x8] sm:$0xff]
    %v29 = vld [vmem:[%s0 + $0x10] sm:$0xff]
    %v30 = vld [vmem:[%s0 + $0x18] sm:$0xff]
    %v31 = vpack.c.bf16 %v28, %v27
    %v32 = vpack.c.bf16 %v30, %v29
    %v33 = vld [vmem:[%s1] sm:$0xff]
    %v34 = vld [vmem:[%s1 + $0x8] sm:$0xff]
    %v35 = vld [vmem:[%s3] sm:$0xf]
    %v37 = vlaneseq
    %v38 = vshrl.u32 %v37, 7
    %v39 = vsub.s32 0, %v38
    %v40 = vrot.slane %v35, %v39
    %v41 = vlaneseq
    %v42 = vshrl.u32 %v41, 7
    %v43 = vsub.s32 1, %v42
    %v44 = vrot.slane %v35, %v43
    %v45 = vlaneseq
    %v46 = vshrl.u32 %v45, 7
    %v47 = vsub.s32 2, %v46
    %v48 = vrot.slane %v35, %v47
    %v49 = vlaneseq
    %v50 = vshrl.u32 %v49, 7
    %v51 = vsub.s32 3, %v50
    %v52 = vrot.slane %v35, %v51
    %v59 = vunpack.c.l.b16 %v33
    %v60 = vunpack.c.h.b16 %v33
    %v61 = vunpack.c.l.b16 %v34
    %v62 = vunpack.c.h.b16 %v34
    %v63 = vpack.c.b16 %v59, %v59
    %v64 = vpack.c.b16 %v60, %v60
    %v65 = vpack.c.b16 %v61, %v61
    %v66 = vpack.c.b16 %v62, %v62
    %vm67 = vcmask 64512
    %v69 = vsel %vm67, %v31, 0
    %v72 = vsel %vm67, %v32, 0
    %vm74 = vcmask 1043456
    %v76 = vsel %vm74, %v63, 0
    %v79 = vsel %vm74, %v64, 0
    %v82 = vsel %vm74, %v65, 0
    %v85 = vsel %vm74, %v66, 0
    %87 = vmatprep.subr.bf16.mxu0 %v79
    %88 = vmatpush1.bf16.msra.mxu0 %v76
    %89 = vmatprep.subr.bf16.mxu0 0
    %90 = vmatpush1.bf16.msra.mxu0 0
    %91 = vmatprep.subr.bf16.mxu0 0
    %92 = vmatpush1.bf16.msra.mxu0 0
    %93 = vmatprep.subr.bf16.mxu0 0
    %94 = vmatpush1.bf16.msra.mxu0 0
    %95 = vmatprep.subr.bf16.mxu0 0
    %96 = vmatpush1.bf16.msra.mxu0 0
    %97 = vmatprep.subr.bf16.mxu0 0
    %98 = vmatpush1.bf16.msra.mxu0 0
    %99 = vmatprep.subr.bf16.mxu0 0
    %100 = vmatpush1.bf16.msra.mxu0 0
    %101 = vmatprep.subr.bf16.mxu0 0
    %102 = vmatpush1.bf16.msra.mxu0 0
    %103 = vmatprep.subr.bf16.mxu0 0
    %104 = vmatpush1.bf16.msra.mxu0 0
    %105 = vmatprep.subr.bf16.mxu0 0
    %106 = vmatpush1.bf16.msra.mxu0 0
    %107 = vmatprep.subr.bf16.mxu0 0
    %108 = vmatpush1.bf16.msra.mxu0 0
    %109 = vmatprep.subr.bf16.mxu0 0
    %110 = vmatpush1.bf16.msra.mxu0 0
    %111 = vmatprep.subr.bf16.mxu0 0
    %112 = vmatpush1.bf16.msra.mxu0 0
    %113 = vmatprep.subr.bf16.mxu0 0
    %114 = vmatpush1.bf16.msra.mxu0 0
    %115 = vmatprep.subr.bf16.mxu0 0
    %116 = vmatpush1.bf16.msra.mxu0 0
    %117 = vmatprep.subr.bf16.mxu0 0
    %118 = vmatpush1.bf16.msra.mxu0 0
    %119 = vmatprep.mubr.bf16.mxu0 0
    %120 = vmatmul.mubr.bf16.gmra.mrb[0].mxu0 %v69
    %v121 = vpop.f32.mrb[0].mxu0
    %v122 = vadd.f32 %v40, %v121
    %v123 = vpop.f32.mrb[0].mxu0
    %v124 = vadd.f32 %v44, %v123
    %v125 = vpop.f32.mrb[0].mxu0
    %v126 = vadd.f32 %v40, %v125
    %v127 = vpop.f32.mrb[0].mxu0
    %v128 = vadd.f32 %v44, %v127
    %129 = vmatprep.mubr.bf16.mxu0 0
    %130 = vmatmul.mubr.bf16.gmra.mrb[0].mxu0 %v72
    %v131 = vpop.f32.mrb[0].mxu0
    %v132 = vadd.f32 %v40, %v131
    %v133 = vpop.f32.mrb[0].mxu0
    %v134 = vadd.f32 %v44, %v133
    %v135 = vpop.f32.mrb[0].mxu0
    %v136 = vadd.f32 %v40, %v135
    %v137 = vpop.f32.mrb[0].mxu0
    %v138 = vadd.f32 %v44, %v137
    %139 = vdwg.mxu0
    %140 = vmatprep.subr.bf16.mxu0 %v85
    %141 = vmatpush1.bf16.msra.mxu0 %v82
    %142 = vmatprep.subr.bf16.mxu0 0
    %143 = vmatpush1.bf16.msra.mxu0 0
    %144 = vmatprep.subr.bf16.mxu0 0
    %145 = vmatpush1.bf16.msra.mxu0 0
    %146 = vmatprep.subr.bf16.mxu0 0
    %147 = vmatpush1.bf16.msra.mxu0 0
    %148 = vmatprep.subr.bf16.mxu0 0
    %149 = vmatpush1.bf16.msra.mxu0 0
    %150 = vmatprep.subr.bf16.mxu0 0
    %151 = vmatpush1.bf16.msra.mxu0 0
    %152 = vmatprep.subr.bf16.mxu0 0
    %153 = vmatpush1.bf16.msra.mxu0 0
    %154 = vmatprep.subr.bf16.mxu0 0
    %155 = vmatpush1.bf16.msra.mxu0 0
    %156 = vmatprep.subr.bf16.mxu0 0
    %157 = vmatpush1.bf16.msra.mxu0 0
    %158 = vmatprep.subr.bf16.mxu0 0
    %159 = vmatpush1.bf16.msra.mxu0 0
    %160 = vmatprep.subr.bf16.mxu0 0
    %161 = vmatpush1.bf16.msra.mxu0 0
    %162 = vmatprep.subr.bf16.mxu0 0
    %163 = vmatpush1.bf16.msra.mxu0 0
    %164 = vmatprep.subr.bf16.mxu0 0
    %165 = vmatpush1.bf16.msra.mxu0 0
    %166 = vmatprep.subr.bf16.mxu0 0
    %167 = vmatpush1.bf16.msra.mxu0 0
    %168 = vmatprep.subr.bf16.mxu0 0
    %169 = vmatpush1.bf16.msra.mxu0 0
    %170 = vmatprep.subr.bf16.mxu0 0
    %171 = vmatpush1.bf16.msra.mxu0 0
    %172 = vmatprep.mubr.bf16.mxu0 0
    %173 = vmatmul.mubr.bf16.gmra.mrb[0].mxu0 %v69
    %v174 = vpop.f32.mrb[0].mxu0
    %v175 = vadd.f32 %v48, %v174
    %v176 = vpop.f32.mrb[0].mxu0
    %v177 = vadd.f32 %v52, %v176
    %v178 = vpop.f32.mrb[0].mxu0
    %v179 = vadd.f32 %v48, %v178
    %v180 = vpop.f32.mrb[0].mxu0
    %v181 = vadd.f32 %v52, %v180
    %182 = vmatprep.mubr.bf16.mxu0 0
    %183 = vmatmul.mubr.bf16.gmra.mrb[0].mxu0 %v72
    %v184 = vpop.f32.mrb[0].mxu0
    %v185 = vadd.f32 %v48, %v184
    %v186 = vpop.f32.mrb[0].mxu0
    %v187 = vadd.f32 %v52, %v186
    %v188 = vpop.f32.mrb[0].mxu0
    %v189 = vadd.f32 %v48, %v188
    %v190 = vpop.f32.mrb[0].mxu0
    %v191 = vadd.f32 %v52, %v190
    %192 = vdwg.mxu0
    %193 = vst [vmem:[#allocation2] sm:$0xff] %v122
    %194 = vst [vmem:[#allocation2 + $0x8] sm:$0xff] %v124
    %195 = vst [vmem:[#allocation2 + $0x10] sm:$0xff] %v175
    %196 = vst [vmem:[#allocation2 + $0x18] sm:$0xff] %v177
    %197 = vst [vmem:[#allocation2 + $0x20] sm:$0xff] %v126
    %198 = vst [vmem:[#allocation2 + $0x28] sm:$0xff] %v128
    %199 = vst [vmem:[#allocation2 + $0x30] sm:$0xff] %v179
    %200 = vst [vmem:[#allocation2 + $0x38] sm:$0xff] %v181
    %201 = vst [vmem:[#allocation2 + $0x40] sm:$0xff] %v132
    %202 = vst [vmem:[#allocation2 + $0x48] sm:$0xff] %v134
    %203 = vst [vmem:[#allocation2 + $0x50] sm:$0xff] %v185
    %204 = vst [vmem:[#allocation2 + $0x58] sm:$0xff] %v187
    %205 = vst [vmem:[#allocation2 + $0x60] sm:$0xff] %v136
    %206 = vst [vmem:[#allocation2 + $0x68] sm:$0xff] %v138
    %207 = vst [vmem:[#allocation2 + $0x70] sm:$0xff] %v189
    %208 = vst [vmem:[#allocation2 + $0x78] sm:$0xff] %v191
    %v209 = vld [vmem:[#allocation2] sm:$0xf]
    %v210 = vld [vmem:[#allocation2 + $0x8] sm:$0xf]
    %v211 = vld [vmem:[#allocation2 + $0x10] sm:$0xf]
    %v212 = vld [vmem:[#allocation2 + $0x18] sm:$0xf]
    %v213 = vld [vmem:[%s2] sm:$0xff]
    %v214 = vld [vmem:[%s2 + $0x8] sm:$0xff]
    %v215 = vld [vmem:[%s2 + $0x10] sm:$0xff]
    %v216 = vld [vmem:[%s2 + $0x18] sm:$0xff]
    %v217 = vld [vmem:[%s2 + $0x20] sm:$0xff]
    %v218 = vld [vmem:[%s2 + $0x28] sm:$0xff]
    %v219 = vld [vmem:[%s2 + $0x30] sm:$0xff]
    %v220 = vld [vmem:[%s2 + $0x38] sm:$0xff]
    %v221 = vld [vmem:[%s2 + $0x40] sm:$0xff]
    %v222 = vld [vmem:[%s2 + $0x48] sm:$0xff]
    %v223 = vld [vmem:[%s2 + $0x50] sm:$0xff]
    %v224 = vld [vmem:[%s2 + $0x58] sm:$0xff]
    %v225 = vld [vmem:[%s2 + $0x60] sm:$0xff]
    %v226 = vld [vmem:[%s2 + $0x68] sm:$0xff]
    %v227 = vld [vmem:[%s2 + $0x70] sm:$0xff]
    %v228 = vld [vmem:[%s2 + $0x78] sm:$0xff]
    %v229 = vld [vmem:[%s2 + $0x80] sm:$0xff]
    %v230 = vld [vmem:[%s2 + $0x88] sm:$0xff]
    %v231 = vld [vmem:[%s2 + $0x90] sm:$0xff]
    %v232 = vld [vmem:[%s2 + $0x98] sm:$0xff]
    %v233 = vld [vmem:[%s2 + $0xa0] sm:$0xff]
    %v234 = vld [vmem:[%s2 + $0xa8] sm:$0xff]
    %v235 = vld [vmem:[%s2 + $0xb0] sm:$0xff]
    %v236 = vld [vmem:[%s2 + $0xb8] sm:$0xff]
    %v237 = vld [vmem:[%s2 + $0xc0] sm:$0xff]
    %v238 = vld [vmem:[%s2 + $0xc8] sm:$0xff]
    %v239 = vld [vmem:[%s2 + $0xd0] sm:$0xff]
    %v240 = vld [vmem:[%s2 + $0xd8] sm:$0xff]
    %v241 = vld [vmem:[%s2 + $0xe0] sm:$0xff]
    %v242 = vld [vmem:[%s2 + $0xe8] sm:$0xff]
    %v243 = vld [vmem:[%s2 + $0xf0] sm:$0xff]
    %v244 = vld [vmem:[%s2 + $0xf8] sm:$0xff]
    %v277 = vunpack.c.l.b16 %v213
    %v278 = vunpack.c.h.b16 %v213
    %v279 = vunpack.c.l.b16 %v214
    %v280 = vunpack.c.h.b16 %v214
    %v281 = vunpack.c.l.b16 %v215
    %v282 = vunpack.c.h.b16 %v215
    %v283 = vunpack.c.l.b16 %v216
    %v284 = vunpack.c.h.b16 %v216
    %v285 = vunpack.c.l.b16 %v217
    %v286 = vunpack.c.h.b16 %v217
    %v287 = vunpack.c.l.b16 %v218
    %v288 = vunpack.c.h.b16 %v218
    %v289 = vunpack.c.l.b16 %v219
    %v290 = vunpack.c.h.b16 %v219
    %v291 = vunpack.c.l.b16 %v220
    %v292 = vunpack.c.h.b16 %v220
    %v293 = vunpack.c.l.b16 %v221
    %v294 = vunpack.c.h.b16 %v221
    %v295 = vunpack.c.l.b16 %v222
    %v296 = vunpack.c.h.b16 %v222
    %v297 = vunpack.c.l.b16 %v223
    %v298 = vunpack.c.h.b16 %v223
    %v299 = vunpack.c.l.b16 %v224
    %v300 = vunpack.c.h.b16 %v224
    %v301 = vunpack.c.l.b16 %v225
    %v302 = vunpack.c.h.b16 %v225
    %v303 = vunpack.c.l.b16 %v226
    %v304 = vunpack.c.h.b16 %v226
    %v305 = vunpack.c.l.b16 %v227
    %v306 = vunpack.c.h.b16 %v227
    %v307 = vunpack.c.l.b16 %v228
    %v308 = vunpack.c.h.b16 %v228
    %v309 = vunpack.c.l.b16 %v229
    %v310 = vunpack.c.h.b16 %v229
    %v311 = vunpack.c.l.b16 %v230
    %v312 = vunpack.c.h.b16 %v230
    %v313 = vunpack.c.l.b16 %v231
    %v314 = vunpack.c.h.b16 %v231
    %v315 = vunpack.c.l.b16 %v232
    %v316 = vunpack.c.h.b16 %v232
    %v317 = vunpack.c.l.b16 %v233
    %v318 = vunpack.c.h.b16 %v233
    %v319 = vunpack.c.l.b16 %v234
    %v320 = vunpack.c.h.b16 %v234
    %v321 = vunpack.c.l.b16 %v235
    %v322 = vunpack.c.h.b16 %v235
    %v323 = vunpack.c.l.b16 %v236
    %v324 = vunpack.c.h.b16 %v236
    %v325 = vunpack.c.l.b16 %v237
    %v326 = vunpack.c.h.b16 %v237
    %v327 = vunpack.c.l.b16 %v238
    %v328 = vunpack.c.h.b16 %v238
    %v329 = vunpack.c.l.b16 %v239
    %v330 = vunpack.c.h.b16 %v239
    %v331 = vunpack.c.l.b16 %v240
    %v332 = vunpack.c.h.b16 %v240
    %v333 = vunpack.c.l.b16 %v241
    %v334 = vunpack.c.h.b16 %v241
    %v335 = vunpack.c.l.b16 %v242
    %v336 = vunpack.c.h.b16 %v242
    %v337 = vunpack.c.l.b16 %v243
    %v338 = vunpack.c.h.b16 %v243
    %v339 = vunpack.c.l.b16 %v244
    %v340 = vunpack.c.h.b16 %v244
    %v341 = vpack.c.b16 %v281, %v277
    %v342 = vpack.c.b16 %v282, %v278
    %v343 = vpack.c.b16 %v283, %v279
    %v344 = vpack.c.b16 %v284, %v280
    %v345 = vpack.c.b16 %v289, %v285
    %v346 = vpack.c.b16 %v290, %v286
    %v347 = vpack.c.b16 %v291, %v287
    %v348 = vpack.c.b16 %v292, %v288
    %v349 = vpack.c.b16 %v297, %v293
    %v350 = vpack.c.b16 %v298, %v294
    %v351 = vpack.c.b16 %v299, %v295
    %v352 = vpack.c.b16 %v300, %v296
    %v353 = vpack.c.b16 %v305, %v301
    %v354 = vpack.c.b16 %v306, %v302
    %v355 = vpack.c.b16 %v307, %v303
    %v356 = vpack.c.b16 %v308, %v304
    %v357 = vpack.c.b16 %v313, %v309
    %v358 = vpack.c.b16 %v314, %v310
    %v359 = vpack.c.b16 %v315, %v311
    %v360 = vpack.c.b16 %v316, %v312
    %v361 = vpack.c.b16 %v321, %v317
    %v362 = vpack.c.b16 %v322, %v318
    %v363 = vpack.c.b16 %v323, %v319
    %v364 = vpack.c.b16 %v324, %v320
    %v365 = vpack.c.b16 %v329, %v325
    %v366 = vpack.c.b16 %v330, %v326
    %v367 = vpack.c.b16 %v331, %v327
    %v368 = vpack.c.b16 %v332, %v328
    %v369 = vpack.c.b16 %v337, %v333
    %v370 = vpack.c.b16 %v338, %v334
    %v371 = vpack.c.b16 %v339, %v335
    %v372 = vpack.c.b16 %v340, %v336
    %405 = vmatprep.subr.bf16.mxu0 %v342
    %406 = vmatpush1.bf16.msra.mxu0 %v341
    %407 = vmatprep.subr.bf16.mxu0 %v346
    %408 = vmatpush1.bf16.msra.mxu0 %v345
    %409 = vmatprep.subr.bf16.mxu0 %v350
    %410 = vmatpush1.bf16.msra.mxu0 %v349
    %411 = vmatprep.subr.bf16.mxu0 %v354
    %412 = vmatpush1.bf16.msra.mxu0 %v353
    %413 = vmatprep.subr.bf16.mxu0 %v358
    %414 = vmatpush1.bf16.msra.mxu0 %v357
    %415 = vmatprep.subr.bf16.mxu0 %v362
    %416 = vmatpush1.bf16.msra.mxu0 %v361
    %417 = vmatprep.subr.bf16.mxu0 %v366
    %418 = vmatpush1.bf16.msra.mxu0 %v365
    %419 = vmatprep.subr.bf16.mxu0 %v370
    %420 = vmatpush1.bf16.msra.mxu0 %v369
    %421 = vmatprep.subr.bf16.mxu0 0
    %422 = vmatpush1.bf16.msra.mxu0 0
    %423 = vmatprep.subr.bf16.mxu0 0
    %424 = vmatpush1.bf16.msra.mxu0 0
    %425 = vmatprep.subr.bf16.mxu0 0
    %426 = vmatpush1.bf16.msra.mxu0 0
    %427 = vmatprep.subr.bf16.mxu0 0
    %428 = vmatpush1.bf16.msra.mxu0 0
    %429 = vmatprep.subr.bf16.mxu0 0
    %430 = vmatpush1.bf16.msra.mxu0 0
    %431 = vmatprep.subr.bf16.mxu0 0
    %432 = vmatpush1.bf16.msra.mxu0 0
    %433 = vmatprep.subr.bf16.mxu0 0
    %434 = vmatpush1.bf16.msra.mxu0 0
    %435 = vmatprep.subr.bf16.mxu0 0
    %436 = vmatpush1.bf16.msra.mxu0 0
    %437 = vmatprep.mubr.bf16.mxu0 0
    %438 = vmatmul.mubr.bf16.gmra.mrb[0].mxu0 0
    %v439 = vpop.f32.mrb[0].mxu0
    %v440 = vadd.f32 0.0, %v439
    %v441 = vpop.f32.mrb[0].mxu0
    %v442 = vadd.f32 0.0, %v441
    %v443 = vpop.f32.mrb[0].mxu0
    %v444 = vpop.f32.mrb[0].mxu0
    %445 = vdwg.mxu0
    %446 = vmatprep.subr.bf16.mxu0 %v344
    %447 = vmatpush1.bf16.msra.mxu0 %v343
    %448 = vmatprep.subr.bf16.mxu0 %v348
    %449 = vmatpush1.bf16.msra.mxu0 %v347
    %450 = vmatprep.subr.bf16.mxu0 %v352
    %451 = vmatpush1.bf16.msra.mxu0 %v351
    %452 = vmatprep.subr.bf16.mxu0 %v356
    %453 = vmatpush1.bf16.msra.mxu0 %v355
    %454 = vmatprep.subr.bf16.mxu0 %v360
    %455 = vmatpush1.bf16.msra.mxu0 %v359
    %456 = vmatprep.subr.bf16.mxu0 %v364
    %457 = vmatpush1.bf16.msra.mxu0 %v363
    %458 = vmatprep.subr.bf16.mxu0 %v368
    %459 = vmatpush1.bf16.msra.mxu0 %v367
    %460 = vmatprep.subr.bf16.mxu0 %v372
    %461 = vmatpush1.bf16.msra.mxu0 %v371
    %462 = vmatprep.subr.bf16.mxu0 0
    %463 = vmatpush1.bf16.msra.mxu0 0
    %464 = vmatprep.subr.bf16.mxu0 0
    %465 = vmatpush1.bf16.msra.mxu0 0
    %466 = vmatprep.subr.bf16.mxu0 0
    %467 = vmatpush1.bf16.msra.mxu0 0
    %468 = vmatprep.subr.bf16.mxu0 0
    %469 = vmatpush1.bf16.msra.mxu0 0
    %470 = vmatprep.subr.bf16.mxu0 0
    %471 = vmatpush1.bf16.msra.mxu0 0
    %472 = vmatprep.subr.bf16.mxu0 0
    %473 = vmatpush1.bf16.msra.mxu0 0
    %474 = vmatprep.subr.bf16.mxu0 0
    %475 = vmatpush1.bf16.msra.mxu0 0
    %476 = vmatprep.subr.bf16.mxu0 0
    %477 = vmatpush1.bf16.msra.mxu0 0
    %478 = vmatprep.mubr.bf16.mxu0 0
    %479 = vmatmul.mubr.bf16.gmra.mrb[0].mxu0 0
    %v480 = vpop.f32.mrb[0].mxu0
    %v481 = vadd.f32 0.0, %v480
    %v482 = vpop.f32.mrb[0].mxu0
    %v483 = vadd.f32 0.0, %v482
    %v484 = vpop.f32.mrb[0].mxu0
    %v485 = vpop.f32.mrb[0].mxu0
    %486 = vdwg.mxu0
    %v487 = vadd.f32 %v209, %v440
    %v488 = vadd.f32 %v210, %v442
    %v489 = vadd.f32 %v211, %v481
    %v490 = vadd.f32 %v212, %v483
    %v491 = vmul.f32 %v487, 0.5
    %v492 = vmul.f32 %v488, 0.5
    %v493 = vmul.f32 %v489, 0.5
    %v494 = vtanh.pop %v491
    %v495 = vtanh.pop %v492
    %v496 = vtanh.pop %v493
    %v497 = vmul.f32 %v494, 0.5
    %v498 = vmul.f32 %v495, 0.5
    %v499 = vmul.f32 %v496, 0.5
    %v500 = vadd.f32 %v497, 0.5
    %v501 = vadd.f32 %v498, 0.5
    %v502 = vadd.f32 %v499, 0.5
    %v503 = vtanh.pop %v490
    %v504 = vmul.f32 %v501, 0.0
    %v505 = vmul.f32 %v500, %v503
    %v506 = vadd.f32 %v504, %v505
    %v507 = vtanh.pop %v506
    %v508 = vmul.f32 %v502, %v507
    %509 = vst [vmem:[#allocation3] sm:$0xf] %v508
    %v510 = vld [vmem:[#allocation2] sm:$0xf0]
    %v511 = vld [vmem:[#allocation2 + $0x8] sm:$0xf0]
    %v512 = vld [vmem:[#allocation2 + $0x10] sm:$0xf0]
    %v513 = vld [vmem:[#allocation2 + $0x18] sm:$0xf0]
    %v514 = vpack.c.bf16 %v508, %v508
    %v515 = vld [vmem:[%s2] sm:$0xff]
    %v516 = vld [vmem:[%s2 + $0x8] sm:$0xff]
    %v517 = vld [vmem:[%s2 + $0x10] sm:$0xff]
    %v518 = vld [vmem:[%s2 + $0x18] sm:$0xff]
    %v519 = vld [vmem:[%s2 + $0x20] sm:$0xff]
    %v520 = vld [vmem:[%s2 + $0x28] sm:$0xff]
    %v521 = vld [vmem:[%s2 + $0x30] sm:$0xff]
    %v522 = vld [vmem:[%s2 + $0x38] sm:$0xff]
    %v523 = vld [vmem:[%s2 + $0x40] sm:$0xff]
    %v524 = vld [vmem:[%s2 + $0x48] sm:$0xff]
    %v525 = vld [vmem:[%s2 + $0x50] sm:$0xff]
    %v526 = vld [vmem:[%s2 + $0x58] sm:$0xff]
    %v527 = vld [vmem:[%s2 + $0x60] sm:$0xff]
    %v528 = vld [vmem:[%s2 + $0x68] sm:$0xff]
    %v529 = vld [vmem:[%s2 + $0x70] sm:$0xff]
    %v530 = vld [vmem:[%s2 + $0x78] sm:$0xff]
    %v531 = vld [vmem:[%s2 + $0x80] sm:$0xff]
    %v532 = vld [vmem:[%s2 + $0x88] sm:$0xff]
    %v533 = vld [vmem:[%s2 + $0x90] sm:$0xff]
    %v534 = vld [vmem:[%s2 + $0x98] sm:$0xff]
    %v535 = vld [vmem:[%s2 + $0xa0] sm:$0xff]
    %v536 = vld [vmem:[%s2 + $0xa8] sm:$0xff]
    %v537 = vld [vmem:[%s2 + $0xb0] sm:$0xff]
    %v538 = vld [vmem:[%s2 + $0xb8] sm:$0xff]
    %v539 = vld [vmem:[%s2 + $0xc0] sm:$0xff]
    %v540 = vld [vmem:[%s2 + $0xc8] sm:$0xff]
    %v541 = vld [vmem:[%s2 + $0xd0] sm:$0xff]
    %v542 = vld [vmem:[%s2 + $0xd8] sm:$0xff]
    %v543 = vld [vmem:[%s2 + $0xe0] sm:$0xff]
    %v544 = vld [vmem:[%s2 + $0xe8] sm:$0xff]
    %v545 = vld [vmem:[%s2 + $0xf0] sm:$0xff]
    %v546 = vld [vmem:[%s2 + $0xf8] sm:$0xff]
    %v579 = vunpack.c.l.b16 %v515
    %v580 = vunpack.c.h.b16 %v515
    %v581 = vunpack.c.l.b16 %v516
    %v582 = vunpack.c.h.b16 %v516
    %v583 = vunpack.c.l.b16 %v517
    %v584 = vunpack.c.h.b16 %v517
    %v585 = vunpack.c.l.b16 %v518
    %v586 = vunpack.c.h.b16 %v518
    %v587 = vunpack.c.l.b16 %v519
    %v588 = vunpack.c.h.b16 %v519
    %v589 = vunpack.c.l.b16 %v520
    %v590 = vunpack.c.h.b16 %v520
    %v591 = vunpack.c.l.b16 %v521
    %v592 = vunpack.c.h.b16 %v521
    %v593 = vunpack.c.l.b16 %v522
    %v594 = vunpack.c.h.b16 %v522
    %v595 = vunpack.c.l.b16 %v523
    %v596 = vunpack.c.h.b16 %v523
    %v597 = vunpack.c.l.b16 %v524
    %v598 = vunpack.c.h.b16 %v524
    %v599 = vunpack.c.l.b16 %v525
    %v600 = vunpack.c.h.b16 %v525
    %v601 = vunpack.c.l.b16 %v526
    %v602 = vunpack.c.h.b16 %v526
    %v603 = vunpack.c.l.b16 %v527
    %v604 = vunpack.c.h.b16 %v527
    %v605 = vunpack.c.l.b16 %v528
    %v606 = vunpack.c.h.b16 %v528
    %v607 = vunpack.c.l.b16 %v529
    %v608 = vunpack.c.h.b16 %v529
    %v609 = vunpack.c.l.b16 %v530
    %v610 = vunpack.c.h.b16 %v530
    %v611 = vunpack.c.l.b16 %v531
    %v612 = vunpack.c.h.b16 %v531
    %v613 = vunpack.c.l.b16 %v532
    %v614 = vunpack.c.h.b16 %v532
    %v615 = vunpack.c.l.b16 %v533
    %v616 = vunpack.c.h.b16 %v533
    %v617 = vunpack.c.l.b16 %v534
    %v618 = vunpack.c.h.b16 %v534
    %v619 = vunpack.c.l.b16 %v535
    %v620 = vunpack.c.h.b16 %v535
    %v621 = vunpack.c.l.b16 %v536
    %v622 = vunpack.c.h.b16 %v536
    %v623 = vunpack.c.l.b16 %v537
    %v624 = vunpack.c.h.b16 %v537
    %v625 = vunpack.c.l.b16 %v538
    %v626 = vunpack.c.h.b16 %v538
    %v627 = vunpack.c.l.b16 %v539
    %v628 = vunpack.c.h.b16 %v539
    %v629 = vunpack.c.l.b16 %v540
    %v630 = vunpack.c.h.b16 %v540
    %v631 = vunpack.c.l.b16 %v541
    %v632 = vunpack.c.h.b16 %v541
    %v633 = vunpack.c.l.b16 %v542
    %v634 = vunpack.c.h.b16 %v542
    %v635 = vunpack.c.l.b16 %v543
    %v636 = vunpack.c.h.b16 %v543
    %v637 = vunpack.c.l.b16 %v544
    %v638 = vunpack.c.h.b16 %v544
    %v639 = vunpack.c.l.b16 %v545
    %v640 = vunpack.c.h.b16 %v545
    %v641 = vunpack.c.l.b16 %v546
    %v642 = vunpack.c.h.b16 %v546
    %v643 = vpack.c.b16 %v583, %v579
    %v644 = vpack.c.b16 %v584, %v580
    %v645 = vpack.c.b16 %v585, %v581
    %v646 = vpack.c.b16 %v586, %v582
    %v647 = vpack.c.b16 %v591, %v587
    %v648 = vpack.c.b16 %v592, %v588
    %v649 = vpack.c.b16 %v593, %v589
    %v650 = vpack.c.b16 %v594, %v590
    %v651 = vpack.c.b16 %v599, %v595
    %v652 = vpack.c.b16 %v600, %v596
    %v653 = vpack.c.b16 %v601, %v597
    %v654 = vpack.c.b16 %v602, %v598
    %v655 = vpack.c.b16 %v607, %v603
    %v656 = vpack.c.b16 %v608, %v604
    %v657 = vpack.c.b16 %v609, %v605
    %v658 = vpack.c.b16 %v610, %v606
    %v659 = vpack.c.b16 %v615, %v611
    %v660 = vpack.c.b16 %v616, %v612
    %v661 = vpack.c.b16 %v617, %v613
    %v662 = vpack.c.b16 %v618, %v614
    %v663 = vpack.c.b16 %v623, %v619
    %v664 = vpack.c.b16 %v624, %v620
    %v665 = vpack.c.b16 %v625, %v621
    %v666 = vpack.c.b16 %v626, %v622
    %v667 = vpack.c.b16 %v631, %v627
    %v668 = vpack.c.b16 %v632, %v628
    %v669 = vpack.c.b16 %v633, %v629
    %v670 = vpack.c.b16 %v634, %v630
    %v671 = vpack.c.b16 %v639, %v635
    %v672 = vpack.c.b16 %v640, %v636
    %v673 = vpack.c.b16 %v641, %v637
    %v674 = vpack.c.b16 %v642, %v638
    %707 = vmatprep.subr.bf16.mxu0 %v644
    %708 = vmatpush1.bf16.msra.mxu0 %v643
    %709 = vmatprep.subr.bf16.mxu0 %v648
    %710 = vmatpush1.bf16.msra.mxu0 %v647
    %711 = vmatprep.subr.bf16.mxu0 %v652
    %712 = vmatpush1.bf16.msra.mxu0 %v651
    %713 = vmatprep.subr.bf16.mxu0 %v656
    %714 = vmatpush1.bf16.msra.mxu0 %v655
    %715 = vmatprep.subr.bf16.mxu0 %v660
    %716 = vmatpush1.bf16.msra.mxu0 %v659
    %717 = vmatprep.subr.bf16.mxu0 %v664
    %718 = vmatpush1.bf16.msra.mxu0 %v663
    %719 = vmatprep.subr.bf16.mxu0 %v668
    %720 = vmatpush1.bf16.msra.mxu0 %v667
    %721 = vmatprep.subr.bf16.mxu0 %v672
    %722 = vmatpush1.bf16.msra.mxu0 %v671
    %723 = vmatprep.subr.bf16.mxu0 0
    %724 = vmatpush1.bf16.msra.mxu0 0
    %725 = vmatprep.subr.bf16.mxu0 0
    %726 = vmatpush1.bf16.msra.mxu0 0
    %727 = vmatprep.subr.bf16.mxu0 0
    %728 = vmatpush1.bf16.msra.mxu0 0
    %729 = vmatprep.subr.bf16.mxu0 0
    %730 = vmatpush1.bf16.msra.mxu0 0
    %731 = vmatprep.subr.bf16.mxu0 0
    %732 = vmatpush1.bf16.msra.mxu0 0
    %733 = vmatprep.subr.bf16.mxu0 0
    %734 = vmatpush1.bf16.msra.mxu0 0
    %735 = vmatprep.subr.bf16.mxu0 0
    %736 = vmatpush1.bf16.msra.mxu0 0
    %737 = vmatprep.subr.bf16.mxu0 0
    %738 = vmatpush1.bf16.msra.mxu0 0
    %739 = vmatprep.mubr.bf16.mxu0 0
    %740 = vmatmul.mubr.bf16.gmra.mrb[0].mxu0 %v514
    %v741 = vpop.f32.mrb[0].mxu0
    %v742 = vadd.f32 0.0, %v741
    %v743 = vpop.f32.mrb[0].mxu0
    %v744 = vadd.f32 0.0, %v743
    %v745 = vpop.f32.mrb[0].mxu0
    %v746 = vpop.f32.mrb[0].mxu0
    %747 = vdwg.mxu0
    %748 = vmatprep.subr.bf16.mxu0 %v646
    %749 = vmatpush1.bf16.msra.mxu0 %v645
    %750 = vmatprep.subr.bf16.mxu0 %v650
    %751 = vmatpush1.bf16.msra.mxu0 %v649
    %752 = vmatprep.subr.bf16.mxu0 %v654
    %753 = vmatpush1.bf16.msra.mxu0 %v653
    %754 = vmatprep.subr.bf16.mxu0 %v658
    %755 = vmatpush1.bf16.msra.mxu0 %v657
    %756 = vmatprep.subr.bf16.mxu0 %v662
    %757 = vmatpush1.bf16.msra.mxu0 %v661
    %758 = vmatprep.subr.bf16.mxu0 %v666
    %759 = vmatpush1.bf16.msra.mxu0 %v665
    %760 = vmatprep.subr.bf16.mxu0 %v670
    %761 = vmatpush1.bf16.msra.mxu0 %v669
    %762 = vmatprep.subr.bf16.mxu0 %v674
    %763 = vmatpush1.bf16.msra.mxu0 %v673
    %764 = vmatprep.subr.bf16.mxu0 0
    %765 = vmatpush1.bf16.msra.mxu0 0
    %766 = vmatprep.subr.bf16.mxu0 0
    %767 = vmatpush1.bf16.msra.mxu0 0
    %768 = vmatprep.subr.bf16.mxu0 0
    %769 = vmatpush1.bf16.msra.mxu0 0
    %770 = vmatprep.subr.bf16.mxu0 0
    %771 = vmatpush1.bf16.msra.mxu0 0
    %772 = vmatprep.subr.bf16.mxu0 0
    %773 = vmatpush1.bf16.msra.mxu0 0
    %774 = vmatprep.subr.bf16.mxu0 0
    %775 = vmatpush1.bf16.msra.mxu0 0
    %776 = vmatprep.subr.bf16.mxu0 0
    %777 = vmatpush1.bf16.msra.mxu0 0
    %778 = vmatprep.subr.bf16.mxu0 0
    %779 = vmatpush1.bf16.msra.mxu0 0
    %780 = vmatprep.mubr.bf16.mxu0 0
    %781 = vmatmul.mubr.bf16.gmra.mrb[0].mxu0 %v514
    %v782 = vpop.f32.mrb[0].mxu0
    %v783 = vadd.f32 0.0, %v782
    %v784 = vpop.f32.mrb[0].mxu0
    %v785 = vadd.f32 0.0, %v784
    %v786 = vpop.f32.mrb[0].mxu0
    %v787 = vpop.f32.mrb[0].mxu0
    %788 = vdwg.mxu0
    %v793 = vrot.slane %v742, 4
    %v794 = vrot.slane %v744, 4
    %v795 = vrot.slane %v783, 4
    %v796 = vrot.slane %v785, 4
    %v801 = vadd.f32 %v510, %v793
    %v802 = vadd.f32 %v511, %v794
    %v803 = vadd.f32 %v512, %v795
    %v804 = vadd.f32 %v513, %v796
    %v805 = vmul.f32 %v801, 0.5
    %v806 = vmul.f32 %v802, 0.5
    %v807 = vmul.f32 %v803, 0.5
    %v808 = vtanh.pop %v805
    %v809 = vtanh.pop %v806
    %v810 = vtanh.pop %v807
    %v811 = vmul.f32 %v808, 0.5
    %v812 = vmul.f32 %v809, 0.5
    %v813 = vmul.f32 %v810, 0.5
    %v814 = vadd.f32 %v811, 0.5
    %v815 = vadd.f32 %v812, 0.5
    %v816 = vadd.f32 %v813, 0.5
    %v817 = vtanh.pop %v804
    %v819 = vrot.slane %v506, 4
    %v821 = vmul.f32 %v815, %v819
    %v822 = vmul.f32 %v814, %v817
    %v823 = vadd.f32 %v821, %v822
    %v824 = vtanh.pop %v823
    %v825 = vmul.f32 %v816, %v824
    %v827 = vcombine.high %v825, %v825
    %829 = vst [vmem:[#allocation3 + $0x4] sm:$0xf] %v827
    %v830 = vld [vmem:[#allocation2 + $0x20] sm:$0xf]
    %v831 = vld [vmem:[#allocation2 + $0x28] sm:$0xf]
    %v832 = vld [vmem:[#allocation2 + $0x30] sm:$0xf]
    %v833 = vld [vmem:[#allocation2 + $0x38] sm:$0xf]
    %v834 = vpack.c.bf16 %v825, %v825
    %v835 = vld [vmem:[%s2] sm:$0xff]
    %v836 = vld [vmem:[%s2 + $0x8] sm:$0xff]
    %v837 = vld [vmem:[%s2 + $0x10] sm:$0xff]
    %v838 = vld [vmem:[%s2 + $0x18] sm:$0xff]
    %v839 = vld [vmem:[%s2 + $0x20] sm:$0xff]
    %v840 = vld [vmem:[%s2 + $0x28] sm:$0xff]
    %v841 = vld [vmem:[%s2 + $0x30] sm:$0xff]
    %v842 = vld [vmem:[%s2 + $0x38] sm:$0xff]
    %v843 = vld [vmem:[%s2 + $0x40] sm:$0xff]
    %v844 = vld [vmem:[%s2 + $0x48] sm:$0xff]
    %v845 = vld [vmem:[%s2 + $0x50] sm:$0xff]
    %v846 = vld [vmem:[%s2 + $0x58] sm:$0xff]
    %v847 = vld [vmem:[%s2 + $0x60] sm:$0xff]
    %v848 = vld [vmem:[%s2 + $0x68] sm:$0xff]
    %v849 = vld [vmem:[%s2 + $0x70] sm:$0xff]
    %v850 = vld [vmem:[%s2 + $0x78] sm:$0xff]
    %v851 = vld [vmem:[%s2 + $0x80] sm:$0xff]
    %v852 = vld [vmem:[%s2 + $0x88] sm:$0xff]
    %v853 = vld [vmem:[%s2 + $0x90] sm:$0xff]
    %v854 = vld [vmem:[%s2 + $0x98] sm:$0xff]
    %v855 = vld [vmem:[%s2 + $0xa0] sm:$0xff]
    %v856 = vld [vmem:[%s2 + $0xa8] sm:$0xff]
    %v857 = vld [vmem:[%s2 + $0xb0] sm:$0xff]
    %v858 = vld [vmem:[%s2 + $0xb8] sm:$0xff]
    %v859 = vld [vmem:[%s2 + $0xc0] sm:$0xff]
    %v860 = vld [vmem:[%s2 + $0xc8] sm:$0xff]
    %v861 = vld [vmem:[%s2 + $0xd0] sm:$0xff]
    %v862 = vld [vmem:[%s2 + $0xd8] sm:$0xff]
    %v863 = vld [vmem:[%s2 + $0xe0] sm:$0xff]
    %v864 = vld [vmem:[%s2 + $0xe8] sm:$0xff]
    %v865 = vld [vmem:[%s2 + $0xf0] sm:$0xff]
    %v866 = vld [vmem:[%s2 + $0xf8] sm:$0xff]
    %v868 = vrot.slane %v834, 2
    %v902 = vunpack.c.l.b16 %v835
    %v903 = vunpack.c.h.b16 %v835
    %v904 = vunpack.c.l.b16 %v836
    %v905 = vunpack.c.h.b16 %v836
    %v906 = vunpack.c.l.b16 %v837
    %v907 = vunpack.c.h.b16 %v837
    %v908 = vunpack.c.l.b16 %v838
    %v909 = vunpack.c.h.b16 %v838
    %v910 = vunpack.c.l.b16 %v839
    %v911 = vunpack.c.h.b16 %v839
    %v912 = vunpack.c.l.b16 %v840
    %v913 = vunpack.c.h.b16 %v840
    %v914 = vunpack.c.l.b16 %v841
    %v915 = vunpack.c.h.b16 %v841
    %v916 = vunpack.c.l.b16 %v842
    %v917 = vunpack.c.h.b16 %v842
    %v918 = vunpack.c.l.b16 %v843
    %v919 = vunpack.c.h.b16 %v843
    %v920 = vunpack.c.l.b16 %v844
    %v921 = vunpack.c.h.b16 %v844
    %v922 = vunpack.c.l.b16 %v845
    %v923 = vunpack.c.h.b16 %v845
    %v924 = vunpack.c.l.b16 %v846
    %v925 = vunpack.c.h.b16 %v846
    %v926 = vunpack.c.l.b16 %v847
    %v927 = vunpack.c.h.b16 %v847
    %v928 = vunpack.c.l.b16 %v848
    %v929 = vunpack.c.h.b16 %v848
    %v930 = vunpack.c.l.b16 %v849
    %v931 = vunpack.c.h.b16 %v849
    %v932 = vunpack.c.l.b16 %v850
    %v933 = vunpack.c.h.b16 %v850
    %v934 = vunpack.c.l.b16 %v851
    %v935 = vunpack.c.h.b16 %v851
    %v936 = vunpack.c.l.b16 %v852
    %v937 = vunpack.c.h.b16 %v852
    %v938 = vunpack.c.l.b16 %v853
    %v939 = vunpack.c.h.b16 %v853
    %v940 = vunpack.c.l.b16 %v854
    %v941 = vunpack.c.h.b16 %v854
    %v942 = vunpack.c.l.b16 %v855
    %v943 = vunpack.c.h.b16 %v855
    %v944 = vunpack.c.l.b16 %v856
    %v945 = vunpack.c.h.b16 %v856
    %v946 = vunpack.c.l.b16 %v857
    %v947 = vunpack.c.h.b16 %v857
    %v948 = vunpack.c.l.b16 %v858
    %v949 = vunpack.c.h.b16 %v858
    %v950 = vunpack.c.l.b16 %v859
    %v951 = vunpack.c.h.b16 %v859
    %v952 = vunpack.c.l.b16 %v860
    %v953 = vunpack.c.h.b16 %v860
    %v954 = vunpack.c.l.b16 %v861
    %v955 = vunpack.c.h.b16 %v861
    %v956 = vunpack.c.l.b16 %v862
    %v957 = vunpack.c.h.b16 %v862
    %v958 = vunpack.c.l.b16 %v863
    %v959 = vunpack.c.h.b16 %v863
    %v960 = vunpack.c.l.b16 %v864
    %v961 = vunpack.c.h.b16 %v864
    %v962 = vunpack.c.l.b16 %v865
    %v963 = vunpack.c.h.b16 %v865
    %v964 = vunpack.c.l.b16 %v866
    %v965 = vunpack.c.h.b16 %v866
    %v966 = vpack.c.b16 %v906, %v902
    %v967 = vpack.c.b16 %v907, %v903
    %v968 = vpack.c.b16 %v908, %v904
    %v969 = vpack.c.b16 %v909, %v905
    %v970 = vpack.c.b16 %v914, %v910
    %v971 = vpack.c.b16 %v915, %v911
    %v972 = vpack.c.b16 %v916, %v912
    %v973 = vpack.c.b16 %v917, %v913
    %v974 = vpack.c.b16 %v922, %v918
    %v975 = vpack.c.b16 %v923, %v919
    %v976 = vpack.c.b16 %v924, %v920
    %v977 = vpack.c.b16 %v925, %v921
    %v978 = vpack.c.b16 %v930, %v926
    %v979 = vpack.c.b16 %v931, %v927
    %v980 = vpack.c.b16 %v932, %v928
    %v981 = vpack.c.b16 %v933, %v929
    %v982 = vpack.c.b16 %v938, %v934
    %v983 = vpack.c.b16 %v939, %v935
    %v984 = vpack.c.b16 %v940, %v936
    %v985 = vpack.c.b16 %v941, %v937
    %v986 = vpack.c.b16 %v946, %v942
    %v987 = vpack.c.b16 %v947, %v943
    %v988 = vpack.c.b16 %v948, %v944
    %v989 = vpack.c.b16 %v949, %v945
    %v990 = vpack.c.b16 %v954, %v950
    %v991 = vpack.c.b16 %v955, %v951
    %v992 = vpack.c.b16 %v956, %v952
    %v993 = vpack.c.b16 %v957, %v953
    %v994 = vpack.c.b16 %v962, %v958
    %v995 = vpack.c.b16 %v963, %v959
    %v996 = vpack.c.b16 %v964, %v960
    %v997 = vpack.c.b16 %v965, %v961
    %1030 = vmatprep.subr.bf16.mxu0 %v967
    %1031 = vmatpush1.bf16.msra.mxu0 %v966
    %1032 = vmatprep.subr.bf16.mxu0 %v971
    %1033 = vmatpush1.bf16.msra.mxu0 %v970
    %1034 = vmatprep.subr.bf16.mxu0 %v975
    %1035 = vmatpush1.bf16.msra.mxu0 %v974
    %1036 = vmatprep.subr.bf16.mxu0 %v979
    %1037 = vmatpush1.bf16.msra.mxu0 %v978
    %1038 = vmatprep.subr.bf16.mxu0 %v983
    %1039 = vmatpush1.bf16.msra.mxu0 %v982
    %1040 = vmatprep.subr.bf16.mxu0 %v987
    %1041 = vmatpush1.bf16.msra.mxu0 %v986
    %1042 = vmatprep.subr.bf16.mxu0 %v991
    %1043 = vmatpush1.bf16.msra.mxu0 %v990
    %1044 = vmatprep.subr.bf16.mxu0 %v995
    %1045 = vmatpush1.bf16.msra.mxu0 %v994
    %1046 = vmatprep.subr.bf16.mxu0 0
    %1047 = vmatpush1.bf16.msra.mxu0 0
    %1048 = vmatprep.subr.bf16.mxu0 0
    %1049 = vmatpush1.bf16.msra.mxu0 0
    %1050 = vmatprep.subr.bf16.mxu0 0
    %1051 = vmatpush1.bf16.msra.mxu0 0
    %1052 = vmatprep.subr.bf16.mxu0 0
    %1053 = vmatpush1.bf16.msra.mxu0 0
    %1054 = vmatprep.subr.bf16.mxu0 0
    %1055 = vmatpush1.bf16.msra.mxu0 0
    %1056 = vmatprep.subr.bf16.mxu0 0
    %1057 = vmatpush1.bf16.msra.mxu0 0
    %1058 = vmatprep.subr.bf16.mxu0 0
    %1059 = vmatpush1.bf16.msra.mxu0 0
    %1060 = vmatprep.subr.bf16.mxu0 0
    %1061 = vmatpush1.bf16.msra.mxu0 0
    %1062 = vmatprep.mubr.bf16.mxu0 0
    %1063 = vmatmul.mubr.bf16.gmra.mrb[0].mxu0 %v868
    %v1064 = vpop.f32.mrb[0].mxu0
    %v1065 = vadd.f32 0.0, %v1064
    %v1066 = vpop.f32.mrb[0].mxu0
    %v1067 = vadd.f32 0.0, %v1066
    %v1068 = vpop.f32.mrb[0].mxu0
    %v1069 = vpop.f32.mrb[0].mxu0
    %1070 = vdwg.mxu0
    %1071 = vmatprep.subr.bf16.mxu0 %v969
    %1072 = vmatpush1.bf16.msra.mxu0 %v968
    %1073 = vmatprep.subr.bf16.mxu0 %v973
    %1074 = vmatpush1.bf16.msra.mxu0 %v972
    %1075 = vmatprep.subr.bf16.mxu0 %v977
    %1076 = vmatpush1.bf16.msra.mxu0 %v976
    %1077 = vmatprep.subr.bf16.mxu0 %v981
    %1078 = vmatpush1.bf16.msra.mxu0 %v980
    %1079 = vmatprep.subr.bf16.mxu0 %v985
    %1080 = vmatpush1.bf16.msra.mxu0 %v984
    %1081 = vmatprep.subr.bf16.mxu0 %v989
    %1082 = vmatpush1.bf16.msra.mxu0 %v988
    %1083 = vmatprep.subr.bf16.mxu0 %v993
    %1084 = vmatpush1.bf16.msra.mxu0 %v992
    %1085 = vmatprep.subr.bf16.mxu0 %v997
    %1086 = vmatpush1.bf16.msra.mxu0 %v996
    %1087 = vmatprep.subr.bf16.mxu0 0
    %1088 = vmatpush1.bf16.msra.mxu0 0
    %1089 = vmatprep.subr.bf16.mxu0 0
    %1090 = vmatpush1.bf16.msra.mxu0 0
    %1091 = vmatprep.subr.bf16.mxu0 0
    %1092 = vmatpush1.bf16.msra.mxu0 0
    %1093 = vmatprep.subr.bf16.mxu0 0
    %1094 = vmatpush1.bf16.msra.mxu0 0
    %1095 = vmatprep.subr.bf16.mxu0 0
    %1096 = vmatpush1.bf16.msra.mxu0 0
    %1097 = vmatprep.subr.bf16.mxu0 0
    %1098 = vmatpush1.bf16.msra.mxu0 0
    %1099 = vmatprep.subr.bf16.mxu0 0
    %1100 = vmatpush1.bf16.msra.mxu0 0
    %1101 = vmatprep.subr.bf16.mxu0 0
    %1102 = vmatpush1.bf16.msra.mxu0 0
    %1103 = vmatprep.mubr.bf16.mxu0 0
    %1104 = vmatmul.mubr.bf16.gmra.mrb[0].mxu0 %v868
    %v1105 = vpop.f32.mrb[0].mxu0
    %v1106 = vadd.f32 0.0, %v1105
    %v1107 = vpop.f32.mrb[0].mxu0
    %v1108 = vadd.f32 0.0, %v1107
    %v1109 = vpop.f32.mrb[0].mxu0
    %v1110 = vpop.f32.mrb[0].mxu0
    %1111 = vdwg.mxu0
    %v1112 = vadd.f32 %v830, %v1065
    %v1113 = vadd.f32 %v831, %v1067
    %v1114 = vadd.f32 %v832, %v1106
    %v1115 = vadd.f32 %v833, %v1108
    %v1116 = vmul.f32 %v1112, 0.5
    %v1117 = vmul.f32 %v1113, 0.5
    %v1118 = vmul.f32 %v1114, 0.5
    %v1119 = vtanh.pop %v1116
    %v1120 = vtanh.pop %v1117
    %v1121 = vtanh.pop %v1118
    %v1122 = vmul.f32 %v1119, 0.5
    %v1123 = vmul.f32 %v1120, 0.5
    %v1124 = vmul.f32 %v1121, 0.5
    %v1125 = vadd.f32 %v1122, 0.5
    %v1126 = vadd.f32 %v1123, 0.5
    %v1127 = vadd.f32 %v1124, 0.5
    %v1128 = vtanh.pop %v1115
    %v1130 = vrot.slane %v823, 4
    %v1132 = vmul.f32 %v1126, %v1130
    %v1133 = vmul.f32 %v1125, %v1128
    %v1134 = vadd.f32 %v1132, %v1133
    %v1135 = vtanh.pop %v1134
    %v1136 = vmul.f32 %v1127, %v1135
    %1137 = vst [vmem:[#allocation3 + $0x8] sm:$0xf] %v1136
    %v1138 = vld [vmem:[#allocation2 + $0x20] sm:$0xf0]
    %v1139 = vld [vmem:[#allocation2 + $0x28] sm:$0xf0]
    %v1140 = vld [vmem:[#allocation2 + $0x30] sm:$0xf0]
    %v1141 = vld [vmem:[#allocation2 + $0x38] sm:$0xf0]
    %v1142 = vpack.c.bf16 %v1136, %v1136
    %v1143 = vld [vmem:[%s2] sm:$0xff]
    %v1144 = vld [vmem:[%s2 + $0x8] sm:$0xff]
    %v1145 = vld [vmem:[%s2 + $0x10] sm:$0xff]
    %v1146 = vld [vmem:[%s2 + $0x18] sm:$0xff]
    %v1147 = vld [vmem:[%s2 + $0x20] sm:$0xff]
    %v1148 = vld [vmem:[%s2 + $0x28] sm:$0xff]
    %v1149 = vld [vmem:[%s2 + $0x30] sm:$0xff]
    %v1150 = vld [vmem:[%s2 + $0x38] sm:$0xff]
    %v1151 = vld [vmem:[%s2 + $0x40] sm:$0xff]
    %v1152 = vld [vmem:[%s2 + $0x48] sm:$0xff]
    %v1153 = vld [vmem:[%s2 + $0x50] sm:$0xff]
    %v1154 = vld [vmem:[%s2 + $0x58] sm:$0xff]
    %v1155 = vld [vmem:[%s2 + $0x60] sm:$0xff]
    %v1156 = vld [vmem:[%s2 + $0x68] sm:$0xff]
    %v1157 = vld [vmem:[%s2 + $0x70] sm:$0xff]
    %v1158 = vld [vmem:[%s2 + $0x78] sm:$0xff]
    %v1159 = vld [vmem:[%s2 + $0x80] sm:$0xff]
    %v1160 = vld [vmem:[%s2 + $0x88] sm:$0xff]
    %v1161 = vld [vmem:[%s2 + $0x90] sm:$0xff]
    %v1162 = vld [vmem:[%s2 + $0x98] sm:$0xff]
    %v1163 = vld [vmem:[%s2 + $0xa0] sm:$0xff]
    %v1164 = vld [vmem:[%s2 + $0xa8] sm:$0xff]
    %v1165 = vld [vmem:[%s2 + $0xb0] sm:$0xff]
    %v1166 = vld [vmem:[%s2 + $0xb8] sm:$0xff]
    %v1167 = vld [vmem:[%s2 + $0xc0] sm:$0xff]
    %v1168 = vld [vmem:[%s2 + $0xc8] sm:$0xff]
    %v1169 = vld [vmem:[%s2 + $0xd0] sm:$0xff]
    %v1170 = vld [vmem:[%s2 + $0xd8] sm:$0xff]
    %v1171 = vld [vmem:[%s2 + $0xe0] sm:$0xff]
    %v1172 = vld [vmem:[%s2 + $0xe8] sm:$0xff]
    %v1173 = vld [vmem:[%s2 + $0xf0] sm:$0xff]
    %v1174 = vld [vmem:[%s2 + $0xf8] sm:$0xff]
    %v1207 = vunpack.c.l.b16 %v1143
    %v1208 = vunpack.c.h.b16 %v1143
    %v1209 = vunpack.c.l.b16 %v1144
    %v1210 = vunpack.c.h.b16 %v1144
    %v1211 = vunpack.c.l.b16 %v1145
    %v1212 = vunpack.c.h.b16 %v1145
    %v1213 = vunpack.c.l.b16 %v1146
    %v1214 = vunpack.c.h.b16 %v1146
    %v1215 = vunpack.c.l.b16 %v1147
    %v1216 = vunpack.c.h.b16 %v1147
    %v1217 = vunpack.c.l.b16 %v1148
    %v1218 = vunpack.c.h.b16 %v1148
    %v1219 = vunpack.c.l.b16 %v1149
    %v1220 = vunpack.c.h.b16 %v1149
    %v1221 = vunpack.c.l.b16 %v1150
    %v1222 = vunpack.c.h.b16 %v1150
    %v1223 = vunpack.c.l.b16 %v1151
    %v1224 = vunpack.c.h.b16 %v1151
    %v1225 = vunpack.c.l.b16 %v1152
    %v1226 = vunpack.c.h.b16 %v1152
    %v1227 = vunpack.c.l.b16 %v1153
    %v1228 = vunpack.c.h.b16 %v1153
    %v1229 = vunpack.c.l.b16 %v1154
    %v1230 = vunpack.c.h.b16 %v1154
    %v1231 = vunpack.c.l.b16 %v1155
    %v1232 = vunpack.c.h.b16 %v1155
    %v1233 = vunpack.c.l.b16 %v1156
    %v1234 = vunpack.c.h.b16 %v1156
    %v1235 = vunpack.c.l.b16 %v1157
    %v1236 = vunpack.c.h.b16 %v1157
    %v1237 = vunpack.c.l.b16 %v1158
    %v1238 = vunpack.c.h.b16 %v1158
    %v1239 = vunpack.c.l.b16 %v1159
    %v1240 = vunpack.c.h.b16 %v1159
    %v1241 = vunpack.c.l.b16 %v1160
    %v1242 = vunpack.c.h.b16 %v1160
    %v1243 = vunpack.c.l.b16 %v1161
    %v1244 = vunpack.c.h.b16 %v1161
    %v1245 = vunpack.c.l.b16 %v1162
    %v1246 = vunpack.c.h.b16 %v1162
    %v1247 = vunpack.c.l.b16 %v1163
    %v1248 = vunpack.c.h.b16 %v1163
    %v1249 = vunpack.c.l.b16 %v1164
    %v1250 = vunpack.c.h.b16 %v1164
    %v1251 = vunpack.c.l.b16 %v1165
    %v1252 = vunpack.c.h.b16 %v1165
    %v1253 = vunpack.c.l.b16 %v1166
    %v1254 = vunpack.c.h.b16 %v1166
    %v1255 = vunpack.c.l.b16 %v1167
    %v1256 = vunpack.c.h.b16 %v1167
    %v1257 = vunpack.c.l.b16 %v1168
    %v1258 = vunpack.c.h.b16 %v1168
    %v1259 = vunpack.c.l.b16 %v1169
    %v1260 = vunpack.c.h.b16 %v1169
    %v1261 = vunpack.c.l.b16 %v1170
    %v1262 = vunpack.c.h.b16 %v1170
    %v1263 = vunpack.c.l.b16 %v1171
    %v1264 = vunpack.c.h.b16 %v1171
    %v1265 = vunpack.c.l.b16 %v1172
    %v1266 = vunpack.c.h.b16 %v1172
    %v1267 = vunpack.c.l.b16 %v1173
    %v1268 = vunpack.c.h.b16 %v1173
    %v1269 = vunpack.c.l.b16 %v1174
    %v1270 = vunpack.c.h.b16 %v1174
    %v1271 = vpack.c.b16 %v1211, %v1207
    %v1272 = vpack.c.b16 %v1212, %v1208
    %v1273 = vpack.c.b16 %v1213, %v1209
    %v1274 = vpack.c.b16 %v1214, %v1210
    %v1275 = vpack.c.b16 %v1219, %v1215
    %v1276 = vpack.c.b16 %v1220, %v1216
    %v1277 = vpack.c.b16 %v1221, %v1217
    %v1278 = vpack.c.b16 %v1222, %v1218
    %v1279 = vpack.c.b16 %v1227, %v1223
    %v1280 = vpack.c.b16 %v1228, %v1224
    %v1281 = vpack.c.b16 %v1229, %v1225
    %v1282 = vpack.c.b16 %v1230, %v1226
    %v1283 = vpack.c.b16 %v1235, %v1231
    %v1284 = vpack.c.b16 %v1236, %v1232
    %v1285 = vpack.c.b16 %v1237, %v1233
    %v1286 = vpack.c.b16 %v1238, %v1234
    %v1287 = vpack.c.b16 %v1243, %v1239
    %v1288 = vpack.c.b16 %v1244, %v1240
    %v1289 = vpack.c.b16 %v1245, %v1241
    %v1290 = vpack.c.b16 %v1246, %v1242
    %v1291 = vpack.c.b16 %v1251, %v1247
    %v1292 = vpack.c.b16 %v1252, %v1248
    %v1293 = vpack.c.b16 %v1253, %v1249
    %v1294 = vpack.c.b16 %v1254, %v1250
    %v1295 = vpack.c.b16 %v1259, %v1255
    %v1296 = vpack.c.b16 %v1260, %v1256
    %v1297 = vpack.c.b16 %v1261, %v1257
    %v1298 = vpack.c.b16 %v1262, %v1258
    %v1299 = vpack.c.b16 %v1267, %v1263
    %v1300 = vpack.c.b16 %v1268, %v1264
    %v1301 = vpack.c.b16 %v1269, %v1265
    %v1302 = vpack.c.b16 %v1270, %v1266
    %1335 = vmatprep.subr.bf16.mxu0 %v1272
    %1336 = vmatpush1.bf16.msra.mxu0 %v1271
    %1337 = vmatprep.subr.bf16.mxu0 %v1276
    %1338 = vmatpush1.bf16.msra.mxu0 %v1275
    %1339 = vmatprep.subr.bf16.mxu0 %v1280
    %1340 = vmatpush1.bf16.msra.mxu0 %v1279
    %1341 = vmatprep.subr.bf16.mxu0 %v1284
    %1342 = vmatpush1.bf16.msra.mxu0 %v1283
    %1343 = vmatprep.subr.bf16.mxu0 %v1288
    %1344 = vmatpush1.bf16.msra.mxu0 %v1287
    %1345 = vmatprep.subr.bf16.mxu0 %v1292
    %1346 = vmatpush1.bf16.msra.mxu0 %v1291
    %1347 = vmatprep.subr.bf16.mxu0 %v1296
    %1348 = vmatpush1.bf16.msra.mxu0 %v1295
    %1349 = vmatprep.subr.bf16.mxu0 %v1300
    %1350 = vmatpush1.bf16.msra.mxu0 %v1299
    %1351 = vmatprep.subr.bf16.mxu0 0
    %1352 = vmatpush1.bf16.msra.mxu0 0
    %1353 = vmatprep.subr.bf16.mxu0 0
    %1354 = vmatpush1.bf16.msra.mxu0 0
    %1355 = vmatprep.subr.bf16.mxu0 0
    %1356 = vmatpush1.bf16.msra.mxu0 0
    %1357 = vmatprep.subr.bf16.mxu0 0
    %1358 = vmatpush1.bf16.msra.mxu0 0
    %1359 = vmatprep.subr.bf16.mxu0 0
    %1360 = vmatpush1.bf16.msra.mxu0 0
    %1361 = vmatprep.subr.bf16.mxu0 0
    %1362 = vmatpush1.bf16.msra.mxu0 0
    %1363 = vmatprep.subr.bf16.mxu0 0
    %1364 = vmatpush1.bf16.msra.mxu0 0
    %1365 = vmatprep.subr.bf16.mxu0 0
    %1366 = vmatpush1.bf16.msra.mxu0 0
    %1367 = vmatprep.mubr.bf16.mxu0 0
    %1368 = vmatmul.mubr.bf16.gmra.mrb[0].mxu0 %v1142
    %v1369 = vpop.f32.mrb[0].mxu0
    %v1370 = vadd.f32 0.0, %v1369
    %v1371 = vpop.f32.mrb[0].mxu0
    %v1372 = vadd.f32 0.0, %v1371
    %v1373 = vpop.f32.mrb[0].mxu0
    %v1374 = vpop.f32.mrb[0].mxu0
    %1375 = vdwg.mxu0
    %1376 = vmatprep.subr.bf16.mxu0 %v1274
    %1377 = vmatpush1.bf16.msra.mxu0 %v1273
    %1378 = vmatprep.subr.bf16.mxu0 %v1278
    %1379 = vmatpush1.bf16.msra.mxu0 %v1277
    %1380 = vmatprep.subr.bf16.mxu0 %v1282
    %1381 = vmatpush1.bf16.msra.mxu0 %v1281
    %1382 = vmatprep.subr.bf16.mxu0 %v1286
    %1383 = vmatpush1.bf16.msra.mxu0 %v1285
    %1384 = vmatprep.subr.bf16.mxu0 %v1290
    %1385 = vmatpush1.bf16.msra.mxu0 %v1289
    %1386 = vmatprep.subr.bf16.mxu0 %v1294
    %1387 = vmatpush1.bf16.msra.mxu0 %v1293
    %1388 = vmatprep.subr.bf16.mxu0 %v1298
    %1389 = vmatpush1.bf16.msra.mxu0 %v1297
    %1390 = vmatprep.subr.bf16.mxu0 %v1302
    %1391 = vmatpush1.bf16.msra.mxu0 %v1301
    %1392 = vmatprep.subr.bf16.mxu0 0
    %1393 = vmatpush1.bf16.msra.mxu0 0
    %1394 = vmatprep.subr.bf16.mxu0 0
    %1395 = vmatpush1.bf16.msra.mxu0 0
    %1396 = vmatprep.subr.bf16.mxu0 0
    %1397 = vmatpush1.bf16.msra.mxu0 0
    %1398 = vmatprep.subr.bf16.mxu0 0
    %1399 = vmatpush1.bf16.msra.mxu0 0
    %1400 = vmatprep.subr.bf16.mxu0 0
    %1401 = vmatpush1.bf16.msra.mxu0 0
    %1402 = vmatprep.subr.bf16.mxu0 0
    %1403 = vmatpush1.bf16.msra.mxu0 0
    %1404 = vmatprep.subr.bf16.mxu0 0
    %1405 = vmatpush1.bf16.msra.mxu0 0
    %1406 = vmatprep.subr.bf16.mxu0 0
    %1407 = vmatpush1.bf16.msra.mxu0 0
    %1408 = vmatprep.mubr.bf16.mxu0 0
    %1409 = vmatmul.mubr.bf16.gmra.mrb[0].mxu0 %v1142
    %v1410 = vpop.f32.mrb[0].mxu0
    %v1411 = vadd.f32 0.0, %v1410
    %v1412 = vpop.f32.mrb[0].mxu0
    %v1413 = vadd.f32 0.0, %v1412
    %v1414 = vpop.f32.mrb[0].mxu0
    %v1415 = vpop.f32.mrb[0].mxu0
    %1416 = vdwg.mxu0
    %v1421 = vrot.slane %v1370, 4
    %v1422 = vrot.slane %v1372, 4
    %v1423 = vrot.slane %v1411, 4
    %v1424 = vrot.slane %v1413, 4
    %v1429 = vadd.f32 %v1138, %v1421
    %v1430 = vadd.f32 %v1139, %v1422
    %v1431 = vadd.f32 %v1140, %v1423
    %v1432 = vadd.f32 %v1141, %v1424
    %v1433 = vmul.f32 %v1429, 0.5
    %v1434 = vmul.f32 %v1430, 0.5
    %v1435 = vmul.f32 %v1431, 0.5
    %v1436 = vtanh.pop %v1433
    %v1437 = vtanh.pop %v1434
    %v1438 = vtanh.pop %v1435
    %v1439 = vmul.f32 %v1436, 0.5
    %v1440 = vmul.f32 %v1437, 0.5
    %v1441 = vmul.f32 %v1438, 0.5
    %v1442 = vadd.f32 %v1439, 0.5
    %v1443 = vadd.f32 %v1440, 0.5
    %v1444 = vadd.f32 %v1441, 0.5
    %v1445 = vtanh.pop %v1432
    %v1447 = vrot.slane %v1134, 4
    %v1449 = vmul.f32 %v1443, %v1447
    %v1450 = vmul.f32 %v1442, %v1445
    %v1451 = vadd.f32 %v1449, %v1450
    %v1452 = vtanh.pop %v1451
    %v1453 = vmul.f32 %v1444, %v1452
    %v1455 = vcombine.high %v1453, %v1453
    %1457 = vst [vmem:[#allocation3 + $0xc] sm:$0xf] %v1455
    %v1458 = vld [vmem:[#allocation2 + $0x40] sm:$0xf]
    %v1459 = vld [vmem:[#allocation2 + $0x48] sm:$0xf]
    %v1460 = vld [vmem:[#allocation2 + $0x50] sm:$0xf]
    %v1461 = vld [vmem:[#allocation2 + $0x58] sm:$0xf]
    %v1462 = vpack.c.bf16 %v1453, %v1453
    %v1463 = vld [vmem:[%s2] sm:$0xff]
    %v1464 = vld [vmem:[%s2 + $0x8] sm:$0xff]
    %v1465 = vld [vmem:[%s2 + $0x10] sm:$0xff]
    %v1466 = vld [vmem:[%s2 + $0x18] sm:$0xff]
    %v1467 = vld [vmem:[%s2 + $0x20] sm:$0xff]
    %v1468 = vld [vmem:[%s2 + $0x28] sm:$0xff]
    %v1469 = vld [vmem:[%s2 + $0x30] sm:$0xff]
    %v1470 = vld [vmem:[%s2 + $0x38] sm:$0xff]
    %v1471 = vld [vmem:[%s2 + $0x40] sm:$0xff]
    %v1472 = vld [vmem:[%s2 + $0x48] sm:$0xff]
    %v1473 = vld [vmem:[%s2 + $0x50] sm:$0xff]
    %v1474 = vld [vmem:[%s2 + $0x58] sm:$0xff]
    %v1475 = vld [vmem:[%s2 + $0x60] sm:$0xff]
    %v1476 = vld [vmem:[%s2 + $0x68] sm:$0xff]
    %v1477 = vld [vmem:[%s2 + $0x70] sm:$0xff]
    %v1478 = vld [vmem:[%s2 + $0x78] sm:$0xff]
    %v1479 = vld [vmem:[%s2 + $0x80] sm:$0xff]
    %v1480 = vld [vmem:[%s2 + $0x88] sm:$0xff]
    %v1481 = vld [vmem:[%s2 + $0x90] sm:$0xff]
    %v1482 = vld [vmem:[%s2 + $0x98] sm:$0xff]
    %v1483 = vld [vmem:[%s2 + $0xa0] sm:$0xff]
    %v1484 = vld [vmem:[%s2 + $0xa8] sm:$0xff]
    %v1485 = vld [vmem:[%s2 + $0xb0] sm:$0xff]
    %v1486 = vld [vmem:[%s2 + $0xb8] sm:$0xff]
    %v1487 = vld [vmem:[%s2 + $0xc0] sm:$0xff]
    %v1488 = vld [vmem:[%s2 + $0xc8] sm:$0xff]
    %v1489 = vld [vmem:[%s2 + $0xd0] sm:$0xff]
    %v1490 = vld [vmem:[%s2 + $0xd8] sm:$0xff]
    %v1491 = vld [vmem:[%s2 + $0xe0] sm:$0xff]
    %v1492 = vld [vmem:[%s2 + $0xe8] sm:$0xff]
    %v1493 = vld [vmem:[%s2 + $0xf0] sm:$0xff]
    %v1494 = vld [vmem:[%s2 + $0xf8] sm:$0xff]
    %v1496 = vrot.slane %v1462, 2
    %v1530 = vunpack.c.l.b16 %v1463
    %v1531 = vunpack.c.h.b16 %v1463
    %v1532 = vunpack.c.l.b16 %v1464
    %v1533 = vunpack.c.h.b16 %v1464
    %v1534 = vunpack.c.l.b16 %v1465
    %v1535 = vunpack.c.h.b16 %v1465
    %v1536 = vunpack.c.l.b16 %v1466
    %v1537 = vunpack.c.h.b16 %v1466
    %v1538 = vunpack.c.l.b16 %v1467
    %v1539 = vunpack.c.h.b16 %v1467
    %v1540 = vunpack.c.l.b16 %v1468
    %v1541 = vunpack.c.h.b16 %v1468
    %v1542 = vunpack.c.l.b16 %v1469
    %v1543 = vunpack.c.h.b16 %v1469
    %v1544 = vunpack.c.l.b16 %v1470
    %v1545 = vunpack.c.h.b16 %v1470
    %v1546 = vunpack.c.l.b16 %v1471
    %v1547 = vunpack.c.h.b16 %v1471
    %v1548 = vunpack.c.l.b16 %v1472
    %v1549 = vunpack.c.h.b16 %v1472
    %v1550 = vunpack.c.l.b16 %v1473
    %v1551 = vunpack.c.h.b16 %v1473
    %v1552 = vunpack.c.l.b16 %v1474
    %v1553 = vunpack.c.h.b16 %v1474
    %v1554 = vunpack.c.l.b16 %v1475
    %v1555 = vunpack.c.h.b16 %v1475
    %v1556 = vunpack.c.l.b16 %v1476
    %v1557 = vunpack.c.h.b16 %v1476
    %v1558 = vunpack.c.l.b16 %v1477
    %v1559 = vunpack.c.h.b16 %v1477
    %v1560 = vunpack.c.l.b16 %v1478
    %v1561 = vunpack.c.h.b16 %v1478
    %v1562 = vunpack.c.l.b16 %v1479
    %v1563 = vunpack.c.h.b16 %v1479
    %v1564 = vunpack.c.l.b16 %v1480
    %v1565 = vunpack.c.h.b16 %v1480
    %v1566 = vunpack.c.l.b16 %v1481
    %v1567 = vunpack.c.h.b16 %v1481
    %v1568 = vunpack.c.l.b16 %v1482
    %v1569 = vunpack.c.h.b16 %v1482
    %v1570 = vunpack.c.l.b16 %v1483
    %v1571 = vunpack.c.h.b16 %v1483
    %v1572 = vunpack.c.l.b16 %v1484
    %v1573 = vunpack.c.h.b16 %v1484
    %v1574 = vunpack.c.l.b16 %v1485
    %v1575 = vunpack.c.h.b16 %v1485
    %v1576 = vunpack.c.l.b16 %v1486
    %v1577 = vunpack.c.h.b16 %v1486
    %v1578 = vunpack.c.l.b16 %v1487
    %v1579 = vunpack.c.h.b16 %v1487
    %v1580 = vunpack.c.l.b16 %v1488
    %v1581 = vunpack.c.h.b16 %v1488
    %v1582 = vunpack.c.l.b16 %v1489
    %v1583 = vunpack.c.h.b16 %v1489
    %v1584 = vunpack.c.l.b16 %v1490
    %v1585 = vunpack.c.h.b16 %v1490
    %v1586 = vunpack.c.l.b16 %v1491
    %v1587 = vunpack.c.h.b16 %v1491
    %v1588 = vunpack.c.l.b16 %v1492
    %v1589 = vunpack.c.h.b16 %v1492
    %v1590 = vunpack.c.l.b16 %v1493
    %v1591 = vunpack.c.h.b16 %v1493
    %v1592 = vunpack.c.l.b16 %v1494
    %v1593 = vunpack.c.h.b16 %v1494
    %v1594 = vpack.c.b16 %v1534, %v1530
    %v1595 = vpack.c.b16 %v1535, %v1531
    %v1596 = vpack.c.b16 %v1536, %v1532
    %v1597 = vpack.c.b16 %v1537, %v1533
    %v1598 = vpack.c.b16 %v1542, %v1538
    %v1599 = vpack.c.b16 %v1543, %v1539
    %v1600 = vpack.c.b16 %v1544, %v1540
    %v1601 = vpack.c.b16 %v1545, %v1541
    %v1602 = vpack.c.b16 %v1550, %v1546
    %v1603 = vpack.c.b16 %v1551, %v1547
    %v1604 = vpack.c.b16 %v1552, %v1548
    %v1605 = vpack.c.b16 %v1553, %v1549
    %v1606 = vpack.c.b16 %v1558, %v1554
    %v1607 = vpack.c.b16 %v1559, %v1555
    %v1608 = vpack.c.b16 %v1560, %v1556
    %v1609 = vpack.c.b16 %v1561, %v1557
    %v1610 = vpack.c.b16 %v1566, %v1562
    %v1611 = vpack.c.b16 %v1567, %v1563
    %v1612 = vpack.c.b16 %v1568, %v1564
    %v1613 = vpack.c.b16 %v1569, %v1565
    %v1614 = vpack.c.b16 %v1574, %v1570
    %v1615 = vpack.c.b16 %v1575, %v1571
    %v1616 = vpack.c.b16 %v1576, %v1572
    %v1617 = vpack.c.b16 %v1577, %v1573
    %v1618 = vpack.c.b16 %v1582, %v1578
    %v1619 = vpack.c.b16 %v1583, %v1579
    %v1620 = vpack.c.b16 %v1584, %v1580
    %v1621 = vpack.c.b16 %v1585, %v1581
    %v1622 = vpack.c.b16 %v1590, %v1586
    %v1623 = vpack.c.b16 %v1591, %v1587
    %v1624 = vpack.c.b16 %v1592, %v1588
    %v1625 = vpack.c.b16 %v1593, %v1589
    %1658 = vmatprep.subr.bf16.mxu0 %v1595
    %1659 = vmatpush1.bf16.msra.mxu0 %v1594
    %1660 = vmatprep.subr.bf16.mxu0 %v1599
    %1661 = vmatpush1.bf16.msra.mxu0 %v1598
    %1662 = vmatprep.subr.bf16.mxu0 %v1603
    %1663 = vmatpush1.bf16.msra.mxu0 %v1602
    %1664 = vmatprep.subr.bf16.mxu0 %v1607
    %1665 = vmatpush1.bf16.msra.mxu0 %v1606
    %1666 = vmatprep.subr.bf16.mxu0 %v1611
    %1667 = vmatpush1.bf16.msra.mxu0 %v1610
    %1668 = vmatprep.subr.bf16.mxu0 %v1615
    %1669 = vmatpush1.bf16.msra.mxu0 %v1614
    %1670 = vmatprep.subr.bf16.mxu0 %v1619
    %1671 = vmatpush1.bf16.msra.mxu0 %v1618
    %1672 = vmatprep.subr.bf16.mxu0 %v1623
    %1673 = vmatpush1.bf16.msra.mxu0 %v1622
    %1674 = vmatprep.subr.bf16.mxu0 0
    %1675 = vmatpush1.bf16.msra.mxu0 0
    %1676 = vmatprep.subr.bf16.mxu0 0
    %1677 = vmatpush1.bf16.msra.mxu0 0
    %1678 = vmatprep.subr.bf16.mxu0 0
    %1679 = vmatpush1.bf16.msra.mxu0 0
    %1680 = vmatprep.subr.bf16.mxu0 0
    %1681 = vmatpush1.bf16.msra.mxu0 0
    %1682 = vmatprep.subr.bf16.mxu0 0
    %1683 = vmatpush1.bf16.msra.mxu0 0
    %1684 = vmatprep.subr.bf16.mxu0 0
    %1685 = vmatpush1.bf16.msra.mxu0 0
    %1686 = vmatprep.subr.bf16.mxu0 0
    %1687 = vmatpush1.bf16.msra.mxu0 0
    %1688 = vmatprep.subr.bf16.mxu0 0
    %1689 = vmatpush1.bf16.msra.mxu0 0
    %1690 = vmatprep.mubr.bf16.mxu0 0
    %1691 = vmatmul.mubr.bf16.gmra.mrb[0].mxu0 %v1496
    %v1692 = vpop.f32.mrb[0].mxu0
    %v1693 = vadd.f32 0.0, %v1692
    %v1694 = vpop.f32.mrb[0].mxu0
    %v1695 = vadd.f32 0.0, %v1694
    %v1696 = vpop.f32.mrb[0].mxu0
    %v1697 = vpop.f32.mrb[0].mxu0
    %1698 = vdwg.mxu0
    %1699 = vmatprep.subr.bf16.mxu0 %v1597
    %1700 = vmatpush1.bf16.msra.mxu0 %v1596
    %1701 = vmatprep.subr.bf16.mxu0 %v1601
    %1702 = vmatpush1.bf16.msra.mxu0 %v1600
    %1703 = vmatprep.subr.bf16.mxu0 %v1605
    %1704 = vmatpush1.bf16.msra.mxu0 %v1604
    %1705 = vmatprep.subr.bf16.mxu0 %v1609
    %1706 = vmatpush1.bf16.msra.mxu0 %v1608
    %1707 = vmatprep.subr.bf16.mxu0 %v1613
    %1708 = vmatpush1.bf16.msra.mxu0 %v1612
    %1709 = vmatprep.subr.bf16.mxu0 %v1617
    %1710 = vmatpush1.bf16.msra.mxu0 %v1616
    %1711 = vmatprep.subr.bf16.mxu0 %v1621
    %1712 = vmatpush1.bf16.msra.mxu0 %v1620
    %1713 = vmatprep.subr.bf16.mxu0 %v1625
    %1714 = vmatpush1.bf16.msra.mxu0 %v1624
    %1715 = vmatprep.subr.bf16.mxu0 0
    %1716 = vmatpush1.bf16.msra.mxu0 0
    %1717 = vmatprep.subr.bf16.mxu0 0
    %1718 = vmatpush1.bf16.msra.mxu0 0
    %1719 = vmatprep.subr.bf16.mxu0 0
    %1720 = vmatpush1.bf16.msra.mxu0 0
    %1721 = vmatprep.subr.bf16.mxu0 0
    %1722 = vmatpush1.bf16.msra.mxu0 0
    %1723 = vmatprep.subr.bf16.mxu0 0
    %1724 = vmatpush1.bf16.msra.mxu0 0
    %1725 = vmatprep.subr.bf16.mxu0 0
    %1726 = vmatpush1.bf16.msra.mxu0 0
    %1727 = vmatprep.subr.bf16.mxu0 0
    %1728 = vmatpush1.bf16.msra.mxu0 0
    %1729 = vmatprep.subr.bf16.mxu0 0
    %1730 = vmatpush1.bf16.msra.mxu0 0
    %1731 = vmatprep.mubr.bf16.mxu0 0
    %1732 = vmatmul.mubr.bf16.gmra.mrb[0].mxu0 %v1496
    %v1733 = vpop.f32.mrb[0].mxu0
    %v1734 = vadd.f32 0.0, %v1733
    %v1735 = vpop.f32.mrb[0].mxu0
    %v1736 = vadd.f32 0.0, %v1735
    %v1737 = vpop.f32.mrb[0].mxu0
    %v1738 = vpop.f32.mrb[0].mxu0
    %1739 = vdwg.mxu0
    %v1740 = vadd.f32 %v1458, %v1693
    %v1741 = vadd.f32 %v1459, %v1695
    %v1742 = vadd.f32 %v1460, %v1734
    %v1743 = vadd.f32 %v1461, %v1736
    %v1744 = vmul.f32 %v1740, 0.5
    %v1745 = vmul.f32 %v1741, 0.5
    %v1746 = vmul.f32 %v1742, 0.5
    %v1747 = vtanh.pop %v1744
    %v1748 = vtanh.pop %v1745
    %v1749 = vtanh.pop %v1746
    %v1750 = vmul.f32 %v1747, 0.5
    %v1751 = vmul.f32 %v1748, 0.5
    %v1752 = vmul.f32 %v1749, 0.5
    %v1753 = vadd.f32 %v1750, 0.5
    %v1754 = vadd.f32 %v1751, 0.5
    %v1755 = vadd.f32 %v1752, 0.5
    %v1756 = vtanh.pop %v1743
    %v1758 = vrot.slane %v1451, 4
    %v1760 = vmul.f32 %v1754, %v1758
    %v1761 = vmul.f32 %v1753, %v1756
    %v1762 = vadd.f32 %v1760, %v1761
    %v1763 = vtanh.pop %v1762
    %v1764 = vmul.f32 %v1755, %v1763
    %1765 = vst [vmem:[#allocation3 + $0x10] sm:$0xf] %v1764
    %v1766 = vld [vmem:[#allocation2 + $0x40] sm:$0xf0]
    %v1767 = vld [vmem:[#allocation2 + $0x48] sm:$0xf0]
    %v1768 = vld [vmem:[#allocation2 + $0x50] sm:$0xf0]
    %v1769 = vld [vmem:[#allocation2 + $0x58] sm:$0xf0]
    %v1770 = vpack.c.bf16 %v1764, %v1764
    %v1771 = vld [vmem:[%s2] sm:$0xff]
    %v1772 = vld [vmem:[%s2 + $0x8] sm:$0xff]
    %v1773 = vld [vmem:[%s2 + $0x10] sm:$0xff]
    %v1774 = vld [vmem:[%s2 + $0x18] sm:$0xff]
    %v1775 = vld [vmem:[%s2 + $0x20] sm:$0xff]
    %v1776 = vld [vmem:[%s2 + $0x28] sm:$0xff]
    %v1777 = vld [vmem:[%s2 + $0x30] sm:$0xff]
    %v1778 = vld [vmem:[%s2 + $0x38] sm:$0xff]
    %v1779 = vld [vmem:[%s2 + $0x40] sm:$0xff]
    %v1780 = vld [vmem:[%s2 + $0x48] sm:$0xff]
    %v1781 = vld [vmem:[%s2 + $0x50] sm:$0xff]
    %v1782 = vld [vmem:[%s2 + $0x58] sm:$0xff]
    %v1783 = vld [vmem:[%s2 + $0x60] sm:$0xff]
    %v1784 = vld [vmem:[%s2 + $0x68] sm:$0xff]
    %v1785 = vld [vmem:[%s2 + $0x70] sm:$0xff]
    %v1786 = vld [vmem:[%s2 + $0x78] sm:$0xff]
    %v1787 = vld [vmem:[%s2 + $0x80] sm:$0xff]
    %v1788 = vld [vmem:[%s2 + $0x88] sm:$0xff]
    %v1789 = vld [vmem:[%s2 + $0x90] sm:$0xff]
    %v1790 = vld [vmem:[%s2 + $0x98] sm:$0xff]
    %v1791 = vld [vmem:[%s2 + $0xa0] sm:$0xff]
    %v1792 = vld [vmem:[%s2 + $0xa8] sm:$0xff]
    %v1793 = vld [vmem:[%s2 + $0xb0] sm:$0xff]
    %v1794 = vld [vmem:[%s2 + $0xb8] sm:$0xff]
    %v1795 = vld [vmem:[%s2 + $0xc0] sm:$0xff]
    %v1796 = vld [vmem:[%s2 + $0xc8] sm:$0xff]
    %v1797 = vld [vmem:[%s2 + $0xd0] sm:$0xff]
    %v1798 = vld [vmem:[%s2 + $0xd8] sm:$0xff]
    %v1799 = vld [vmem:[%s2 + $0xe0] sm:$0xff]
    %v1800 = vld [vmem:[%s2 + $0xe8] sm:$0xff]
    %v1801 = vld [vmem:[%s2 + $0xf0] sm:$0xff]
    %v1802 = vld [vmem:[%s2 + $0xf8] sm:$0xff]
    %v1835 = vunpack.c.l.b16 %v1771
    %v1836 = vunpack.c.h.b16 %v1771
    %v1837 = vunpack.c.l.b16 %v1772
    %v1838 = vunpack.c.h.b16 %v1772
    %v1839 = vunpack.c.l.b16 %v1773
    %v1840 = vunpack.c.h.b16 %v1773
    %v1841 = vunpack.c.l.b16 %v1774
    %v1842 = vunpack.c.h.b16 %v1774
    %v1843 = vunpack.c.l.b16 %v1775
    %v1844 = vunpack.c.h.b16 %v1775
    %v1845 = vunpack.c.l.b16 %v1776
    %v1846 = vunpack.c.h.b16 %v1776
    %v1847 = vunpack.c.l.b16 %v1777
    %v1848 = vunpack.c.h.b16 %v1777
    %v1849 = vunpack.c.l.b16 %v1778
    %v1850 = vunpack.c.h.b16 %v1778
    %v1851 = vunpack.c.l.b16 %v1779
    %v1852 = vunpack.c.h.b16 %v1779
    %v1853 = vunpack.c.l.b16 %v1780
    %v1854 = vunpack.c.h.b16 %v1780
    %v1855 = vunpack.c.l.b16 %v1781
    %v1856 = vunpack.c.h.b16 %v1781
    %v1857 = vunpack.c.l.b16 %v1782
    %v1858 = vunpack.c.h.b16 %v1782
    %v1859 = vunpack.c.l.b16 %v1783
    %v1860 = vunpack.c.h.b16 %v1783
    %v1861 = vunpack.c.l.b16 %v1784
    %v1862 = vunpack.c.h.b16 %v1784
    %v1863 = vunpack.c.l.b16 %v1785
    %v1864 = vunpack.c.h.b16 %v1785
    %v1865 = vunpack.c.l.b16 %v1786
    %v1866 = vunpack.c.h.b16 %v1786
    %v1867 = vunpack.c.l.b16 %v1787
    %v1868 = vunpack.c.h.b16 %v1787
    %v1869 = vunpack.c.l.b16 %v1788
    %v1870 = vunpack.c.h.b16 %v1788
    %v1871 = vunpack.c.l.b16 %v1789
    %v1872 = vunpack.c.h.b16 %v1789
    %v1873 = vunpack.c.l.b16 %v1790
    %v1874 = vunpack.c.h.b16 %v1790
    %v1875 = vunpack.c.l.b16 %v1791
    %v1876 = vunpack.c.h.b16 %v1791
    %v1877 = vunpack.c.l.b16 %v1792
    %v1878 = vunpack.c.h.b16 %v1792
    %v1879 = vunpack.c.l.b16 %v1793
    %v1880 = vunpack.c.h.b16 %v1793
    %v1881 = vunpack.c.l.b16 %v1794
    %v1882 = vunpack.c.h.b16 %v1794
    %v1883 = vunpack.c.l.b16 %v1795
    %v1884 = vunpack.c.h.b16 %v1795
    %v1885 = vunpack.c.l.b16 %v1796
    %v1886 = vunpack.c.h.b16 %v1796
    %v1887 = vunpack.c.l.b16 %v1797
    %v1888 = vunpack.c.h.b16 %v1797
    %v1889 = vunpack.c.l.b16 %v1798
    %v1890 = vunpack.c.h.b16 %v1798
    %v1891 = vunpack.c.l.b16 %v1799
    %v1892 = vunpack.c.h.b16 %v1799
    %v1893 = vunpack.c.l.b16 %v1800
    %v1894 = vunpack.c.h.b16 %v1800
    %v1895 = vunpack.c.l.b16 %v1801
    %v1896 = vunpack.c.h.b16 %v1801
    %v1897 = vunpack.c.l.b16 %v1802
    %v1898 = vunpack.c.h.b16 %v1802
    %v1899 = vpack.c.b16 %v1839, %v1835
    %v1900 = vpack.c.b16 %v1840, %v1836
    %v1901 = vpack.c.b16 %v1841, %v1837
    %v1902 = vpack.c.b16 %v1842, %v1838
    %v1903 = vpack.c.b16 %v1847, %v1843
    %v1904 = vpack.c.b16 %v1848, %v1844
    %v1905 = vpack.c.b16 %v1849, %v1845
    %v1906 = vpack.c.b16 %v1850, %v1846
    %v1907 = vpack.c.b16 %v1855, %v1851
    %v1908 = vpack.c.b16 %v1856, %v1852
    %v1909 = vpack.c.b16 %v1857, %v1853
    %v1910 = vpack.c.b16 %v1858, %v1854
    %v1911 = vpack.c.b16 %v1863, %v1859
    %v1912 = vpack.c.b16 %v1864, %v1860
    %v1913 = vpack.c.b16 %v1865, %v1861
    %v1914 = vpack.c.b16 %v1866, %v1862
    %v1915 = vpack.c.b16 %v1871, %v1867
    %v1916 = vpack.c.b16 %v1872, %v1868
    %v1917 = vpack.c.b16 %v1873, %v1869
    %v1918 = vpack.c.b16 %v1874, %v1870
    %v1919 = vpack.c.b16 %v1879, %v1875
    %v1920 = vpack.c.b16 %v1880, %v1876
    %v1921 = vpack.c.b16 %v1881, %v1877
    %v1922 = vpack.c.b16 %v1882, %v1878
    %v1923 = vpack.c.b16 %v1887, %v1883
    %v1924 = vpack.c.b16 %v1888, %v1884
    %v1925 = vpack.c.b16 %v1889, %v1885
    %v1926 = vpack.c.b16 %v1890, %v1886
    %v1927 = vpack.c.b16 %v1895, %v1891
    %v1928 = vpack.c.b16 %v1896, %v1892
    %v1929 = vpack.c.b16 %v1897, %v1893
    %v1930 = vpack.c.b16 %v1898, %v1894
    %1963 = vmatprep.subr.bf16.mxu0 %v1900
    %1964 = vmatpush1.bf16.msra.mxu0 %v1899
    %1965 = vmatprep.subr.bf16.mxu0 %v1904
    %1966 = vmatpush1.bf16.msra.mxu0 %v1903
    %1967 = vmatprep.subr.bf16.mxu0 %v1908
    %1968 = vmatpush1.bf16.msra.mxu0 %v1907
    %1969 = vmatprep.subr.bf16.mxu0 %v1912
    %1970 = vmatpush1.bf16.msra.mxu0 %v1911
    %1971 = vmatprep.subr.bf16.mxu0 %v1916
    %1972 = vmatpush1.bf16.msra.mxu0 %v1915
    %1973 = vmatprep.subr.bf16.mxu0 %v1920
    %1974 = vmatpush1.bf16.msra.mxu0 %v1919
    %1975 = vmatprep.subr.bf16.mxu0 %v1924
    %1976 = vmatpush1.bf16.msra.mxu0 %v1923
    %1977 = vmatprep.subr.bf16.mxu0 %v1928
    %1978 = vmatpush1.bf16.msra.mxu0 %v1927
    %1979 = vmatprep.subr.bf16.mxu0 0
    %1980 = vmatpush1.bf16.msra.mxu0 0
    %1981 = vmatprep.subr.bf16.mxu0 0
    %1982 = vmatpush1.bf16.msra.mxu0 0
    %1983 = vmatprep.subr.bf16.mxu0 0
    %1984 = vmatpush1.bf16.msra.mxu0 0
    %1985 = vmatprep.subr.bf16.mxu0 0
    %1986 = vmatpush1.bf16.msra.mxu0 0
    %1987 = vmatprep.subr.bf16.mxu0 0
    %1988 = vmatpush1.bf16.msra.mxu0 0
    %1989 = vmatprep.subr.bf16.mxu0 0
    %1990 = vmatpush1.bf16.msra.mxu0 0
    %1991 = vmatprep.subr.bf16.mxu0 0
    %1992 = vmatpush1.bf16.msra.mxu0 0
    %1993 = vmatprep.subr.bf16.mxu0 0
    %1994 = vmatpush1.bf16.msra.mxu0 0
    %1995 = vmatprep.mubr.bf16.mxu0 0
    %1996 = vmatmul.mubr.bf16.gmra.mrb[0].mxu0 %v1770
    %v1997 = vpop.f32.mrb[0].mxu0
    %v1998 = vadd.f32 0.0, %v1997
    %v1999 = vpop.f32.mrb[0].mxu0
    %v2000 = vadd.f32 0.0, %v1999
    %v2001 = vpop.f32.mrb[0].mxu0
    %v2002 = vpop.f32.mrb[0].mxu0
    %2003 = vdwg.mxu0
    %2004 = vmatprep.subr.bf16.mxu0 %v1902
    %2005 = vmatpush1.bf16.msra.mxu0 %v1901
    %2006 = vmatprep.subr.bf16.mxu0 %v1906
    %2007 = vmatpush1.bf16.msra.mxu0 %v1905
    %2008 = vmatprep.subr.bf16.mxu0 %v1910
    %2009 = vmatpush1.bf16.msra.mxu0 %v1909
    %2010 = vmatprep.subr.bf16.mxu0 %v1914
    %2011 = vmatpush1.bf16.msra.mxu0 %v1913
    %2012 = vmatprep.subr.bf16.mxu0 %v1918
    %2013 = vmatpush1.bf16.msra.mxu0 %v1917
    %2014 = vmatprep.subr.bf16.mxu0 %v1922
    %2015 = vmatpush1.bf16.msra.mxu0 %v1921
    %2016 = vmatprep.subr.bf16.mxu0 %v1926
    %2017 = vmatpush1.bf16.msra.mxu0 %v1925
    %2018 = vmatprep.subr.bf16.mxu0 %v1930
    %2019 = vmatpush1.bf16.msra.mxu0 %v1929
    %2020 = vmatprep.subr.bf16.mxu0 0
    %2021 = vmatpush1.bf16.msra.mxu0 0
    %2022 = vmatprep.subr.bf16.mxu0 0
    %2023 = vmatpush1.bf16.msra.mxu0 0
    %2024 = vmatprep.subr.bf16.mxu0 0
    %2025 = vmatpush1.bf16.msra.mxu0 0
    %2026 = vmatprep.subr.bf16.mxu0 0
    %2027 = vmatpush1.bf16.msra.mxu0 0
    %2028 = vmatprep.subr.bf16.mxu0 0
    %2029 = vmatpush1.bf16.msra.mxu0 0
    %2030 = vmatprep.subr.bf16.mxu0 0
    %2031 = vmatpush1.bf16.msra.mxu0 0
    %2032 = vmatprep.subr.bf16.mxu0 0
    %2033 = vmatpush1.bf16.msra.mxu0 0
    %2034 = vmatprep.subr.bf16.mxu0 0
    %2035 = vmatpush1.bf16.msra.mxu0 0
    %2036 = vmatprep.mubr.bf16.mxu0 0
    %2037 = vmatmul.mubr.bf16.gmra.mrb[0].mxu0 %v1770
    %v2038 = vpop.f32.mrb[0].mxu0
    %v2039 = vadd.f32 0.0, %v2038
    %v2040 = vpop.f32.mrb[0].mxu0
    %v2041 = vadd.f32 0.0, %v2040
    %v2042 = vpop.f32.mrb[0].mxu0
    %v2043 = vpop.f32.mrb[0].mxu0
    %2044 = vdwg.mxu0
    %v2049 = vrot.slane %v1998, 4
    %v2050 = vrot.slane %v2000, 4
    %v2051 = vrot.slane %v2039, 4
    %v2052 = vrot.slane %v2041, 4
    %v2057 = vadd.f32 %v1766, %v2049
    %v2058 = vadd.f32 %v1767, %v2050
    %v2059 = vadd.f32 %v1768, %v2051
    %v2060 = vadd.f32 %v1769, %v2052
    %v2061 = vmul.f32 %v2057, 0.5
    %v2062 = vmul.f32 %v2058, 0.5
    %v2063 = vmul.f32 %v2059, 0.5
    %v2064 = vtanh.pop %v2061
    %v2065 = vtanh.pop %v2062
    %v2066 = vtanh.pop %v2063
    %v2067 = vmul.f32 %v2064, 0.5
    %v2068 = vmul.f32 %v2065, 0.5
    %v2069 = vmul.f32 %v2066, 0.5
    %v2070 = vadd.f32 %v2067, 0.5
    %v2071 = vadd.f32 %v2068, 0.5
    %v2072 = vadd.f32 %v2069, 0.5
    %v2073 = vtanh.pop %v2060
    %v2075 = vrot.slane %v1762, 4
    %v2077 = vmul.f32 %v2071, %v2075
    %v2078 = vmul.f32 %v2070, %v2073
    %v2079 = vadd.f32 %v2077, %v2078
    %v2080 = vtanh.pop %v2079
    %v2081 = vmul.f32 %v2072, %v2080
    %v2083 = vcombine.high %v2081, %v2081
    %2085 = vst [vmem:[#allocation3 + $0x14] sm:$0xf] %v2083
    %v2086 = vld [vmem:[#allocation2 + $0x60] sm:$0xf]
    %v2087 = vld [vmem:[#allocation2 + $0x68] sm:$0xf]
    %v2088 = vld [vmem:[#allocation2 + $0x70] sm:$0xf]
    %v2089 = vld [vmem:[#allocation2 + $0x78] sm:$0xf]
    %v2090 = vpack.c.bf16 %v2081, %v2081
    %v2091 = vld [vmem:[%s2] sm:$0xff]
    %v2092 = vld [vmem:[%s2 + $0x8] sm:$0xff]
    %v2093 = vld [vmem:[%s2 + $0x10] sm:$0xff]
    %v2094 = vld [vmem:[%s2 + $0x18] sm:$0xff]
    %v2095 = vld [vmem:[%s2 + $0x20] sm:$0xff]
    %v2096 = vld [vmem:[%s2 + $0x28] sm:$0xff]
    %v2097 = vld [vmem:[%s2 + $0x30] sm:$0xff]
    %v2098 = vld [vmem:[%s2 + $0x38] sm:$0xff]
    %v2099 = vld [vmem:[%s2 + $0x40] sm:$0xff]
    %v2100 = vld [vmem:[%s2 + $0x48] sm:$0xff]
    %v2101 = vld [vmem:[%s2 + $0x50] sm:$0xff]
    %v2102 = vld [vmem:[%s2 + $0x58] sm:$0xff]
    %v2103 = vld [vmem:[%s2 + $0x60] sm:$0xff]
    %v2104 = vld [vmem:[%s2 + $0x68] sm:$0xff]
    %v2105 = vld [vmem:[%s2 + $0x70] sm:$0xff]
    %v2106 = vld [vmem:[%s2 + $0x78] sm:$0xff]
    %v2107 = vld [vmem:[%s2 + $0x80] sm:$0xff]
    %v2108 = vld [vmem:[%s2 + $0x88] sm:$0xff]
    %v2109 = vld [vmem:[%s2 + $0x90] sm:$0xff]
    %v2110 = vld [vmem:[%s2 + $0x98] sm:$0xff]
    %v2111 = vld [vmem:[%s2 + $0xa0] sm:$0xff]
    %v2112 = vld [vmem:[%s2 + $0xa8] sm:$0xff]
    %v2113 = vld [vmem:[%s2 + $0xb0] sm:$0xff]
    %v2114 = vld [vmem:[%s2 + $0xb8] sm:$0xff]
    %v2115 = vld [vmem:[%s2 + $0xc0] sm:$0xff]
    %v2116 = vld [vmem:[%s2 + $0xc8] sm:$0xff]
    %v2117 = vld [vmem:[%s2 + $0xd0] sm:$0xff]
    %v2118 = vld [vmem:[%s2 + $0xd8] sm:$0xff]
    %v2119 = vld [vmem:[%s2 + $0xe0] sm:$0xff]
    %v2120 = vld [vmem:[%s2 + $0xe8] sm:$0xff]
    %v2121 = vld [vmem:[%s2 + $0xf0] sm:$0xff]
    %v2122 = vld [vmem:[%s2 + $0xf8] sm:$0xff]
    %v2124 = vrot.slane %v2090, 2
    %v2158 = vunpack.c.l.b16 %v2091
    %v2159 = vunpack.c.h.b16 %v2091
    %v2160 = vunpack.c.l.b16 %v2092
    %v2161 = vunpack.c.h.b16 %v2092
    %v2162 = vunpack.c.l.b16 %v2093
    %v2163 = vunpack.c.h.b16 %v2093
    %v2164 = vunpack.c.l.b16 %v2094
    %v2165 = vunpack.c.h.b16 %v2094
    %v2166 = vunpack.c.l.b16 %v2095
    %v2167 = vunpack.c.h.b16 %v2095
    %v2168 = vunpack.c.l.b16 %v2096
    %v2169 = vunpack.c.h.b16 %v2096
    %v2170 = vunpack.c.l.b16 %v2097
    %v2171 = vunpack.c.h.b16 %v2097
    %v2172 = vunpack.c.l.b16 %v2098
    %v2173 = vunpack.c.h.b16 %v2098
    %v2174 = vunpack.c.l.b16 %v2099
    %v2175 = vunpack.c.h.b16 %v2099
    %v2176 = vunpack.c.l.b16 %v2100
    %v2177 = vunpack.c.h.b16 %v2100
    %v2178 = vunpack.c.l.b16 %v2101
    %v2179 = vunpack.c.h.b16 %v2101
    %v2180 = vunpack.c.l.b16 %v2102
    %v2181 = vunpack.c.h.b16 %v2102
    %v2182 = vunpack.c.l.b16 %v2103
    %v2183 = vunpack.c.h.b16 %v2103
    %v2184 = vunpack.c.l.b16 %v2104
    %v2185 = vunpack.c.h.b16 %v2104
    %v2186 = vunpack.c.l.b16 %v2105
    %v2187 = vunpack.c.h.b16 %v2105
    %v2188 = vunpack.c.l.b16 %v2106
    %v2189 = vunpack.c.h.b16 %v2106
    %v2190 = vunpack.c.l.b16 %v2107
    %v2191 = vunpack.c.h.b16 %v2107
    %v2192 = vunpack.c.l.b16 %v2108
    %v2193 = vunpack.c.h.b16 %v2108
    %v2194 = vunpack.c.l.b16 %v2109
    %v2195 = vunpack.c.h.b16 %v2109
    %v2196 = vunpack.c.l.b16 %v2110
    %v2197 = vunpack.c.h.b16 %v2110
    %v2198 = vunpack.c.l.b16 %v2111
    %v2199 = vunpack.c.h.b16 %v2111
    %v2200 = vunpack.c.l.b16 %v2112
    %v2201 = vunpack.c.h.b16 %v2112
    %v2202 = vunpack.c.l.b16 %v2113
    %v2203 = vunpack.c.h.b16 %v2113
    %v2204 = vunpack.c.l.b16 %v2114
    %v2205 = vunpack.c.h.b16 %v2114
    %v2206 = vunpack.c.l.b16 %v2115
    %v2207 = vunpack.c.h.b16 %v2115
    %v2208 = vunpack.c.l.b16 %v2116
    %v2209 = vunpack.c.h.b16 %v2116
    %v2210 = vunpack.c.l.b16 %v2117
    %v2211 = vunpack.c.h.b16 %v2117
    %v2212 = vunpack.c.l.b16 %v2118
    %v2213 = vunpack.c.h.b16 %v2118
    %v2214 = vunpack.c.l.b16 %v2119
    %v2215 = vunpack.c.h.b16 %v2119
    %v2216 = vunpack.c.l.b16 %v2120
    %v2217 = vunpack.c.h.b16 %v2120
    %v2218 = vunpack.c.l.b16 %v2121
    %v2219 = vunpack.c.h.b16 %v2121
    %v2220 = vunpack.c.l.b16 %v2122
    %v2221 = vunpack.c.h.b16 %v2122
    %v2222 = vpack.c.b16 %v2162, %v2158
    %v2223 = vpack.c.b16 %v2163, %v2159
    %v2224 = vpack.c.b16 %v2164, %v2160
    %v2225 = vpack.c.b16 %v2165, %v2161
    %v2226 = vpack.c.b16 %v2170, %v2166
    %v2227 = vpack.c.b16 %v2171, %v2167
    %v2228 = vpack.c.b16 %v2172, %v2168
    %v2229 = vpack.c.b16 %v2173, %v2169
    %v2230 = vpack.c.b16 %v2178, %v2174
    %v2231 = vpack.c.b16 %v2179, %v2175
    %v2232 = vpack.c.b16 %v2180, %v2176
    %v2233 = vpack.c.b16 %v2181, %v2177
    %v2234 = vpack.c.b16 %v2186, %v2182
    %v2235 = vpack.c.b16 %v2187, %v2183
    %v2236 = vpack.c.b16 %v2188, %v2184
    %v2237 = vpack.c.b16 %v2189, %v2185
    %v2238 = vpack.c.b16 %v2194, %v2190
    %v2239 = vpack.c.b16 %v2195, %v2191
    %v2240 = vpack.c.b16 %v2196, %v2192
    %v2241 = vpack.c.b16 %v2197, %v2193
    %v2242 = vpack.c.b16 %v2202, %v2198
    %v2243 = vpack.c.b16 %v2203, %v2199
    %v2244 = vpack.c.b16 %v2204, %v2200
    %v2245 = vpack.c.b16 %v2205, %v2201
    %v2246 = vpack.c.b16 %v2210, %v2206
    %v2247 = vpack.c.b16 %v2211, %v2207
    %v2248 = vpack.c.b16 %v2212, %v2208
    %v2249 = vpack.c.b16 %v2213, %v2209
    %v2250 = vpack.c.b16 %v2218, %v2214
    %v2251 = vpack.c.b16 %v2219, %v2215
    %v2252 = vpack.c.b16 %v2220, %v2216
    %v2253 = vpack.c.b16 %v2221, %v2217
    %2286 = vmatprep.subr.bf16.mxu0 %v2223
    %2287 = vmatpush1.bf16.msra.mxu0 %v2222
    %2288 = vmatprep.subr.bf16.mxu0 %v2227
    %2289 = vmatpush1.bf16.msra.mxu0 %v2226
    %2290 = vmatprep.subr.bf16.mxu0 %v2231
    %2291 = vmatpush1.bf16.msra.mxu0 %v2230
    %2292 = vmatprep.subr.bf16.mxu0 %v2235
    %2293 = vmatpush1.bf16.msra.mxu0 %v2234
    %2294 = vmatprep.subr.bf16.mxu0 %v2239
    %2295 = vmatpush1.bf16.msra.mxu0 %v2238
    %2296 = vmatprep.subr.bf16.mxu0 %v2243
    %2297 = vmatpush1.bf16.msra.mxu0 %v2242
    %2298 = vmatprep.subr.bf16.mxu0 %v2247
    %2299 = vmatpush1.bf16.msra.mxu0 %v2246
    %2300 = vmatprep.subr.bf16.mxu0 %v2251
    %2301 = vmatpush1.bf16.msra.mxu0 %v2250
    %2302 = vmatprep.subr.bf16.mxu0 0
    %2303 = vmatpush1.bf16.msra.mxu0 0
    %2304 = vmatprep.subr.bf16.mxu0 0
    %2305 = vmatpush1.bf16.msra.mxu0 0
    %2306 = vmatprep.subr.bf16.mxu0 0
    %2307 = vmatpush1.bf16.msra.mxu0 0
    %2308 = vmatprep.subr.bf16.mxu0 0
    %2309 = vmatpush1.bf16.msra.mxu0 0
    %2310 = vmatprep.subr.bf16.mxu0 0
    %2311 = vmatpush1.bf16.msra.mxu0 0
    %2312 = vmatprep.subr.bf16.mxu0 0
    %2313 = vmatpush1.bf16.msra.mxu0 0
    %2314 = vmatprep.subr.bf16.mxu0 0
    %2315 = vmatpush1.bf16.msra.mxu0 0
    %2316 = vmatprep.subr.bf16.mxu0 0
    %2317 = vmatpush1.bf16.msra.mxu0 0
    %2318 = vmatprep.mubr.bf16.mxu0 0
    %2319 = vmatmul.mubr.bf16.gmra.mrb[0].mxu0 %v2124
    %v2320 = vpop.f32.mrb[0].mxu0
    %v2321 = vadd.f32 0.0, %v2320
    %v2322 = vpop.f32.mrb[0].mxu0
    %v2323 = vadd.f32 0.0, %v2322
    %v2324 = vpop.f32.mrb[0].mxu0
    %v2325 = vpop.f32.mrb[0].mxu0
    %2326 = vdwg.mxu0
    %2327 = vmatprep.subr.bf16.mxu0 %v2225
    %2328 = vmatpush1.bf16.msra.mxu0 %v2224
    %2329 = vmatprep.subr.bf16.mxu0 %v2229
    %2330 = vmatpush1.bf16.msra.mxu0 %v2228
    %2331 = vmatprep.subr.bf16.mxu0 %v2233
    %2332 = vmatpush1.bf16.msra.mxu0 %v2232
    %2333 = vmatprep.subr.bf16.mxu0 %v2237
    %2334 = vmatpush1.bf16.msra.mxu0 %v2236
    %2335 = vmatprep.subr.bf16.mxu0 %v2241
    %2336 = vmatpush1.bf16.msra.mxu0 %v2240
    %2337 = vmatprep.subr.bf16.mxu0 %v2245
    %2338 = vmatpush1.bf16.msra.mxu0 %v2244
    %2339 = vmatprep.subr.bf16.mxu0 %v2249
    %2340 = vmatpush1.bf16.msra.mxu0 %v2248
    %2341 = vmatprep.subr.bf16.mxu0 %v2253
    %2342 = vmatpush1.bf16.msra.mxu0 %v2252
    %2343 = vmatprep.subr.bf16.mxu0 0
    %2344 = vmatpush1.bf16.msra.mxu0 0
    %2345 = vmatprep.subr.bf16.mxu0 0
    %2346 = vmatpush1.bf16.msra.mxu0 0
    %2347 = vmatprep.subr.bf16.mxu0 0
    %2348 = vmatpush1.bf16.msra.mxu0 0
    %2349 = vmatprep.subr.bf16.mxu0 0
    %2350 = vmatpush1.bf16.msra.mxu0 0
    %2351 = vmatprep.subr.bf16.mxu0 0
    %2352 = vmatpush1.bf16.msra.mxu0 0
    %2353 = vmatprep.subr.bf16.mxu0 0
    %2354 = vmatpush1.bf16.msra.mxu0 0
    %2355 = vmatprep.subr.bf16.mxu0 0
    %2356 = vmatpush1.bf16.msra.mxu0 0
    %2357 = vmatprep.subr.bf16.mxu0 0
    %2358 = vmatpush1.bf16.msra.mxu0 0
    %2359 = vmatprep.mubr.bf16.mxu0 0
    %2360 = vmatmul.mubr.bf16.gmra.mrb[0].mxu0 %v2124
    %v2361 = vpop.f32.mrb[0].mxu0
    %v2362 = vadd.f32 0.0, %v2361
    %v2363 = vpop.f32.mrb[0].mxu0
    %v2364 = vadd.f32 0.0, %v2363
    %v2365 = vpop.f32.mrb[0].mxu0
    %v2366 = vpop.f32.mrb[0].mxu0
    %2367 = vdwg.mxu0
    %v2368 = vadd.f32 %v2086, %v2321
    %v2369 = vadd.f32 %v2087, %v2323
    %v2370 = vadd.f32 %v2088, %v2362
    %v2371 = vadd.f32 %v2089, %v2364
    %v2372 = vmul.f32 %v2368, 0.5
    %v2373 = vmul.f32 %v2369, 0.5
    %v2374 = vmul.f32 %v2370, 0.5
    %v2375 = vtanh.pop %v2372
    %v2376 = vtanh.pop %v2373
    %v2377 = vtanh.pop %v2374
    %v2378 = vmul.f32 %v2375, 0.5
    %v2379 = vmul.f32 %v2376, 0.5
    %v2380 = vmul.f32 %v2377, 0.5
    %v2381 = vadd.f32 %v2378, 0.5
    %v2382 = vadd.f32 %v2379, 0.5
    %v2383 = vadd.f32 %v2380, 0.5
    %v2384 = vtanh.pop %v2371
    %v2386 = vrot.slane %v2079, 4
    %v2388 = vmul.f32 %v2382, %v2386
    %v2389 = vmul.f32 %v2381, %v2384
    %v2390 = vadd.f32 %v2388, %v2389
    %v2391 = vtanh.pop %v2390
    %v2392 = vmul.f32 %v2383, %v2391
    %2393 = vst [vmem:[#allocation3 + $0x18] sm:$0xf] %v2392
    %v2394 = vld [vmem:[#allocation2 + $0x60] sm:$0xf0]
    %v2395 = vld [vmem:[#allocation2 + $0x68] sm:$0xf0]
    %v2396 = vld [vmem:[#allocation2 + $0x70] sm:$0xf0]
    %v2397 = vld [vmem:[#allocation2 + $0x78] sm:$0xf0]
    %v2398 = vpack.c.bf16 %v2392, %v2392
    %v2399 = vld [vmem:[%s2] sm:$0xff]
    %v2400 = vld [vmem:[%s2 + $0x8] sm:$0xff]
    %v2401 = vld [vmem:[%s2 + $0x10] sm:$0xff]
    %v2402 = vld [vmem:[%s2 + $0x18] sm:$0xff]
    %v2403 = vld [vmem:[%s2 + $0x20] sm:$0xff]
    %v2404 = vld [vmem:[%s2 + $0x28] sm:$0xff]
    %v2405 = vld [vmem:[%s2 + $0x30] sm:$0xff]
    %v2406 = vld [vmem:[%s2 + $0x38] sm:$0xff]
    %v2407 = vld [vmem:[%s2 + $0x40] sm:$0xff]
    %v2408 = vld [vmem:[%s2 + $0x48] sm:$0xff]
    %v2409 = vld [vmem:[%s2 + $0x50] sm:$0xff]
    %v2410 = vld [vmem:[%s2 + $0x58] sm:$0xff]
    %v2411 = vld [vmem:[%s2 + $0x60] sm:$0xff]
    %v2412 = vld [vmem:[%s2 + $0x68] sm:$0xff]
    %v2413 = vld [vmem:[%s2 + $0x70] sm:$0xff]
    %v2414 = vld [vmem:[%s2 + $0x78] sm:$0xff]
    %v2415 = vld [vmem:[%s2 + $0x80] sm:$0xff]
    %v2416 = vld [vmem:[%s2 + $0x88] sm:$0xff]
    %v2417 = vld [vmem:[%s2 + $0x90] sm:$0xff]
    %v2418 = vld [vmem:[%s2 + $0x98] sm:$0xff]
    %v2419 = vld [vmem:[%s2 + $0xa0] sm:$0xff]
    %v2420 = vld [vmem:[%s2 + $0xa8] sm:$0xff]
    %v2421 = vld [vmem:[%s2 + $0xb0] sm:$0xff]
    %v2422 = vld [vmem:[%s2 + $0xb8] sm:$0xff]
    %v2423 = vld [vmem:[%s2 + $0xc0] sm:$0xff]
    %v2424 = vld [vmem:[%s2 + $0xc8] sm:$0xff]
    %v2425 = vld [vmem:[%s2 + $0xd0] sm:$0xff]
    %v2426 = vld [vmem:[%s2 + $0xd8] sm:$0xff]
    %v2427 = vld [vmem:[%s2 + $0xe0] sm:$0xff]
    %v2428 = vld [vmem:[%s2 + $0xe8] sm:$0xff]
    %v2429 = vld [vmem:[%s2 + $0xf0] sm:$0xff]
    %v2430 = vld [vmem:[%s2 + $0xf8] sm:$0xff]
    %v2463 = vunpack.c.l.b16 %v2399
    %v2464 = vunpack.c.h.b16 %v2399
    %v2465 = vunpack.c.l.b16 %v2400
    %v2466 = vunpack.c.h.b16 %v2400
    %v2467 = vunpack.c.l.b16 %v2401
    %v2468 = vunpack.c.h.b16 %v2401
    %v2469 = vunpack.c.l.b16 %v2402
    %v2470 = vunpack.c.h.b16 %v2402
    %v2471 = vunpack.c.l.b16 %v2403
    %v2472 = vunpack.c.h.b16 %v2403
    %v2473 = vunpack.c.l.b16 %v2404
    %v2474 = vunpack.c.h.b16 %v2404
    %v2475 = vunpack.c.l.b16 %v2405
    %v2476 = vunpack.c.h.b16 %v2405
    %v2477 = vunpack.c.l.b16 %v2406
    %v2478 = vunpack.c.h.b16 %v2406
    %v2479 = vunpack.c.l.b16 %v2407
    %v2480 = vunpack.c.h.b16 %v2407
    %v2481 = vunpack.c.l.b16 %v2408
    %v2482 = vunpack.c.h.b16 %v2408
    %v2483 = vunpack.c.l.b16 %v2409
    %v2484 = vunpack.c.h.b16 %v2409
    %v2485 = vunpack.c.l.b16 %v2410
    %v2486 = vunpack.c.h.b16 %v2410
    %v2487 = vunpack.c.l.b16 %v2411
    %v2488 = vunpack.c.h.b16 %v2411
    %v2489 = vunpack.c.l.b16 %v2412
    %v2490 = vunpack.c.h.b16 %v2412
    %v2491 = vunpack.c.l.b16 %v2413
    %v2492 = vunpack.c.h.b16 %v2413
    %v2493 = vunpack.c.l.b16 %v2414
    %v2494 = vunpack.c.h.b16 %v2414
    %v2495 = vunpack.c.l.b16 %v2415
    %v2496 = vunpack.c.h.b16 %v2415
    %v2497 = vunpack.c.l.b16 %v2416
    %v2498 = vunpack.c.h.b16 %v2416
    %v2499 = vunpack.c.l.b16 %v2417
    %v2500 = vunpack.c.h.b16 %v2417
    %v2501 = vunpack.c.l.b16 %v2418
    %v2502 = vunpack.c.h.b16 %v2418
    %v2503 = vunpack.c.l.b16 %v2419
    %v2504 = vunpack.c.h.b16 %v2419
    %v2505 = vunpack.c.l.b16 %v2420
    %v2506 = vunpack.c.h.b16 %v2420
    %v2507 = vunpack.c.l.b16 %v2421
    %v2508 = vunpack.c.h.b16 %v2421
    %v2509 = vunpack.c.l.b16 %v2422
    %v2510 = vunpack.c.h.b16 %v2422
    %v2511 = vunpack.c.l.b16 %v2423
    %v2512 = vunpack.c.h.b16 %v2423
    %v2513 = vunpack.c.l.b16 %v2424
    %v2514 = vunpack.c.h.b16 %v2424
    %v2515 = vunpack.c.l.b16 %v2425
    %v2516 = vunpack.c.h.b16 %v2425
    %v2517 = vunpack.c.l.b16 %v2426
    %v2518 = vunpack.c.h.b16 %v2426
    %v2519 = vunpack.c.l.b16 %v2427
    %v2520 = vunpack.c.h.b16 %v2427
    %v2521 = vunpack.c.l.b16 %v2428
    %v2522 = vunpack.c.h.b16 %v2428
    %v2523 = vunpack.c.l.b16 %v2429
    %v2524 = vunpack.c.h.b16 %v2429
    %v2525 = vunpack.c.l.b16 %v2430
    %v2526 = vunpack.c.h.b16 %v2430
    %v2527 = vpack.c.b16 %v2467, %v2463
    %v2528 = vpack.c.b16 %v2468, %v2464
    %v2529 = vpack.c.b16 %v2469, %v2465
    %v2530 = vpack.c.b16 %v2470, %v2466
    %v2531 = vpack.c.b16 %v2475, %v2471
    %v2532 = vpack.c.b16 %v2476, %v2472
    %v2533 = vpack.c.b16 %v2477, %v2473
    %v2534 = vpack.c.b16 %v2478, %v2474
    %v2535 = vpack.c.b16 %v2483, %v2479
    %v2536 = vpack.c.b16 %v2484, %v2480
    %v2537 = vpack.c.b16 %v2485, %v2481
    %v2538 = vpack.c.b16 %v2486, %v2482
    %v2539 = vpack.c.b16 %v2491, %v2487
    %v2540 = vpack.c.b16 %v2492, %v2488
    %v2541 = vpack.c.b16 %v2493, %v2489
    %v2542 = vpack.c.b16 %v2494, %v2490
    %v2543 = vpack.c.b16 %v2499, %v2495
    %v2544 = vpack.c.b16 %v2500, %v2496
    %v2545 = vpack.c.b16 %v2501, %v2497
    %v2546 = vpack.c.b16 %v2502, %v2498
    %v2547 = vpack.c.b16 %v2507, %v2503
    %v2548 = vpack.c.b16 %v2508, %v2504
    %v2549 = vpack.c.b16 %v2509, %v2505
    %v2550 = vpack.c.b16 %v2510, %v2506
    %v2551 = vpack.c.b16 %v2515, %v2511
    %v2552 = vpack.c.b16 %v2516, %v2512
    %v2553 = vpack.c.b16 %v2517, %v2513
    %v2554 = vpack.c.b16 %v2518, %v2514
    %v2555 = vpack.c.b16 %v2523, %v2519
    %v2556 = vpack.c.b16 %v2524, %v2520
    %v2557 = vpack.c.b16 %v2525, %v2521
    %v2558 = vpack.c.b16 %v2526, %v2522
    %2591 = vmatprep.subr.bf16.mxu0 %v2528
    %2592 = vmatpush1.bf16.msra.mxu0 %v2527
    %2593 = vmatprep.subr.bf16.mxu0 %v2532
    %2594 = vmatpush1.bf16.msra.mxu0 %v2531
    %2595 = vmatprep.subr.bf16.mxu0 %v2536
    %2596 = vmatpush1.bf16.msra.mxu0 %v2535
    %2597 = vmatprep.subr.bf16.mxu0 %v2540
    %2598 = vmatpush1.bf16.msra.mxu0 %v2539
    %2599 = vmatprep.subr.bf16.mxu0 %v2544
    %2600 = vmatpush1.bf16.msra.mxu0 %v2543
    %2601 = vmatprep.subr.bf16.mxu0 %v2548
    %2602 = vmatpush1.bf16.msra.mxu0 %v2547
    %2603 = vmatprep.subr.bf16.mxu0 %v2552
    %2604 = vmatpush1.bf16.msra.mxu0 %v2551
    %2605 = vmatprep.subr.bf16.mxu0 %v2556
    %2606 = vmatpush1.bf16.msra.mxu0 %v2555
    %2607 = vmatprep.subr.bf16.mxu0 0
    %2608 = vmatpush1.bf16.msra.mxu0 0
    %2609 = vmatprep.subr.bf16.mxu0 0
    %2610 = vmatpush1.bf16.msra.mxu0 0
    %2611 = vmatprep.subr.bf16.mxu0 0
    %2612 = vmatpush1.bf16.msra.mxu0 0
    %2613 = vmatprep.subr.bf16.mxu0 0
    %2614 = vmatpush1.bf16.msra.mxu0 0
    %2615 = vmatprep.subr.bf16.mxu0 0
    %2616 = vmatpush1.bf16.msra.mxu0 0
    %2617 = vmatprep.subr.bf16.mxu0 0
    %2618 = vmatpush1.bf16.msra.mxu0 0
    %2619 = vmatprep.subr.bf16.mxu0 0
    %2620 = vmatpush1.bf16.msra.mxu0 0
    %2621 = vmatprep.subr.bf16.mxu0 0
    %2622 = vmatpush1.bf16.msra.mxu0 0
    %2623 = vmatprep.mubr.bf16.mxu0 0
    %2624 = vmatmul.mubr.bf16.gmra.mrb[0].mxu0 %v2398
    %v2625 = vpop.f32.mrb[0].mxu0
    %v2626 = vadd.f32 0.0, %v2625
    %v2627 = vpop.f32.mrb[0].mxu0
    %v2628 = vadd.f32 0.0, %v2627
    %v2629 = vpop.f32.mrb[0].mxu0
    %v2630 = vpop.f32.mrb[0].mxu0
    %2631 = vdwg.mxu0
    %2632 = vmatprep.subr.bf16.mxu0 %v2530
    %2633 = vmatpush1.bf16.msra.mxu0 %v2529
    %2634 = vmatprep.subr.bf16.mxu0 %v2534
    %2635 = vmatpush1.bf16.msra.mxu0 %v2533
    %2636 = vmatprep.subr.bf16.mxu0 %v2538
    %2637 = vmatpush1.bf16.msra.mxu0 %v2537
    %2638 = vmatprep.subr.bf16.mxu0 %v2542
    %2639 = vmatpush1.bf16.msra.mxu0 %v2541
    %2640 = vmatprep.subr.bf16.mxu0 %v2546
    %2641 = vmatpush1.bf16.msra.mxu0 %v2545
    %2642 = vmatprep.subr.bf16.mxu0 %v2550
    %2643 = vmatpush1.bf16.msra.mxu0 %v2549
    %2644 = vmatprep.subr.bf16.mxu0 %v2554
    %2645 = vmatpush1.bf16.msra.mxu0 %v2553
    %2646 = vmatprep.subr.bf16.mxu0 %v2558
    %2647 = vmatpush1.bf16.msra.mxu0 %v2557
    %2648 = vmatprep.subr.bf16.mxu0 0
    %2649 = vmatpush1.bf16.msra.mxu0 0
    %2650 = vmatprep.subr.bf16.mxu0 0
    %2651 = vmatpush1.bf16.msra.mxu0 0
    %2652 = vmatprep.subr.bf16.mxu0 0
    %2653 = vmatpush1.bf16.msra.mxu0 0
    %2654 = vmatprep.subr.bf16.mxu0 0
    %2655 = vmatpush1.bf16.msra.mxu0 0
    %2656 = vmatprep.subr.bf16.mxu0 0
    %2657 = vmatpush1.bf16.msra.mxu0 0
    %2658 = vmatprep.subr.bf16.mxu0 0
    %2659 = vmatpush1.bf16.msra.mxu0 0
    %2660 = vmatprep.subr.bf16.mxu0 0
    %2661 = vmatpush1.bf16.msra.mxu0 0
    %2662 = vmatprep.subr.bf16.mxu0 0
    %2663 = vmatpush1.bf16.msra.mxu0 0
    %2664 = vmatprep.mubr.bf16.mxu0 0
    %2665 = vmatmul.mubr.bf16.gmra.mrb[0].mxu0 %v2398
    %v2666 = vpop.f32.mrb[0].mxu0
    %v2667 = vadd.f32 0.0, %v2666
    %v2668 = vpop.f32.mrb[0].mxu0
    %v2669 = vadd.f32 0.0, %v2668
    %v2670 = vpop.f32.mrb[0].mxu0
    %v2671 = vpop.f32.mrb[0].mxu0
    %2672 = vdwg.mxu0
    %v2677 = vrot.slane %v2626, 4
    %v2678 = vrot.slane %v2628, 4
    %v2679 = vrot.slane %v2667, 4
    %v2680 = vrot.slane %v2669, 4
    %v2685 = vadd.f32 %v2394, %v2677
    %v2686 = vadd.f32 %v2395, %v2678
    %v2687 = vadd.f32 %v2396, %v2679
    %v2688 = vadd.f32 %v2397, %v2680
    %v2689 = vmul.f32 %v2685, 0.5
    %v2690 = vmul.f32 %v2686, 0.5
    %v2691 = vmul.f32 %v2687, 0.5
    %v2692 = vtanh.pop %v2689
    %v2693 = vtanh.pop %v2690
    %v2694 = vtanh.pop %v2691
    %v2695 = vmul.f32 %v2692, 0.5
    %v2696 = vmul.f32 %v2693, 0.5
    %v2697 = vmul.f32 %v2694, 0.5
    %v2698 = vadd.f32 %v2695, 0.5
    %v2699 = vadd.f32 %v2696, 0.5
    %v2700 = vadd.f32 %v2697, 0.5
    %v2701 = vtanh.pop %v2688
    %v2703 = vrot.slane %v2390, 4
    %v2705 = vmul.f32 %v2699, %v2703
    %v2706 = vmul.f32 %v2698, %v2701
    %v2707 = vadd.f32 %v2705, %v2706
    %v2708 = vtanh.pop %v2707
    %v2709 = vmul.f32 %v2700, %v2708
    %v2711 = vcombine.high %v2709, %v2709
    %2713 = vst [vmem:[#allocation3 + $0x1c] sm:$0xf] %v2711
    %v2714 = vld [vmem:[#allocation3] sm:$0xff]
    %v2715 = vld [vmem:[#allocation3 + $0x8] sm:$0xff]
    %v2716 = vld [vmem:[#allocation3 + $0x10] sm:$0xff]
    %v2717 = vld [vmem:[#allocation3 + $0x18] sm:$0xff]
    %v2718 = vld [vmem:[%s4] sm:$0xff]
    %v2719 = vld [vmem:[%s4 + $0x8] sm:$0xff]
    %v2720 = vld [vmem:[%s4 + $0x10] sm:$0xff]
    %v2721 = vld [vmem:[%s4 + $0x18] sm:$0xff]
    %v2722 = vld [vmem:[%s4 + $0x20] sm:$0xff]
    %v2723 = vld [vmem:[%s4 + $0x28] sm:$0xff]
    %v2724 = vld [vmem:[%s4 + $0x30] sm:$0xff]
    %v2725 = vld [vmem:[%s4 + $0x38] sm:$0xff]
    %v2726 = vld [vmem:[%s4 + $0x40] sm:$0xff]
    %v2727 = vld [vmem:[%s4 + $0x48] sm:$0xff]
    %v2728 = vld [vmem:[%s4 + $0x50] sm:$0xff]
    %v2729 = vld [vmem:[%s4 + $0x58] sm:$0xff]
    %v2730 = vld [vmem:[%s4 + $0x60] sm:$0xff]
    %v2731 = vld [vmem:[%s4 + $0x68] sm:$0xff]
    %v2732 = vld [vmem:[%s4 + $0x70] sm:$0xff]
    %v2733 = vld [vmem:[%s4 + $0x78] sm:$0xff]
    %v2734 = vld [vmem:[%s4 + $0x80] sm:$0xff]
    %v2735 = vld [vmem:[%s4 + $0x88] sm:$0xff]
    %v2736 = vld [vmem:[%s4 + $0x90] sm:$0xff]
    %v2737 = vld [vmem:[%s4 + $0x98] sm:$0xff]
    %v2738 = vld [vmem:[%s4 + $0xa0] sm:$0xff]
    %v2739 = vld [vmem:[%s4 + $0xa8] sm:$0xff]
    %v2740 = vld [vmem:[%s4 + $0xb0] sm:$0xff]
    %v2741 = vld [vmem:[%s4 + $0xb8] sm:$0xff]
    %v2742 = vld [vmem:[%s4 + $0xc0] sm:$0xff]
    %v2743 = vld [vmem:[%s4 + $0xc8] sm:$0xff]
    %v2744 = vld [vmem:[%s4 + $0xd0] sm:$0xff]
    %v2745 = vld [vmem:[%s4 + $0xd8] sm:$0xff]
    %v2746 = vld [vmem:[%s4 + $0xe0] sm:$0xff]
    %v2747 = vld [vmem:[%s4 + $0xe8] sm:$0xff]
    %v2748 = vld [vmem:[%s4 + $0xf0] sm:$0xff]
    %v2749 = vld [vmem:[%s4 + $0xf8] sm:$0xff]
    %v2750 = vld [vmem:[%s4 + $0x100] sm:$0xff]
    %v2751 = vld [vmem:[%s4 + $0x108] sm:$0xff]
    %v2752 = vld [vmem:[%s4 + $0x110] sm:$0xff]
    %v2753 = vld [vmem:[%s4 + $0x118] sm:$0xff]
    %v2754 = vld [vmem:[%s4 + $0x120] sm:$0xff]
    %v2755 = vld [vmem:[%s4 + $0x128] sm:$0xff]
    %v2756 = vld [vmem:[%s4 + $0x130] sm:$0xff]
    %v2757 = vld [vmem:[%s4 + $0x138] sm:$0xff]
    %v2758 = vld [vmem:[%s4 + $0x140] sm:$0xff]
    %v2759 = vld [vmem:[%s4 + $0x148] sm:$0xff]
    %v2760 = vld [vmem:[%s4 + $0x150] sm:$0xff]
    %v2761 = vld [vmem:[%s4 + $0x158] sm:$0xff]
    %v2762 = vld [vmem:[%s4 + $0x160] sm:$0xff]
    %v2763 = vld [vmem:[%s4 + $0x168] sm:$0xff]
    %v2764 = vld [vmem:[%s4 + $0x170] sm:$0xff]
    %v2765 = vld [vmem:[%s4 + $0x178] sm:$0xff]
    %v2766 = vld [vmem:[%s4 + $0x180] sm:$0xff]
    %v2767 = vld [vmem:[%s4 + $0x188] sm:$0xff]
    %v2768 = vld [vmem:[%s4 + $0x190] sm:$0xff]
    %v2769 = vld [vmem:[%s4 + $0x198] sm:$0xff]
    %v2770 = vld [vmem:[%s4 + $0x1a0] sm:$0xff]
    %v2771 = vld [vmem:[%s4 + $0x1a8] sm:$0xff]
    %v2772 = vld [vmem:[%s4 + $0x1b0] sm:$0xff]
    %v2773 = vld [vmem:[%s4 + $0x1b8] sm:$0xff]
    %v2774 = vld [vmem:[%s4 + $0x1c0] sm:$0xff]
    %v2775 = vld [vmem:[%s4 + $0x1c8] sm:$0xff]
    %v2776 = vld [vmem:[%s4 + $0x1d0] sm:$0xff]
    %v2777 = vld [vmem:[%s4 + $0x1d8] sm:$0xff]
    %v2778 = vld [vmem:[%s4 + $0x1e0] sm:$0xff]
    %v2779 = vld [vmem:[%s4 + $0x1e8] sm:$0xff]
    %v2780 = vld [vmem:[%s4 + $0x1f0] sm:$0xff]
    %v2781 = vld [vmem:[%s4 + $0x1f8] sm:$0xff]
    %v2782 = vld [vmem:[%s4 + $0x200] sm:$0xff]
    %v2783 = vld [vmem:[%s4 + $0x208] sm:$0xff]
    %v2784 = vld [vmem:[%s4 + $0x210] sm:$0xff]
    %v2785 = vld [vmem:[%s4 + $0x218] sm:$0xff]
    %v2786 = vld [vmem:[%s4 + $0x220] sm:$0xff]
    %v2787 = vld [vmem:[%s4 + $0x228] sm:$0xff]
    %v2788 = vld [vmem:[%s4 + $0x230] sm:$0xff]
    %v2789 = vld [vmem:[%s4 + $0x238] sm:$0xff]
    %v2790 = vld [vmem:[%s4 + $0x240] sm:$0xff]
    %v2791 = vld [vmem:[%s4 + $0x248] sm:$0xff]
    %v2792 = vld [vmem:[%s4 + $0x250] sm:$0xff]
    %v2793 = vld [vmem:[%s4 + $0x258] sm:$0xff]
    %v2794 = vld [vmem:[%s4 + $0x260] sm:$0xff]
    %v2795 = vld [vmem:[%s4 + $0x268] sm:$0xff]
    %v2796 = vld [vmem:[%s4 + $0x270] sm:$0xff]
    %v2797 = vld [vmem:[%s4 + $0x278] sm:$0xff]
    %v2798 = vld [vmem:[%s4 + $0x280] sm:$0xff]
    %v2799 = vld [vmem:[%s4 + $0x288] sm:$0xff]
    %v2800 = vld [vmem:[%s4 + $0x290] sm:$0xff]
    %v2801 = vld [vmem:[%s4 + $0x298] sm:$0xff]
    %v2802 = vld [vmem:[%s4 + $0x2a0] sm:$0xff]
    %v2803 = vld [vmem:[%s4 + $0x2a8] sm:$0xff]
    %v2804 = vld [vmem:[%s4 + $0x2b0] sm:$0xff]
    %v2805 = vld [vmem:[%s4 + $0x2b8] sm:$0xff]
    %v2806 = vld [vmem:[%s4 + $0x2c0] sm:$0xff]
    %v2807 = vld [vmem:[%s4 + $0x2c8] sm:$0xff]
    %v2808 = vld [vmem:[%s4 + $0x2d0] sm:$0xff]
    %v2809 = vld [vmem:[%s4 + $0x2d8] sm:$0xff]
    %v2810 = vld [vmem:[%s4 + $0x2e0] sm:$0xff]
    %v2811 = vld [vmem:[%s4 + $0x2e8] sm:$0xff]
    %v2812 = vld [vmem:[%s4 + $0x2f0] sm:$0xff]
    %v2813 = vld [vmem:[%s4 + $0x2f8] sm:$0xff]
    %v2814 = vld [vmem:[%s4 + $0x300] sm:$0xff]
    %v2815 = vld [vmem:[%s4 + $0x308] sm:$0xff]
    %v2816 = vld [vmem:[%s4 + $0x310] sm:$0xff]
    %v2817 = vld [vmem:[%s4 + $0x318] sm:$0xff]
    %v2818 = vld [vmem:[%s4 + $0x320] sm:$0xff]
    %v2819 = vld [vmem:[%s4 + $0x328] sm:$0xff]
    %v2820 = vld [vmem:[%s4 + $0x330] sm:$0xff]
    %v2821 = vld [vmem:[%s4 + $0x338] sm:$0xff]
    %v2822 = vld [vmem:[%s4 + $0x340] sm:$0xff]
    %v2823 = vld [vmem:[%s4 + $0x348] sm:$0xff]
    %v2824 = vld [vmem:[%s4 + $0x350] sm:$0xff]
    %v2825 = vld [vmem:[%s4 + $0x358] sm:$0xff]
    %v2826 = vld [vmem:[%s4 + $0x360] sm:$0xff]
    %v2827 = vld [vmem:[%s4 + $0x368] sm:$0xff]
    %v2828 = vld [vmem:[%s4 + $0x370] sm:$0xff]
    %v2829 = vld [vmem:[%s4 + $0x378] sm:$0xff]
    %v2830 = vld [vmem:[%s4 + $0x380] sm:$0xff]
    %v2831 = vld [vmem:[%s4 + $0x388] sm:$0xff]
    %v2832 = vld [vmem:[%s4 + $0x390] sm:$0xff]
    %v2833 = vld [vmem:[%s4 + $0x398] sm:$0xff]
    %v2834 = vld [vmem:[%s4 + $0x3a0] sm:$0xff]
    %v2835 = vld [vmem:[%s4 + $0x3a8] sm:$0xff]
    %v2836 = vld [vmem:[%s4 + $0x3b0] sm:$0xff]
    %v2837 = vld [vmem:[%s4 + $0x3b8] sm:$0xff]
    %v2838 = vld [vmem:[%s4 + $0x3c0] sm:$0xff]
    %v2839 = vld [vmem:[%s4 + $0x3c8] sm:$0xff]
    %v2840 = vld [vmem:[%s4 + $0x3d0] sm:$0xff]
    %v2841 = vld [vmem:[%s4 + $0x3d8] sm:$0xff]
    %v2842 = vld [vmem:[%s4 + $0x3e0] sm:$0xff]
    %v2843 = vld [vmem:[%s4 + $0x3e8] sm:$0xff]
    %v2844 = vld [vmem:[%s4 + $0x3f0] sm:$0xff]
    %v2845 = vld [vmem:[%s4 + $0x3f8] sm:$0xff]
    %v2846 = vld [vmem:[#allocation4] sm:$0x1]
    %v2848 = vlaneseq
    %v2849 = vshrl.u32 %v2848, 7
    %v2850 = vsub.s32 0, %v2849
    %v2851 = vrot.slane %v2846, %v2850
    %2852 = vset.pattern.permute.xlu0 0
    %2853 = vperm.xlu0 %2852, %v2851
    %v2854 = vpop.permute.xlu0 %2853
    %v2860 = vcombine.high %v2714, %v2714
    %v2861 = vcombine.high %v2715, %v2715
    %v2862 = vcombine.high %v2716, %v2716
    %v2863 = vcombine.high %v2717, %v2717
    %2868 = vmatprep.subr.mxu0 0.0
    %2869 = vmatpush1.msra.mxu0 %v2718
    %2870 = vmatprep.subr.mxu0 0.0
    %2871 = vmatpush1.msra.mxu0 %v2719
    %2872 = vmatprep.subr.mxu0 0.0
    %2873 = vmatpush1.msra.mxu0 %v2720
    %2874 = vmatprep.subr.mxu0 0.0
    %2875 = vmatpush1.msra.mxu0 %v2721
    %2876 = vmatprep.subr.mxu0 0.0
    %2877 = vmatpush1.msra.mxu0 %v2722
    %2878 = vmatprep.subr.mxu0 0.0
    %2879 = vmatpush1.msra.mxu0 %v2723
    %2880 = vmatprep.subr.mxu0 0.0
    %2881 = vmatpush1.msra.mxu0 %v2724
    %2882 = vmatprep.subr.mxu0 0.0
    %2883 = vmatpush1.msra.mxu0 %v2725
    %2884 = vmatprep.subr.mxu0 0.0
    %2885 = vmatpush1.msra.mxu0 %v2726
    %2886 = vmatprep.subr.mxu0 0.0
    %2887 = vmatpush1.msra.mxu0 %v2727
    %2888 = vmatprep.subr.mxu0 0.0
    %2889 = vmatpush1.msra.mxu0 %v2728
    %2890 = vmatprep.subr.mxu0 0.0
    %2891 = vmatpush1.msra.mxu0 %v2729
    %2892 = vmatprep.subr.mxu0 0.0
    %2893 = vmatpush1.msra.mxu0 %v2730
    %2894 = vmatprep.subr.mxu0 0.0
    %2895 = vmatpush1.msra.mxu0 %v2731
    %2896 = vmatprep.subr.mxu0 0.0
    %2897 = vmatpush1.msra.mxu0 %v2732
    %2898 = vmatprep.subr.mxu0 0.0
    %2899 = vmatpush1.msra.mxu0 %v2733
    %2900 = vmatprep.subr.mxu0 0.0
    %2901 = vmatpush1.msra.mxu0 %v2734
    %2902 = vmatprep.subr.mxu0 0.0
    %2903 = vmatpush1.msra.mxu0 %v2735
    %2904 = vmatprep.subr.mxu0 0.0
    %2905 = vmatpush1.msra.mxu0 %v2736
    %2906 = vmatprep.subr.mxu0 0.0
    %2907 = vmatpush1.msra.mxu0 %v2737
    %2908 = vmatprep.subr.mxu0 0.0
    %2909 = vmatpush1.msra.mxu0 %v2738
    %2910 = vmatprep.subr.mxu0 0.0
    %2911 = vmatpush1.msra.mxu0 %v2739
    %2912 = vmatprep.subr.mxu0 0.0
    %2913 = vmatpush1.msra.mxu0 %v2740
    %2914 = vmatprep.subr.mxu0 0.0
    %2915 = vmatpush1.msra.mxu0 %v2741
    %2916 = vmatprep.subr.mxu0 0.0
    %2917 = vmatpush1.msra.mxu0 %v2742
    %2918 = vmatprep.subr.mxu0 0.0
    %2919 = vmatpush1.msra.mxu0 %v2743
    %2920 = vmatprep.subr.mxu0 0.0
    %2921 = vmatpush1.msra.mxu0 %v2744
    %2922 = vmatprep.subr.mxu0 0.0
    %2923 = vmatpush1.msra.mxu0 %v2745
    %2924 = vmatprep.subr.mxu0 0.0
    %2925 = vmatpush1.msra.mxu0 %v2746
    %2926 = vmatprep.subr.mxu0 0.0
    %2927 = vmatpush1.msra.mxu0 %v2747
    %2928 = vmatprep.subr.mxu0 0.0
    %2929 = vmatpush1.msra.mxu0 %v2748
    %2930 = vmatprep.subr.mxu0 0.0
    %2931 = vmatpush1.msra.mxu0 %v2749
    %2932 = vmatprep.mubr.f32.mxu0 %v2860
    %2933 = vmatmul.mubr.f32.gmra.mrb[0].mxu0 %v2714
    %v2934 = vpop.f32.mrb[0].mxu0
    %v2935 = vadd.f32 %v2854, %v2934
    %v2936 = vpop.f32.mrb[0].mxu0
    %2937 = vdwg.mxu0
    %2938 = vmatprep.subr.mxu0 0.0
    %2939 = vmatpush1.msra.mxu0 %v2750
    %2940 = vmatprep.subr.mxu0 0.0
    %2941 = vmatpush1.msra.mxu0 %v2751
    %2942 = vmatprep.subr.mxu0 0.0
    %2943 = vmatpush1.msra.mxu0 %v2752
    %2944 = vmatprep.subr.mxu0 0.0
    %2945 = vmatpush1.msra.mxu0 %v2753
    %2946 = vmatprep.subr.mxu0 0.0
    %2947 = vmatpush1.msra.mxu0 %v2754
    %2948 = vmatprep.subr.mxu0 0.0
    %2949 = vmatpush1.msra.mxu0 %v2755
    %2950 = vmatprep.subr.mxu0 0.0
    %2951 = vmatpush1.msra.mxu0 %v2756
    %2952 = vmatprep.subr.mxu0 0.0
    %2953 = vmatpush1.msra.mxu0 %v2757
    %2954 = vmatprep.subr.mxu0 0.0
    %2955 = vmatpush1.msra.mxu0 %v2758
    %2956 = vmatprep.subr.mxu0 0.0
    %2957 = vmatpush1.msra.mxu0 %v2759
    %2958 = vmatprep.subr.mxu0 0.0
    %2959 = vmatpush1.msra.mxu0 %v2760
    %2960 = vmatprep.subr.mxu0 0.0
    %2961 = vmatpush1.msra.mxu0 %v2761
    %2962 = vmatprep.subr.mxu0 0.0
    %2963 = vmatpush1.msra.mxu0 %v2762
    %2964 = vmatprep.subr.mxu0 0.0
    %2965 = vmatpush1.msra.mxu0 %v2763
    %2966 = vmatprep.subr.mxu0 0.0
    %2967 = vmatpush1.msra.mxu0 %v2764
    %2968 = vmatprep.subr.mxu0 0.0
    %2969 = vmatpush1.msra.mxu0 %v2765
    %2970 = vmatprep.subr.mxu0 0.0
    %2971 = vmatpush1.msra.mxu0 %v2766
    %2972 = vmatprep.subr.mxu0 0.0
    %2973 = vmatpush1.msra.mxu0 %v2767
    %2974 = vmatprep.subr.mxu0 0.0
    %2975 = vmatpush1.msra.mxu0 %v2768
    %2976 = vmatprep.subr.mxu0 0.0
    %2977 = vmatpush1.msra.mxu0 %v2769
    %2978 = vmatprep.subr.mxu0 0.0
    %2979 = vmatpush1.msra.mxu0 %v2770
    %2980 = vmatprep.subr.mxu0 0.0
    %2981 = vmatpush1.msra.mxu0 %v2771
    %2982 = vmatprep.subr.mxu0 0.0
    %2983 = vmatpush1.msra.mxu0 %v2772
    %2984 = vmatprep.subr.mxu0 0.0
    %2985 = vmatpush1.msra.mxu0 %v2773
    %2986 = vmatprep.subr.mxu0 0.0
    %2987 = vmatpush1.msra.mxu0 %v2774
    %2988 = vmatprep.subr.mxu0 0.0
    %2989 = vmatpush1.msra.mxu0 %v2775
    %2990 = vmatprep.subr.mxu0 0.0
    %2991 = vmatpush1.msra.mxu0 %v2776
    %2992 = vmatprep.subr.mxu0 0.0
    %2993 = vmatpush1.msra.mxu0 %v2777
    %2994 = vmatprep.subr.mxu0 0.0
    %2995 = vmatpush1.msra.mxu0 %v2778
    %2996 = vmatprep.subr.mxu0 0.0
    %2997 = vmatpush1.msra.mxu0 %v2779
    %2998 = vmatprep.subr.mxu0 0.0
    %2999 = vmatpush1.msra.mxu0 %v2780
    %3000 = vmatprep.subr.mxu0 0.0
    %3001 = vmatpush1.msra.mxu0 %v2781
    %3002 = vmatprep.mubr.f32.mxu0 %v2861
    %3003 = vmatmul.mubr.f32.gmra.mrb[0].mxu0 %v2715
    %v3004 = vpop.f32.mrb[0].mxu0
    %v3005 = vadd.f32 %v2935, %v3004
    %v3006 = vpop.f32.mrb[0].mxu0
    %3007 = vdwg.mxu0
    %3008 = vmatprep.subr.mxu0 0.0
    %3009 = vmatpush1.msra.mxu0 %v2782
    %3010 = vmatprep.subr.mxu0 0.0
    %3011 = vmatpush1.msra.mxu0 %v2783
    %3012 = vmatprep.subr.mxu0 0.0
    %3013 = vmatpush1.msra.mxu0 %v2784
    %3014 = vmatprep.subr.mxu0 0.0
    %3015 = vmatpush1.msra.mxu0 %v2785
    %3016 = vmatprep.subr.mxu0 0.0
    %3017 = vmatpush1.msra.mxu0 %v2786
    %3018 = vmatprep.subr.mxu0 0.0
    %3019 = vmatpush1.msra.mxu0 %v2787
    %3020 = vmatprep.subr.mxu0 0.0
    %3021 = vmatpush1.msra.mxu0 %v2788
    %3022 = vmatprep.subr.mxu0 0.0
    %3023 = vmatpush1.msra.mxu0 %v2789
    %3024 = vmatprep.subr.mxu0 0.0
    %3025 = vmatpush1.msra.mxu0 %v2790
    %3026 = vmatprep.subr.mxu0 0.0
    %3027 = vmatpush1.msra.mxu0 %v2791
    %3028 = vmatprep.subr.mxu0 0.0
    %3029 = vmatpush1.msra.mxu0 %v2792
    %3030 = vmatprep.subr.mxu0 0.0
    %3031 = vmatpush1.msra.mxu0 %v2793
    %3032 = vmatprep.subr.mxu0 0.0
    %3033 = vmatpush1.msra.mxu0 %v2794
    %3034 = vmatprep.subr.mxu0 0.0
    %3035 = vmatpush1.msra.mxu0 %v2795
    %3036 = vmatprep.subr.mxu0 0.0
    %3037 = vmatpush1.msra.mxu0 %v2796
    %3038 = vmatprep.subr.mxu0 0.0
    %3039 = vmatpush1.msra.mxu0 %v2797
    %3040 = vmatprep.subr.mxu0 0.0
    %3041 = vmatpush1.msra.mxu0 %v2798
    %3042 = vmatprep.subr.mxu0 0.0
    %3043 = vmatpush1.msra.mxu0 %v2799
    %3044 = vmatprep.subr.mxu0 0.0
    %3045 = vmatpush1.msra.mxu0 %v2800
    %3046 = vmatprep.subr.mxu0 0.0
    %3047 = vmatpush1.msra.mxu0 %v2801
    %3048 = vmatprep.subr.mxu0 0.0
    %3049 = vmatpush1.msra.mxu0 %v2802
    %3050 = vmatprep.subr.mxu0 0.0
    %3051 = vmatpush1.msra.mxu0 %v2803
    %3052 = vmatprep.subr.mxu0 0.0
    %3053 = vmatpush1.msra.mxu0 %v2804
    %3054 = vmatprep.subr.mxu0 0.0
    %3055 = vmatpush1.msra.mxu0 %v2805
    %3056 = vmatprep.subr.mxu0 0.0
    %3057 = vmatpush1.msra.mxu0 %v2806
    %3058 = vmatprep.subr.mxu0 0.0
    %3059 = vmatpush1.msra.mxu0 %v2807
    %3060 = vmatprep.subr.mxu0 0.0
    %3061 = vmatpush1.msra.mxu0 %v2808
    %3062 = vmatprep.subr.mxu0 0.0
    %3063 = vmatpush1.msra.mxu0 %v2809
    %3064 = vmatprep.subr.mxu0 0.0
    %3065 = vmatpush1.msra.mxu0 %v2810
    %3066 = vmatprep.subr.mxu0 0.0
    %3067 = vmatpush1.msra.mxu0 %v2811
    %3068 = vmatprep.subr.mxu0 0.0
    %3069 = vmatpush1.msra.mxu0 %v2812
    %3070 = vmatprep.subr.mxu0 0.0
    %3071 = vmatpush1.msra.mxu0 %v2813
    %3072 = vmatprep.mubr.f32.mxu0 %v2862
    %3073 = vmatmul.mubr.f32.gmra.mrb[0].mxu0 %v2716
    %v3074 = vpop.f32.mrb[0].mxu0
    %v3075 = vadd.f32 %v3005, %v3074
    %v3076 = vpop.f32.mrb[0].mxu0
    %3077 = vdwg.mxu0
    %3078 = vmatprep.subr.mxu0 0.0
    %3079 = vmatpush1.msra.mxu0 %v2814
    %3080 = vmatprep.subr.mxu0 0.0
    %3081 = vmatpush1.msra.mxu0 %v2815
    %3082 = vmatprep.subr.mxu0 0.0
    %3083 = vmatpush1.msra.mxu0 %v2816
    %3084 = vmatprep.subr.mxu0 0.0
    %3085 = vmatpush1.msra.mxu0 %v2817
    %3086 = vmatprep.subr.mxu0 0.0
    %3087 = vmatpush1.msra.mxu0 %v2818
    %3088 = vmatprep.subr.mxu0 0.0
    %3089 = vmatpush1.msra.mxu0 %v2819
    %3090 = vmatprep.subr.mxu0 0.0
    %3091 = vmatpush1.msra.mxu0 %v2820
    %3092 = vmatprep.subr.mxu0 0.0
    %3093 = vmatpush1.msra.mxu0 %v2821
    %3094 = vmatprep.subr.mxu0 0.0
    %3095 = vmatpush1.msra.mxu0 %v2822
    %3096 = vmatprep.subr.mxu0 0.0
    %3097 = vmatpush1.msra.mxu0 %v2823
    %3098 = vmatprep.subr.mxu0 0.0
    %3099 = vmatpush1.msra.mxu0 %v2824
    %3100 = vmatprep.subr.mxu0 0.0
    %3101 = vmatpush1.msra.mxu0 %v2825
    %3102 = vmatprep.subr.mxu0 0.0
    %3103 = vmatpush1.msra.mxu0 %v2826
    %3104 = vmatprep.subr.mxu0 0.0
    %3105 = vmatpush1.msra.mxu0 %v2827
    %3106 = vmatprep.subr.mxu0 0.0
    %3107 = vmatpush1.msra.mxu0 %v2828
    %3108 = vmatprep.subr.mxu0 0.0
    %3109 = vmatpush1.msra.mxu0 %v2829
    %3110 = vmatprep.subr.mxu0 0.0
    %3111 = vmatpush1.msra.mxu0 %v2830
    %3112 = vmatprep.subr.mxu0 0.0
    %3113 = vmatpush1.msra.mxu0 %v2831
    %3114 = vmatprep.subr.mxu0 0.0
    %3115 = vmatpush1.msra.mxu0 %v2832
    %3116 = vmatprep.subr.mxu0 0.0
    %3117 = vmatpush1.msra.mxu0 %v2833
    %3118 = vmatprep.subr.mxu0 0.0
    %3119 = vmatpush1.msra.mxu0 %v2834
    %3120 = vmatprep.subr.mxu0 0.0
    %3121 = vmatpush1.msra.mxu0 %v2835
    %3122 = vmatprep.subr.mxu0 0.0
    %3123 = vmatpush1.msra.mxu0 %v2836
    %3124 = vmatprep.subr.mxu0 0.0
    %3125 = vmatpush1.msra.mxu0 %v2837
    %3126 = vmatprep.subr.mxu0 0.0
    %3127 = vmatpush1.msra.mxu0 %v2838
    %3128 = vmatprep.subr.mxu0 0.0
    %3129 = vmatpush1.msra.mxu0 %v2839
    %3130 = vmatprep.subr.mxu0 0.0
    %3131 = vmatpush1.msra.mxu0 %v2840
    %3132 = vmatprep.subr.mxu0 0.0
    %3133 = vmatpush1.msra.mxu0 %v2841
    %3134 = vmatprep.subr.mxu0 0.0
    %3135 = vmatpush1.msra.mxu0 %v2842
    %3136 = vmatprep.subr.mxu0 0.0
    %3137 = vmatpush1.msra.mxu0 %v2843
    %3138 = vmatprep.subr.mxu0 0.0
    %3139 = vmatpush1.msra.mxu0 %v2844
    %3140 = vmatprep.subr.mxu0 0.0
    %3141 = vmatpush1.msra.mxu0 %v2845
    %3142 = vmatprep.mubr.f32.mxu0 %v2863
    %3143 = vmatmul.mubr.f32.gmra.mrb[0].mxu0 %v2717
    %v3144 = vpop.f32.mrb[0].mxu0
    %v3145 = vadd.f32 %v3075, %v3144
    %v3146 = vpop.f32.mrb[0].mxu0
    %3147 = vdwg.mxu0
    %v3148 = vmul.f32 %v3145, 0.5
    %v3149 = vtanh.pop %v3148
    %v3150 = vmul.f32 %v3149, 0.5
    %v3151 = vadd.f32 %v3150, 0.5
    %vm3152 = vcmask 60416
    %3153 = vst.msk [vmem:[#allocation5] sm:$0xf] %vm3152, %v3151
    // Predicated region
    $region26: #{lstm_forward.1} parent=1 // pred_check
      _
    $region27: #{lstm_forward.1} parent=1 // pred_check_branch
      %3155 = sbr.rel (0) target = $region29
    $region28: #{lstm_forward.1} parent=1 // pred_region
      %s3157 = ssub.s32 64, 64
      %3158 = vsyncadd [#allocation6], %s3157
      %s3160 = sshll.u32 [#allocation5], 4
      %s3161 = int_to_ptr.vmem [resolvable:$true] %s3160
      %3163 = dma.vmem_to_hbm [thread:$0]  %s3161, 64, %s6, [#allocation6]
    $region29: #{lstm_forward.1} parent=1 // pred_fallthru
      _
    // Predicated region
    $region30: #{lstm_forward.1} parent=1 // pred_check
      _
    $region31: #{lstm_forward.1} parent=1 // pred_check_branch
      %3165 = sbr.rel (0) target = $region33
    $region32: #{lstm_forward.1} parent=1 // pred_region
      %3166 = dma.done [#allocation6], 64
    $region33: #{lstm_forward.1} parent=1 // pred_fallthru
      _
    %3167 = vsyncpa [#allocation6], 1

</llo_original>
